<compile_context>
chip_gen: v5e
topology: v5e:2x2
jax: 0.10.0
libtpu: 0.0.40
codegen_flags: <defaults>
</compile_context>

<pallas_src>
import functools

import jax
import jax.numpy as jnp
import numpy as np
from jax import lax
from jax.experimental import pallas as pl
from jax.experimental.pallas import tpu as pltpu

EPS = 1e-5
VMEM_LIMIT = 32 * 1024 * 1024  # conservative across v5e / v6e / v7x (usage here is tiny)


# ----------------------------- kernel helpers ----------------------------- #

def _ds(start, size, stride):
    """Plain dynamic slice for stride 1, strided slice otherwise (static starts only)."""
    return pl.ds(start, size) if stride == 1 else pl.ds(start, size, stride=stride)


def _stage_bn_relu(src_ref, scr_ref, scale, shift, *, r0, Hp, Wp, rows):
    """Stage `rows` padded rows starting at r0 into VMEM scratch, applying folded BatchNorm
    (per-channel scale/shift) + ReLU once and re-zeroing the zero-padding ring (BN/ReLU of a
    padded zero is not zero).  Conv taps then slice this scratch with static-start windows, so
    the affine / ReLU / mask VPU work is done once per band instead of once per tap (9x)."""
    band = src_ref[pl.ds(r0, rows), :, :]                           # (rows, Wp, C) f32
    pr = r0 + lax.broadcasted_iota(jnp.int32, (rows, Wp, 1), 0)     # padded-row coordinate
    pc = lax.broadcasted_iota(jnp.int32, (rows, Wp, 1), 1)          # padded-col coordinate
    interior = (pr >= 1) & (pr <= Hp - 2) & (pc >= 1) & (pc <= Wp - 2)
    scr_ref[...] = jnp.where(interior, jnp.maximum(band * scale + shift, 0.0), 0.0)


def _tap_accum(acc, band_ref, w_ref, *, stride, Th, Wo):
    """Accumulate one 3x3-conv branch into acc ((Th*Wo, Cout) f32).

    In-VMEM im2col: for each of the 9 taps, take a (Th, Wo, Cin) window (static start, stride =
    conv stride) from the staged band scratch and issue one MXU dot against that tap's
    (Cin, Cout) bf16 weight slice, accumulating in f32."""
    Cin = band_ref.shape[-1]
    for ky in range(3):
        for kx in range(3):
            tap = band_ref[_ds(ky, Th, stride), _ds(kx, Wo, stride), :]   # (Th, Wo, Cin) f32
            lhs = tap.reshape(Th * Wo, Cin).astype(jnp.bfloat16)          # bf16 MXU operand
            acc = acc + jnp.dot(lhs, w_ref[3 * ky + kx],
                                preferred_element_type=jnp.float32)
    return acc


def _make_bnrelu_conv_kernel(*, stride, Hp, Wp, Th, Wo, rows):
    """h_tile = Conv3x3(ReLU(BN1(x)), stride) + b1 for one (batch, row-tile) grid step."""
    def kernel(x_ref, scale_ref, shift_ref, w_ref, b_ref, o_ref, a_scr):
        r0 = pl.program_id(1) * (Th * stride)
        _stage_bn_relu(x_ref, a_scr, scale_ref[...], shift_ref[...],
                       r0=r0, Hp=Hp, Wp=Wp, rows=rows)
        acc = jnp.zeros((Th * Wo, o_ref.shape[-1]), jnp.float32)
        acc = _tap_accum(acc, a_scr, w_ref, stride=stride, Th=Th, Wo=Wo)
        o_ref[...] = acc + b_ref[...]
    return kernel


def _make_fused_output_kernel(*, stride, Hp_h, Wp_h, Hp_x, Wp_x, Th, Wo, rows_x):
    """out_tile = Conv3x3(ReLU(BN2(h)), 1) + Conv3x3(x, stride) + (b2 + b_idt), fully fused."""
    def kernel(h_ref, scale_ref, shift_ref, w2_ref, x_ref, widt_ref, b_ref, o_ref,
               a_scr, x_scr):
        rt = pl.program_id(1)
        acc = jnp.zeros((Th * Wo, o_ref.shape[-1]), jnp.float32)
        # main branch: BN2 + ReLU staged once, conv2 at stride 1 over h
        _stage_bn_relu(h_ref, a_scr, scale_ref[...], shift_ref[...],
                       r0=rt * Th, Hp=Hp_h, Wp=Wp_h, rows=Th + 2)
        acc = _tap_accum(acc, a_scr, w2_ref, stride=1, Th=Th, Wo=Wo)
        # identity branch: stage the raw zero-padded input band (no activation), conv at `stride`
        x_scr[...] = x_ref[pl.ds(rt * Th * stride, rows_x), :, :]
        acc = _tap_accum(acc, x_scr, widt_ref, stride=stride, Th=Th, Wo=Wo)
        o_ref[...] = acc + b_ref[...]
    return kernel


# ------------------------------ pallas wrappers ---------------------------- #

def _conv_out_size(n, stride):  # kernel=3, padding=1
    return (n - 1) // stride + 1


def _row_tile(Ho, Wo):
    """Largest output-row tile (<= 8) dividing Ho with an 8-sublane-aligned (Th*Wo) block."""
    for th in range(min(8, Ho), 0, -1):
        if Ho % th == 0 and ((th * Wo) % 8 == 0 or th == Ho):
            return th
    return Ho


def bnrelu_conv(x_pad, scale, shift, w9, bias, *, stride):
    """Conv3x3(ReLU(BN1(x)), stride) + b1. x_pad: (N, H+2, W+2, Cin) f32 -> (N, Ho*Wo, Cout) f32."""
    N, Hp, Wp, Cin = x_pad.shape
    H, W = Hp - 2, Wp - 2
    Ho, Wo = _conv_out_size(H, stride), _conv_out_size(W, stride)
    Cout = w9.shape[-1]
    Th = _row_tile(Ho, Wo)
    rows = (Th - 1) * stride + 3          # padded input rows needed per output-row tile

    kernel = _make_bnrelu_conv_kernel(stride=stride, Hp=Hp, Wp=Wp, Th=Th, Wo=Wo, rows=rows)
    return pl.pallas_call(
        kernel,
        grid=(N, Ho // Th),
        in_specs=[
            # full padded image per batch element; stays VMEM-resident across row tiles
            pl.BlockSpec((None, Hp, Wp, Cin), lambda n, r: (n, 0, 0, 0)),
            pl.BlockSpec((1, Cin), lambda n, r: (0, 0)),
            pl.BlockSpec((1, Cin), lambda n, r: (0, 0)),
            pl.BlockSpec((9, Cin, Cout), lambda n, r: (0, 0, 0)),
            pl.BlockSpec((1, Cout), lambda n, r: (0, 0)),
        ],
        out_specs=pl.BlockSpec((None, Th * Wo, Cout), lambda n, r: (n, r, 0)),
        out_shape=jax.ShapeDtypeStruct((N, Ho * Wo, Cout), jnp.float32),
        scratch_shapes=[pltpu.VMEM((rows, Wp, Cin), jnp.float32)],
        compiler_params=pltpu.CompilerParams(
            dimension_semantics=("parallel", "parallel"),
            vmem_limit_bytes=VMEM_LIMIT,
        ),
    )(x_pad, scale, shift, w9, bias)


def fused_output_conv(h_pad, scale2, shift2, w2_9, x_pad, widt_9, bias_sum, *, stride):
    """Conv3x3(ReLU(BN2(h)), 1) + Conv3x3(x, stride) + (b2 + b_idt) -> (N, Ho*Wo, Cout) f32."""
    N, Hp_h, Wp_h, Cmid = h_pad.shape
    _, Hp_x, Wp_x, Cin = x_pad.shape
    Ho, Wo = Hp_h - 2, Wp_h - 2
    Cout = w2_9.shape[-1]
    Th = _row_tile(Ho, Wo)
    rows_x = (Th - 1) * stride + 3

    kernel = _make_fused_output_kernel(stride=stride, Hp_h=Hp_h, Wp_h=Wp_h,
                                       Hp_x=Hp_x, Wp_x=Wp_x, Th=Th, Wo=Wo, rows_x=rows_x)
    return pl.pallas_call(
        kernel,
        grid=(N, Ho // Th),
        in_specs=[
            pl.BlockSpec((None, Hp_h, Wp_h, Cmid), lambda n, r: (n, 0, 0, 0)),
            pl.BlockSpec((1, Cmid), lambda n, r: (0, 0)),
            pl.BlockSpec((1, Cmid), lambda n, r: (0, 0)),
            pl.BlockSpec((9, Cmid, Cout), lambda n, r: (0, 0, 0)),
            pl.BlockSpec((None, Hp_x, Wp_x, Cin), lambda n, r: (n, 0, 0, 0)),
            pl.BlockSpec((9, Cin, Cout), lambda n, r: (0, 0, 0)),
            pl.BlockSpec((1, Cout), lambda n, r: (0, 0)),
        ],
        out_specs=pl.BlockSpec((None, Th * Wo, Cout), lambda n, r: (n, r, 0)),
        out_shape=jax.ShapeDtypeStruct((N, Ho * Wo, Cout), jnp.float32),
        scratch_shapes=[pltpu.VMEM((Th + 2, Wp_h, Cmid), jnp.float32),
                        pltpu.VMEM((rows_x, Wp_x, Cin), jnp.float32)],
        compiler_params=pltpu.CompilerParams(
            dimension_semantics=("parallel", "parallel"),
            vmem_limit_bytes=VMEM_LIMIT,
        ),
    )(h_pad, scale2, shift2, w2_9, x_pad, widt_9, bias_sum)


# --------------------------- param prep & forward -------------------------- #

def prepare_params(p):
    """One-time parameter re-layout, hoisted out of the forward hot path.

    OIHW conv weights -> (9, Cin, Cout) bf16 tap-major slices for the in-kernel tap GEMMs;
    biases -> (1, Cout) f32; the final conv's and identity conv's biases are pre-summed
    because those two branches are fused into one kernel."""
    def w9(w_oihw):
        cout, cin = w_oihw.shape[0], w_oihw.shape[1]
        return (jnp.transpose(w_oihw, (2, 3, 1, 0))          # (Kh, Kw, Cin, Cout)
                .reshape(9, cin, cout).astype(jnp.bfloat16))
    return dict(
        bn1_gamma=p["bn1_gamma"], bn1_beta=p["bn1_beta"],
        bn2_gamma=p["bn2_gamma"], bn2_beta=p["bn2_beta"],
        conv1_w9=w9(p["conv1_w"]),
        conv1_b=p["conv1_b"].reshape(1, -1).astype(jnp.float32),
        conv2_w9=w9(p["conv2_w"]),
        idt_w9=w9(p["idt_w"]),
        out_b=(p["conv2_b"] + p["idt_b"]).reshape(1, -1).astype(jnp.float32),
    )


def _bn_scale_shift(x_nhwc, gamma, beta):
    # Training-mode BatchNorm2d batch stats (biased variance, eps=1e-5), folded into per-channel
    # scale/shift so normalize+ReLU can be applied inside the conv kernels.
    # TODO(synk): BatchNorm running_mean/running_var buffer updates are not modeled (forward only).
    mean = jnp.mean(x_nhwc, axis=(0, 1, 2))
    var = jnp.mean(jnp.square(x_nhwc - mean), axis=(0, 1, 2))
    scale = gamma * lax.rsqrt(var + EPS)
    shift = beta - mean * scale
    return (scale.reshape(1, -1).astype(jnp.float32),
            shift.reshape(1, -1).astype(jnp.float32))


@functools.partial(jax.jit, static_argnames=("stride",))
def residual_block_forward(x_nchw, prep, stride=1):
    """Pallas forward for ResidualBlock. Input/output are NCHW (PyTorch convention)."""
    x = jnp.transpose(x_nchw, (0, 2, 3, 1)).astype(jnp.float32)   # NCHW -> NHWC (channels on lanes)
    N, H, W, _ = x.shape
    Cmid = prep["conv1_w9"].shape[-1]
    Cout = prep["conv2_w9"].shape[-1]
    Ho, Wo = _conv_out_size(H, stride), _conv_out_size(W, stride)

    # Zero-pad the raw input once; reused by the conv1 branch (BN/ReLU + border re-mask happen
    # in-kernel) and by the identity-conv branch (plain zero padding of the raw input).
    x_pad = jnp.pad(x, ((0, 0), (1, 1), (1, 1), (0, 0)))

    s1, t1 = _bn_scale_shift(x, prep["bn1_gamma"], prep["bn1_beta"])
    h = bnrelu_conv(x_pad, s1, t1, prep["conv1_w9"], prep["conv1_b"], stride=stride)
    h = h.reshape(N, Ho, Wo, Cmid)

    s2, t2 = _bn_scale_shift(h, prep["bn2_gamma"], prep["bn2_beta"])
    h_pad = jnp.pad(h, ((0, 0), (1, 1), (1, 1), (0, 0)))
    out = fused_output_conv(h_pad, s2, t2, prep["conv2_w9"], x_pad, prep["idt_w9"],
                            prep["out_b"], stride=stride)
    out = out.reshape(N, Ho, Wo, Cout)
    return jnp.transpose(out, (0, 3, 1, 2))                        # NHWC -> NCHW


# ------------------------- params & pure-JAX reference --------------------- #

def init_params(key, in_dim, out_dim):
    ks = jax.random.split(key, 10)
    u = lambda k, shape, s: s * jax.random.uniform(k, shape, jnp.float32, -1.0, 1.0)
    return dict(
        bn1_gamma=1.0 + 0.1 * jax.random.normal(ks[0], (in_dim,), jnp.float32),
        bn1_beta=0.1 * jax.random.normal(ks[1], (in_dim,), jnp.float32),
        conv1_w=u(ks[2], (out_dim, in_dim, 3, 3), 0.2),
        conv1_b=u(ks[3], (out_dim,), 0.1),
        bn2_gamma=1.0 + 0.1 * jax.random.normal(ks[4], (out_dim,), jnp.float32),
        bn2_beta=0.1 * jax.random.normal(ks[5], (out_dim,), jnp.float32),
        conv2_w=u(ks[6], (out_dim, out_dim, 3, 3), 0.2),
        conv2_b=u(ks[7], (out_dim,), 0.1),
        idt_w=u(ks[8], (out_dim, in_dim, 3, 3), 0.2),
        idt_b=u(ks[9], (out_dim,), 0.1),
    )


def ref_forward(x, p, stride=1):
    def bn_relu_ref(x, g, b):
        mean = x.mean(axis=(0, 2, 3), keepdims=True)
        var = ((x - mean) ** 2).mean(axis=(0, 2, 3), keepdims=True)
        y = (x - mean) / jnp.sqrt(var + EPS) * g.reshape(1, -1, 1, 1) + b.reshape(1, -1, 1, 1)
        return jnp.maximum(y, 0.0)

    def conv_ref(x, w, b, s):
        y = jax.lax.conv_general_dilated(
            x, w, window_strides=(s, s), padding=((1, 1), (1, 1)),
            dimension_numbers=("NCHW", "OIHW", "NCHW"))
        return y + b.reshape(1, -1, 1, 1)

    a1 = bn_relu_ref(x, p["bn1_gamma"], p["bn1_beta"])
    h = conv_ref(a1, p["conv1_w"], p["conv1_b"], stride)
    a2 = bn_relu_ref(h, p["bn2_gamma"], p["bn2_beta"])
    res = conv_ref(a2, p["conv2_w"], p["conv2_b"], 1)
    idt = conv_ref(x, p["idt_w"], p["idt_b"], stride)
    return res + idt


if __name__ == "__main__":
    key = jax.random.PRNGKey(0)
    kx, kp = jax.random.split(key)
    in_dim, out_dim = 4, 8
    x = jax.random.normal(kx, (2, in_dim, 16, 16), jnp.float32)   # NCHW, PyTorch convention
    params = init_params(kp, in_dim, out_dim)
    prep = prepare_params(params)   # one-time weight re-layout, outside the hot path

    for stride in (1, 2):
        out = jax.block_until_ready(residual_block_forward(x, prep, stride=stride))
        ref = ref_forward(x, params, stride=stride)
        # bf16 MXU operands (f32 accumulation) -> looser tolerance than a pure-f32 path
        np.testing.assert_allclose(np.asarray(out), np.asarray(ref), atol=5e-2, rtol=5e-2)

    print("KERNEL_OK")
</pallas_src>

<mosaic_0001>
module attributes {stable_mosaic.version = 11 : i64} {
  func.func @kernel(%arg0: i32, %arg1: i32, %arg2: memref<1x18x18x4xf32, #tpu.memory_space<vmem>>, %arg3: memref<1x4xf32, #tpu.memory_space<vmem>>, %arg4: memref<1x4xf32, #tpu.memory_space<vmem>>, %arg5: memref<9x4x8xbf16, #tpu.memory_space<vmem>>, %arg6: memref<1x8xf32, #tpu.memory_space<vmem>>, %arg7: memref<1x128x8xf32, #tpu.memory_space<vmem>>, %arg8: memref<10x18x4xf32, #tpu.memory_space<vmem>>) attributes {dimension_semantics = [#tpu.dimension_semantics<parallel>, #tpu.dimension_semantics<parallel>], iteration_bounds = array<i64: 2, 2>, scalar_prefetch = 0 : i64, scratch_operands = 1 : i64, tpu.core_type = #tpu.core_type<tc>, window_params = [{transform_indices = @transform_0, window_bounds = array<i64: 1, 18, 18, 4>}, {pipeline_mode = #tpu.pipeline_mode<synchronous>, transform_indices = @transform_1, window_bounds = array<i64: 1, 4>}, {pipeline_mode = #tpu.pipeline_mode<synchronous>, transform_indices = @transform_2, window_bounds = array<i64: 1, 4>}, {pipeline_mode = #tpu.pipeline_mode<synchronous>, transform_indices = @transform_3, window_bounds = array<i64: 9, 4, 8>}, {pipeline_mode = #tpu.pipeline_mode<synchronous>, transform_indices = @transform_4, window_bounds = array<i64: 1, 8>}, {transform_indices = @transform_5, window_bounds = array<i64: 1, 128, 8>}]} {
    %c8_i32 = arith.constant 8 : i32
    %0 = arith.muli %arg1, %c8_i32 : i32
    %c0 = arith.constant 0 : index
    %c0_0 = arith.constant 0 : index
    %1 = vector.load %arg3[%c0, %c0_0] : memref<1x4xf32, #tpu.memory_space<vmem>>, vector<1x4xf32>
    %c0_1 = arith.constant 0 : index
    %c0_2 = arith.constant 0 : index
    %2 = vector.load %arg4[%c0_1, %c0_2] : memref<1x4xf32, #tpu.memory_space<vmem>>, vector<1x4xf32>
    %c0_3 = arith.constant 0 : index
    %3 = arith.index_cast %0 : i32 to index
    %c0_4 = arith.constant 0 : index
    %c0_5 = arith.constant 0 : index
    %4 = vector.load %arg2[%c0_3, %3, %c0_4, %c0_5] : memref<1x18x18x4xf32, #tpu.memory_space<vmem>>, vector<1x10x18x4xf32>
    %5 = vector.shape_cast %4 : vector<1x10x18x4xf32> to vector<10x18x4xf32>
    %6 = tpu.iota {dimensions = array<i32: 0>} : vector<10x18x1xi32>
    %7 = vector.broadcast %0 : i32 to vector<10x18x1xi32>
    %8 = arith.addi %7, %6 : vector<10x18x1xi32>
    %9 = tpu.iota {dimensions = array<i32: 1>} : vector<10x18x1xi32>
    %c1_i32 = arith.constant 1 : i32
    %10 = vector.broadcast %c1_i32 : i32 to vector<10x18x1xi32>
    %11 = arith.cmpi sge, %8, %10 : vector<10x18x1xi32>
    %c16_i32 = arith.constant 16 : i32
    %12 = vector.broadcast %c16_i32 : i32 to vector<10x18x1xi32>
    %13 = arith.cmpi sle, %8, %12 : vector<10x18x1xi32>
    %14 = arith.andi %11, %13 : vector<10x18x1xi1>
    %c1_i32_6 = arith.constant 1 : i32
    %15 = vector.broadcast %c1_i32_6 : i32 to vector<10x18x1xi32>
    %16 = arith.cmpi sge, %9, %15 : vector<10x18x1xi32>
    %17 = arith.andi %14, %16 : vector<10x18x1xi1>
    %c16_i32_7 = arith.constant 16 : i32
    %18 = vector.broadcast %c16_i32_7 : i32 to vector<10x18x1xi32>
    %19 = arith.cmpi sle, %9, %18 : vector<10x18x1xi32>
    %20 = arith.andi %17, %19 : vector<10x18x1xi1>
    %21 = vector.shape_cast %1 : vector<1x4xf32> to vector<1x1x4xf32>
    %22 = vector.broadcast %21 : vector<1x1x4xf32> to vector<10x18x4xf32>
    %23 = arith.mulf %5, %22 : vector<10x18x4xf32>
    %24 = vector.shape_cast %2 : vector<1x4xf32> to vector<1x1x4xf32>
    %25 = vector.broadcast %24 : vector<1x1x4xf32> to vector<10x18x4xf32>
    %26 = arith.addf %23, %25 : vector<10x18x4xf32>
    %cst = arith.constant 0.000000e+00 : f32
    %27 = vector.broadcast %cst : f32 to vector<10x18x4xf32>
    %28 = arith.maximumf %26, %27 : vector<10x18x4xf32>
    %cst_8 = arith.constant 0.000000e+00 : f32
    %29 = vector.shape_cast %20 : vector<10x18x1xi1> to vector<10x18x1xi1>
    %30 = vector.broadcast %29 : vector<10x18x1xi1> to vector<10x18x4xi1>
    %31 = vector.broadcast %cst_8 : f32 to vector<10x18x4xf32>
    %32 = arith.select %30, %28, %31 : vector<10x18x4xi1>, vector<10x18x4xf32>
    %c0_9 = arith.constant 0 : index
    %c0_10 = arith.constant 0 : index
    %c0_11 = arith.constant 0 : index
    %33 = vector.load %arg8[%c0_9, %c0_10, %c0_11] : memref<10x18x4xf32, #tpu.memory_space<vmem>>, vector<10x18x4xf32>
    tpu.vector_store %arg8[%c0_9, %c0_10, %c0_11], %32 {strides = array<i32>} : memref<10x18x4xf32, #tpu.memory_space<vmem>>, vector<10x18x4xf32>,
    %cst_12 = arith.constant 0.000000e+00 : f32
    %34 = vector.broadcast %cst_12 : f32 to vector<128x8xf32>
    %c0_13 = arith.constant 0 : index
    %c0_14 = arith.constant 0 : index
    %c0_15 = arith.constant 0 : index
    %35 = vector.load %arg8[%c0_13, %c0_14, %c0_15] : memref<10x18x4xf32, #tpu.memory_space<vmem>>, vector<8x16x4xf32>
    %36 = vector.shape_cast %35 : vector<8x16x4xf32> to vector<128x4xf32>
    %37 = arith.truncf %36 : vector<128x4xf32> to vector<128x4xbf16>
    %c0_16 = arith.constant 0 : index
    %c0_17 = arith.constant 0 : index
    %c0_18 = arith.constant 0 : index
    %38 = vector.load %arg5[%c0_16, %c0_17, %c0_18] : memref<9x4x8xbf16, #tpu.memory_space<vmem>>, vector<1x4x8xbf16>
    %39 = vector.shape_cast %38 : vector<1x4x8xbf16> to vector<4x8xbf16>
    %cst_19 = arith.constant dense<0.000000e+00> : vector<128x8xf32>
    %40 = tpu.matmul %37, %39, %cst_19 {dimension_numbers = #tpu.dot_dimension_numbers<[1], [0], [0], [1], [0, 0, 1, 1], [], []>} : vector<128x4xbf16>, vector<4x8xbf16>, vector<128x8xf32> -> vector<128x8xf32>
    %41 = arith.addf %34, %40 : vector<128x8xf32>
    %c0_20 = arith.constant 0 : index
    %c1 = arith.constant 1 : index
    %c0_21 = arith.constant 0 : index
    %42 = vector.load %arg8[%c0_20, %c1, %c0_21] : memref<10x18x4xf32, #tpu.memory_space<vmem>>, vector<8x16x4xf32>
    %43 = vector.shape_cast %42 : vector<8x16x4xf32> to vector<128x4xf32>
    %44 = arith.truncf %43 : vector<128x4xf32> to vector<128x4xbf16>
    %c1_22 = arith.constant 1 : index
    %c0_23 = arith.constant 0 : index
    %c0_24 = arith.constant 0 : index
    %45 = vector.load %arg5[%c1_22, %c0_23, %c0_24] : memref<9x4x8xbf16, #tpu.memory_space<vmem>>, vector<1x4x8xbf16>
    %46 = vector.shape_cast %45 : vector<1x4x8xbf16> to vector<4x8xbf16>
    %cst_25 = arith.constant dense<0.000000e+00> : vector<128x8xf32>
    %47 = tpu.matmul %44, %46, %cst_25 {dimension_numbers = #tpu.dot_dimension_numbers<[1], [0], [0], [1], [0, 0, 1, 1], [], []>} : vector<128x4xbf16>, vector<4x8xbf16>, vector<128x8xf32> -> vector<128x8xf32>
    %48 = arith.addf %41, %47 : vector<128x8xf32>
    %c0_26 = arith.constant 0 : index
    %c2 = arith.constant 2 : index
    %c0_27 = arith.constant 0 : index
    %49 = vector.load %arg8[%c0_26, %c2, %c0_27] : memref<10x18x4xf32, #tpu.memory_space<vmem>>, vector<8x16x4xf32>
    %50 = vector.shape_cast %49 : vector<8x16x4xf32> to vector<128x4xf32>
    %51 = arith.truncf %50 : vector<128x4xf32> to vector<128x4xbf16>
    %c2_28 = arith.constant 2 : index
    %c0_29 = arith.constant 0 : index
    %c0_30 = arith.constant 0 : index
    %52 = vector.load %arg5[%c2_28, %c0_29, %c0_30] : memref<9x4x8xbf16, #tpu.memory_space<vmem>>, vector<1x4x8xbf16>
    %53 = vector.shape_cast %52 : vector<1x4x8xbf16> to vector<4x8xbf16>
    %cst_31 = arith.constant dense<0.000000e+00> : vector<128x8xf32>
    %54 = tpu.matmul %51, %53, %cst_31 {dimension_numbers = #tpu.dot_dimension_numbers<[1], [0], [0], [1], [0, 0, 1, 1], [], []>} : vector<128x4xbf16>, vector<4x8xbf16>, vector<128x8xf32> -> vector<128x8xf32>
    %55 = arith.addf %48, %54 : vector<128x8xf32>
    %c1_32 = arith.constant 1 : index
    %c0_33 = arith.constant 0 : index
    %c0_34 = arith.constant 0 : index
    %56 = vector.load %arg8[%c1_32, %c0_33, %c0_34] : memref<10x18x4xf32, #tpu.memory_space<vmem>>, vector<8x16x4xf32>
    %57 = vector.shape_cast %56 : vector<8x16x4xf32> to vector<128x4xf32>
    %58 = arith.truncf %57 : vector<128x4xf32> to vector<128x4xbf16>
    %c3 = arith.constant 3 : index
    %c0_35 = arith.constant 0 : index
    %c0_36 = arith.constant 0 : index
    %59 = vector.load %arg5[%c3, %c0_35, %c0_36] : memref<9x4x8xbf16, #tpu.memory_space<vmem>>, vector<1x4x8xbf16>
    %60 = vector.shape_cast %59 : vector<1x4x8xbf16> to vector<4x8xbf16>
    %cst_37 = arith.constant dense<0.000000e+00> : vector<128x8xf32>
    %61 = tpu.matmul %58, %60, %cst_37 {dimension_numbers = #tpu.dot_dimension_numbers<[1], [0], [0], [1], [0, 0, 1, 1], [], []>} : vector<128x4xbf16>, vector<4x8xbf16>, vector<128x8xf32> -> vector<128x8xf32>
    %62 = arith.addf %55, %61 : vector<128x8xf32>
    %c1_38 = arith.constant 1 : index
    %c1_39 = arith.constant 1 : index
    %c0_40 = arith.constant 0 : index
    %63 = vector.load %arg8[%c1_38, %c1_39, %c0_40] : memref<10x18x4xf32, #tpu.memory_space<vmem>>, vector<8x16x4xf32>
    %64 = vector.shape_cast %63 : vector<8x16x4xf32> to vector<128x4xf32>
    %65 = arith.truncf %64 : vector<128x4xf32> to vector<128x4xbf16>
    %c4 = arith.constant 4 : index
    %c0_41 = arith.constant 0 : index
    %c0_42 = arith.constant 0 : index
    %66 = vector.load %arg5[%c4, %c0_41, %c0_42] : memref<9x4x8xbf16, #tpu.memory_space<vmem>>, vector<1x4x8xbf16>
    %67 = vector.shape_cast %66 : vector<1x4x8xbf16> to vector<4x8xbf16>
    %cst_43 = arith.constant dense<0.000000e+00> : vector<128x8xf32>
    %68 = tpu.matmul %65, %67, %cst_43 {dimension_numbers = #tpu.dot_dimension_numbers<[1], [0], [0], [1], [0, 0, 1, 1], [], []>} : vector<128x4xbf16>, vector<4x8xbf16>, vector<128x8xf32> -> vector<128x8xf32>
    %69 = arith.addf %62, %68 : vector<128x8xf32>
    %c1_44 = arith.constant 1 : index
    %c2_45 = arith.constant 2 : index
    %c0_46 = arith.constant 0 : index
    %70 = vector.load %arg8[%c1_44, %c2_45, %c0_46] : memref<10x18x4xf32, #tpu.memory_space<vmem>>, vector<8x16x4xf32>
    %71 = vector.shape_cast %70 : vector<8x16x4xf32> to vector<128x4xf32>
    %72 = arith.truncf %71 : vector<128x4xf32> to vector<128x4xbf16>
    %c5 = arith.constant 5 : index
    %c0_47 = arith.constant 0 : index
    %c0_48 = arith.constant 0 : index
    %73 = vector.load %arg5[%c5, %c0_47, %c0_48] : memref<9x4x8xbf16, #tpu.memory_space<vmem>>, vector<1x4x8xbf16>
    %74 = vector.shape_cast %73 : vector<1x4x8xbf16> to vector<4x8xbf16>
    %cst_49 = arith.constant dense<0.000000e+00> : vector<128x8xf32>
    %75 = tpu.matmul %72, %74, %cst_49 {dimension_numbers = #tpu.dot_dimension_numbers<[1], [0], [0], [1], [0, 0, 1, 1], [], []>} : vector<128x4xbf16>, vector<4x8xbf16>, vector<128x8xf32> -> vector<128x8xf32>
    %76 = arith.addf %69, %75 : vector<128x8xf32>
    %c2_50 = arith.constant 2 : index
    %c0_51 = arith.constant 0 : index
    %c0_52 = arith.constant 0 : index
    %77 = vector.load %arg8[%c2_50, %c0_51, %c0_52] : memref<10x18x4xf32, #tpu.memory_space<vmem>>, vector<8x16x4xf32>
    %78 = vector.shape_cast %77 : vector<8x16x4xf32> to vector<128x4xf32>
    %79 = arith.truncf %78 : vector<128x4xf32> to vector<128x4xbf16>
    %c6 = arith.constant 6 : index
    %c0_53 = arith.constant 0 : index
    %c0_54 = arith.constant 0 : index
    %80 = vector.load %arg5[%c6, %c0_53, %c0_54] : memref<9x4x8xbf16, #tpu.memory_space<vmem>>, vector<1x4x8xbf16>
    %81 = vector.shape_cast %80 : vector<1x4x8xbf16> to vector<4x8xbf16>
    %cst_55 = arith.constant dense<0.000000e+00> : vector<128x8xf32>
    %82 = tpu.matmul %79, %81, %cst_55 {dimension_numbers = #tpu.dot_dimension_numbers<[1], [0], [0], [1], [0, 0, 1, 1], [], []>} : vector<128x4xbf16>, vector<4x8xbf16>, vector<128x8xf32> -> vector<128x8xf32>
    %83 = arith.addf %76, %82 : vector<128x8xf32>
    %c2_56 = arith.constant 2 : index
    %c1_57 = arith.constant 1 : index
    %c0_58 = arith.constant 0 : index
    %84 = vector.load %arg8[%c2_56, %c1_57, %c0_58] : memref<10x18x4xf32, #tpu.memory_space<vmem>>, vector<8x16x4xf32>
    %85 = vector.shape_cast %84 : vector<8x16x4xf32> to vector<128x4xf32>
    %86 = arith.truncf %85 : vector<128x4xf32> to vector<128x4xbf16>
    %c7 = arith.constant 7 : index
    %c0_59 = arith.constant 0 : index
    %c0_60 = arith.constant 0 : index
    %87 = vector.load %arg5[%c7, %c0_59, %c0_60] : memref<9x4x8xbf16, #tpu.memory_space<vmem>>, vector<1x4x8xbf16>
    %88 = vector.shape_cast %87 : vector<1x4x8xbf16> to vector<4x8xbf16>
    %cst_61 = arith.constant dense<0.000000e+00> : vector<128x8xf32>
    %89 = tpu.matmul %86, %88, %cst_61 {dimension_numbers = #tpu.dot_dimension_numbers<[1], [0], [0], [1], [0, 0, 1, 1], [], []>} : vector<128x4xbf16>, vector<4x8xbf16>, vector<128x8xf32> -> vector<128x8xf32>
    %90 = arith.addf %83, %89 : vector<128x8xf32>
    %c2_62 = arith.constant 2 : index
    %c2_63 = arith.constant 2 : index
    %c0_64 = arith.constant 0 : index
    %91 = vector.load %arg8[%c2_62, %c2_63, %c0_64] : memref<10x18x4xf32, #tpu.memory_space<vmem>>, vector<8x16x4xf32>
    %92 = vector.shape_cast %91 : vector<8x16x4xf32> to vector<128x4xf32>
    %93 = arith.truncf %92 : vector<128x4xf32> to vector<128x4xbf16>
    %c8 = arith.constant 8 : index
    %c0_65 = arith.constant 0 : index
    %c0_66 = arith.constant 0 : index
    %94 = vector.load %arg5[%c8, %c0_65, %c0_66] : memref<9x4x8xbf16, #tpu.memory_space<vmem>>, vector<1x4x8xbf16>
    %95 = vector.shape_cast %94 : vector<1x4x8xbf16> to vector<4x8xbf16>
    %cst_67 = arith.constant dense<0.000000e+00> : vector<128x8xf32>
    %96 = tpu.matmul %93, %95, %cst_67 {dimension_numbers = #tpu.dot_dimension_numbers<[1], [0], [0], [1], [0, 0, 1, 1], [], []>} : vector<128x4xbf16>, vector<4x8xbf16>, vector<128x8xf32> -> vector<128x8xf32>
    %97 = arith.addf %90, %96 : vector<128x8xf32>
    %c0_68 = arith.constant 0 : index
    %c0_69 = arith.constant 0 : index
    %98 = vector.load %arg6[%c0_68, %c0_69] : memref<1x8xf32, #tpu.memory_space<vmem>>, vector<1x8xf32>
    %99 = vector.broadcast %98 : vector<1x8xf32> to vector<128x8xf32>
    %100 = arith.addf %97, %99 : vector<128x8xf32>
    %c0_70 = arith.constant 0 : index
    %c0_71 = arith.constant 0 : index
    %c0_72 = arith.constant 0 : index
    %101 = vector.load %arg7[%c0_70, %c0_71, %c0_72] : memref<1x128x8xf32, #tpu.memory_space<vmem>>, vector<1x128x8xf32>
    %102 = vector.shape_cast %101 : vector<1x128x8xf32> to vector<128x8xf32>
    %103 = vector.shape_cast %100 : vector<128x8xf32> to vector<1x128x8xf32>
    tpu.vector_store %arg7[%c0_70, %c0_71, %c0_72], %103 {strides = array<i32>} : memref<1x128x8xf32, #tpu.memory_space<vmem>>, vector<1x128x8xf32>,
    return
  }
  func.func @transform_0(%arg0: i32, %arg1: i32) -> (i32, i32, i32, i32) {
    %c0_i32 = arith.constant 0 : i32
    %c0_i32_0 = arith.constant 0 : i32
    %c0_i32_1 = arith.constant 0 : i32
    %c0_i32_2 = arith.constant 0 : i32
    return %arg0, %c0_i32, %c0_i32_0, %c0_i32_1 : i32, i32, i32, i32
  }
  func.func @transform_1(%arg0: i32, %arg1: i32) -> (i32, i32) {
    %c0_i32 = arith.constant 0 : i32
    %c0_i32_0 = arith.constant 0 : i32
    %c0_i32_1 = arith.constant 0 : i32
    return %c0_i32, %c0_i32_0 : i32, i32
  }
  func.func @transform_2(%arg0: i32, %arg1: i32) -> (i32, i32) {
    %c0_i32 = arith.constant 0 : i32
    %c0_i32_0 = arith.constant 0 : i32
    %c0_i32_1 = arith.constant 0 : i32
    return %c0_i32, %c0_i32_0 : i32, i32
  }
  func.func @transform_3(%arg0: i32, %arg1: i32) -> (i32, i32, i32) {
    %c0_i32 = arith.constant 0 : i32
    %c0_i32_0 = arith.constant 0 : i32
    %c0_i32_1 = arith.constant 0 : i32
    %c0_i32_2 = arith.constant 0 : i32
    return %c0_i32, %c0_i32_0, %c0_i32_1 : i32, i32, i32
  }
  func.func @transform_4(%arg0: i32, %arg1: i32) -> (i32, i32) {
    %c0_i32 = arith.constant 0 : i32
    %c0_i32_0 = arith.constant 0 : i32
    %c0_i32_1 = arith.constant 0 : i32
    return %c0_i32, %c0_i32_0 : i32, i32
  }
  func.func @transform_5(%arg0: i32, %arg1: i32) -> (i32, i32, i32) {
    %c0_i32 = arith.constant 0 : i32
    %c0_i32_0 = arith.constant 0 : i32
    return %arg0, %arg1, %c0_i32 : i32, i32, i32
  }
}

module attributes {stable_mosaic.version = 11 : i64} {
  func.func @kernel(%arg0: i32, %arg1: i32, %arg2: memref<1x18x18x8xf32, #tpu.memory_space<vmem>>, %arg3: memref<1x8xf32, #tpu.memory_space<vmem>>, %arg4: memref<1x8xf32, #tpu.memory_space<vmem>>, %arg5: memref<9x8x8xbf16, #tpu.memory_space<vmem>>, %arg6: memref<1x18x18x4xf32, #tpu.memory_space<vmem>>, %arg7: memref<9x4x8xbf16, #tpu.memory_space<vmem>>, %arg8: memref<1x8xf32, #tpu.memory_space<vmem>>, %arg9: memref<1x128x8xf32, #tpu.memory_space<vmem>>, %arg10: memref<10x18x8xf32, #tpu.memory_space<vmem>>, %arg11: memref<10x18x4xf32, #tpu.memory_space<vmem>>) attributes {dimension_semantics = [#tpu.dimension_semantics<parallel>, #tpu.dimension_semantics<parallel>], iteration_bounds = array<i64: 2, 2>, scalar_prefetch = 0 : i64, scratch_operands = 2 : i64, tpu.core_type = #tpu.core_type<tc>, window_params = [{transform_indices = @transform_0, window_bounds = array<i64: 1, 18, 18, 8>}, {pipeline_mode = #tpu.pipeline_mode<synchronous>, transform_indices = @transform_1, window_bounds = array<i64: 1, 8>}, {pipeline_mode = #tpu.pipeline_mode<synchronous>, transform_indices = @transform_2, window_bounds = array<i64: 1, 8>}, {pipeline_mode = #tpu.pipeline_mode<synchronous>, transform_indices = @transform_3, window_bounds = array<i64: 9, 8, 8>}, {transform_indices = @transform_4, window_bounds = array<i64: 1, 18, 18, 4>}, {pipeline_mode = #tpu.pipeline_mode<synchronous>, transform_indices = @transform_5, window_bounds = array<i64: 9, 4, 8>}, {pipeline_mode = #tpu.pipeline_mode<synchronous>, transform_indices = @transform_6, window_bounds = array<i64: 1, 8>}, {transform_indices = @transform_7, window_bounds = array<i64: 1, 128, 8>}]} {
    %cst = arith.constant 0.000000e+00 : f32
    %0 = vector.broadcast %cst : f32 to vector<128x8xf32>
    %c0 = arith.constant 0 : index
    %c0_0 = arith.constant 0 : index
    %1 = vector.load %arg3[%c0, %c0_0] : memref<1x8xf32, #tpu.memory_space<vmem>>, vector<1x8xf32>
    %c0_1 = arith.constant 0 : index
    %c0_2 = arith.constant 0 : index
    %2 = vector.load %arg4[%c0_1, %c0_2] : memref<1x8xf32, #tpu.memory_space<vmem>>, vector<1x8xf32>
    %c8_i32 = arith.constant 8 : i32
    %3 = arith.muli %arg1, %c8_i32 : i32
    %c0_3 = arith.constant 0 : index
    %4 = arith.index_cast %3 : i32 to index
    %c0_4 = arith.constant 0 : index
    %c0_5 = arith.constant 0 : index
    %5 = vector.load %arg2[%c0_3, %4, %c0_4, %c0_5] : memref<1x18x18x8xf32, #tpu.memory_space<vmem>>, vector<1x10x18x8xf32>
    %6 = vector.shape_cast %5 : vector<1x10x18x8xf32> to vector<10x18x8xf32>
    %7 = tpu.iota {dimensions = array<i32: 0>} : vector<10x18x1xi32>
    %8 = vector.broadcast %3 : i32 to vector<10x18x1xi32>
    %9 = arith.addi %8, %7 : vector<10x18x1xi32>
    %10 = tpu.iota {dimensions = array<i32: 1>} : vector<10x18x1xi32>
    %c1_i32 = arith.constant 1 : i32
    %11 = vector.broadcast %c1_i32 : i32 to vector<10x18x1xi32>
    %12 = arith.cmpi sge, %9, %11 : vector<10x18x1xi32>
    %c16_i32 = arith.constant 16 : i32
    %13 = vector.broadcast %c16_i32 : i32 to vector<10x18x1xi32>
    %14 = arith.cmpi sle, %9, %13 : vector<10x18x1xi32>
    %15 = arith.andi %12, %14 : vector<10x18x1xi1>
    %c1_i32_6 = arith.constant 1 : i32
    %16 = vector.broadcast %c1_i32_6 : i32 to vector<10x18x1xi32>
    %17 = arith.cmpi sge, %10, %16 : vector<10x18x1xi32>
    %18 = arith.andi %15, %17 : vector<10x18x1xi1>
    %c16_i32_7 = arith.constant 16 : i32
    %19 = vector.broadcast %c16_i32_7 : i32 to vector<10x18x1xi32>
    %20 = arith.cmpi sle, %10, %19 : vector<10x18x1xi32>
    %21 = arith.andi %18, %20 : vector<10x18x1xi1>
    %22 = vector.shape_cast %1 : vector<1x8xf32> to vector<1x1x8xf32>
    %23 = vector.broadcast %22 : vector<1x1x8xf32> to vector<10x18x8xf32>
    %24 = arith.mulf %6, %23 : vector<10x18x8xf32>
    %25 = vector.shape_cast %2 : vector<1x8xf32> to vector<1x1x8xf32>
    %26 = vector.broadcast %25 : vector<1x1x8xf32> to vector<10x18x8xf32>
    %27 = arith.addf %24, %26 : vector<10x18x8xf32>
    %cst_8 = arith.constant 0.000000e+00 : f32
    %28 = vector.broadcast %cst_8 : f32 to vector<10x18x8xf32>
    %29 = arith.maximumf %27, %28 : vector<10x18x8xf32>
    %cst_9 = arith.constant 0.000000e+00 : f32
    %30 = vector.shape_cast %21 : vector<10x18x1xi1> to vector<10x18x1xi1>
    %31 = vector.broadcast %30 : vector<10x18x1xi1> to vector<10x18x8xi1>
    %32 = vector.broadcast %cst_9 : f32 to vector<10x18x8xf32>
    %33 = arith.select %31, %29, %32 : vector<10x18x8xi1>, vector<10x18x8xf32>
    %c0_10 = arith.constant 0 : index
    %c0_11 = arith.constant 0 : index
    %c0_12 = arith.constant 0 : index
    %34 = vector.load %arg10[%c0_10, %c0_11, %c0_12] : memref<10x18x8xf32, #tpu.memory_space<vmem>>, vector<10x18x8xf32>
    tpu.vector_store %arg10[%c0_10, %c0_11, %c0_12], %33 {strides = array<i32>} : memref<10x18x8xf32, #tpu.memory_space<vmem>>, vector<10x18x8xf32>,
    %c0_13 = arith.constant 0 : index
    %c0_14 = arith.constant 0 : index
    %c0_15 = arith.constant 0 : index
    %35 = vector.load %arg10[%c0_13, %c0_14, %c0_15] : memref<10x18x8xf32, #tpu.memory_space<vmem>>, vector<8x16x8xf32>
    %36 = vector.shape_cast %35 : vector<8x16x8xf32> to vector<128x8xf32>
    %37 = arith.truncf %36 : vector<128x8xf32> to vector<128x8xbf16>
    %c0_16 = arith.constant 0 : index
    %c0_17 = arith.constant 0 : index
    %c0_18 = arith.constant 0 : index
    %38 = vector.load %arg5[%c0_16, %c0_17, %c0_18] : memref<9x8x8xbf16, #tpu.memory_space<vmem>>, vector<1x8x8xbf16>
    %39 = vector.shape_cast %38 : vector<1x8x8xbf16> to vector<8x8xbf16>
    %cst_19 = arith.constant dense<0.000000e+00> : vector<128x8xf32>
    %40 = tpu.matmul %37, %39, %cst_19 {dimension_numbers = #tpu.dot_dimension_numbers<[1], [0], [0], [1], [0, 0, 1, 1], [], []>} : vector<128x8xbf16>, vector<8x8xbf16>, vector<128x8xf32> -> vector<128x8xf32>
    %41 = arith.addf %0, %40 : vector<128x8xf32>
    %c0_20 = arith.constant 0 : index
    %c1 = arith.constant 1 : index
    %c0_21 = arith.constant 0 : index
    %42 = vector.load %arg10[%c0_20, %c1, %c0_21] : memref<10x18x8xf32, #tpu.memory_space<vmem>>, vector<8x16x8xf32>
    %43 = vector.shape_cast %42 : vector<8x16x8xf32> to vector<128x8xf32>
    %44 = arith.truncf %43 : vector<128x8xf32> to vector<128x8xbf16>
    %c1_22 = arith.constant 1 : index
    %c0_23 = arith.constant 0 : index
    %c0_24 = arith.constant 0 : index
    %45 = vector.load %arg5[%c1_22, %c0_23, %c0_24] : memref<9x8x8xbf16, #tpu.memory_space<vmem>>, vector<1x8x8xbf16>
    %46 = vector.shape_cast %45 : vector<1x8x8xbf16> to vector<8x8xbf16>
    %cst_25 = arith.constant dense<0.000000e+00> : vector<128x8xf32>
    %47 = tpu.matmul %44, %46, %cst_25 {dimension_numbers = #tpu.dot_dimension_numbers<[1], [0], [0], [1], [0, 0, 1, 1], [], []>} : vector<128x8xbf16>, vector<8x8xbf16>, vector<128x8xf32> -> vector<128x8xf32>
    %48 = arith.addf %41, %47 : vector<128x8xf32>
    %c0_26 = arith.constant 0 : index
    %c2 = arith.constant 2 : index
    %c0_27 = arith.constant 0 : index
    %49 = vector.load %arg10[%c0_26, %c2, %c0_27] : memref<10x18x8xf32, #tpu.memory_space<vmem>>, vector<8x16x8xf32>
    %50 = vector.shape_cast %49 : vector<8x16x8xf32> to vector<128x8xf32>
    %51 = arith.truncf %50 : vector<128x8xf32> to vector<128x8xbf16>
    %c2_28 = arith.constant 2 : index
    %c0_29 = arith.constant 0 : index
    %c0_30 = arith.constant 0 : index
    %52 = vector.load %arg5[%c2_28, %c0_29, %c0_30] : memref<9x8x8xbf16, #tpu.memory_space<vmem>>, vector<1x8x8xbf16>
    %53 = vector.shape_cast %52 : vector<1x8x8xbf16> to vector<8x8xbf16>
    %cst_31 = arith.constant dense<0.000000e+00> : vector<128x8xf32>
    %54 = tpu.matmul %51, %53, %cst_31 {dimension_numbers = #tpu.dot_dimension_numbers<[1], [0], [0], [1], [0, 0, 1, 1], [], []>} : vector<128x8xbf16>, vector<8x8xbf16>, vector<128x8xf32> -> vector<128x8xf32>
    %55 = arith.addf %48, %54 : vector<128x8xf32>
    %c1_32 = arith.constant 1 : index
    %c0_33 = arith.constant 0 : index
    %c0_34 = arith.constant 0 : index
    %56 = vector.load %arg10[%c1_32, %c0_33, %c0_34] : memref<10x18x8xf32, #tpu.memory_space<vmem>>, vector<8x16x8xf32>
    %57 = vector.shape_cast %56 : vector<8x16x8xf32> to vector<128x8xf32>
    %58 = arith.truncf %57 : vector<128x8xf32> to vector<128x8xbf16>
    %c3 = arith.constant 3 : index
    %c0_35 = arith.constant 0 : index
    %c0_36 = arith.constant 0 : index
    %59 = vector.load %arg5[%c3, %c0_35, %c0_36] : memref<9x8x8xbf16, #tpu.memory_space<vmem>>, vector<1x8x8xbf16>
    %60 = vector.shape_cast %59 : vector<1x8x8xbf16> to vector<8x8xbf16>
    %cst_37 = arith.constant dense<0.000000e+00> : vector<128x8xf32>
    %61 = tpu.matmul %58, %60, %cst_37 {dimension_numbers = #tpu.dot_dimension_numbers<[1], [0], [0], [1], [0, 0, 1, 1], [], []>} : vector<128x8xbf16>, vector<8x8xbf16>, vector<128x8xf32> -> vector<128x8xf32>
    %62 = arith.addf %55, %61 : vector<128x8xf32>
    %c1_38 = arith.constant 1 : index
    %c1_39 = arith.constant 1 : index
    %c0_40 = arith.constant 0 : index
    %63 = vector.load %arg10[%c1_38, %c1_39, %c0_40] : memref<10x18x8xf32, #tpu.memory_space<vmem>>, vector<8x16x8xf32>
    %64 = vector.shape_cast %63 : vector<8x16x8xf32> to vector<128x8xf32>
    %65 = arith.truncf %64 : vector<128x8xf32> to vector<128x8xbf16>
    %c4 = arith.constant 4 : index
    %c0_41 = arith.constant 0 : index
    %c0_42 = arith.constant 0 : index
    %66 = vector.load %arg5[%c4, %c0_41, %c0_42] : memref<9x8x8xbf16, #tpu.memory_space<vmem>>, vector<1x8x8xbf16>
    %67 = vector.shape_cast %66 : vector<1x8x8xbf16> to vector<8x8xbf16>
    %cst_43 = arith.constant dense<0.000000e+00> : vector<128x8xf32>
    %68 = tpu.matmul %65, %67, %cst_43 {dimension_numbers = #tpu.dot_dimension_numbers<[1], [0], [0], [1], [0, 0, 1, 1], [], []>} : vector<128x8xbf16>, vector<8x8xbf16>, vector<128x8xf32> -> vector<128x8xf32>
    %69 = arith.addf %62, %68 : vector<128x8xf32>
    %c1_44 = arith.constant 1 : index
    %c2_45 = arith.constant 2 : index
    %c0_46 = arith.constant 0 : index
    %70 = vector.load %arg10[%c1_44, %c2_45, %c0_46] : memref<10x18x8xf32, #tpu.memory_space<vmem>>, vector<8x16x8xf32>
    %71 = vector.shape_cast %70 : vector<8x16x8xf32> to vector<128x8xf32>
    %72 = arith.truncf %71 : vector<128x8xf32> to vector<128x8xbf16>
    %c5 = arith.constant 5 : index
    %c0_47 = arith.constant 0 : index
    %c0_48 = arith.constant 0 : index
    %73 = vector.load %arg5[%c5, %c0_47, %c0_48] : memref<9x8x8xbf16, #tpu.memory_space<vmem>>, vector<1x8x8xbf16>
    %74 = vector.shape_cast %73 : vector<1x8x8xbf16> to vector<8x8xbf16>
    %cst_49 = arith.constant dense<0.000000e+00> : vector<128x8xf32>
    %75 = tpu.matmul %72, %74, %cst_49 {dimension_numbers = #tpu.dot_dimension_numbers<[1], [0], [0], [1], [0, 0, 1, 1], [], []>} : vector<128x8xbf16>, vector<8x8xbf16>, vector<128x8xf32> -> vector<128x8xf32>
    %76 = arith.addf %69, %75 : vector<128x8xf32>
    %c2_50 = arith.constant 2 : index
    %c0_51 = arith.constant 0 : index
    %c0_52 = arith.constant 0 : index
    %77 = vector.load %arg10[%c2_50, %c0_51, %c0_52] : memref<10x18x8xf32, #tpu.memory_space<vmem>>, vector<8x16x8xf32>
    %78 = vector.shape_cast %77 : vector<8x16x8xf32> to vector<128x8xf32>
    %79 = arith.truncf %78 : vector<128x8xf32> to vector<128x8xbf16>
    %c6 = arith.constant 6 : index
    %c0_53 = arith.constant 0 : index
    %c0_54 = arith.constant 0 : index
    %80 = vector.load %arg5[%c6, %c0_53, %c0_54] : memref<9x8x8xbf16, #tpu.memory_space<vmem>>, vector<1x8x8xbf16>
    %81 = vector.shape_cast %80 : vector<1x8x8xbf16> to vector<8x8xbf16>
    %cst_55 = arith.constant dense<0.000000e+00> : vector<128x8xf32>
    %82 = tpu.matmul %79, %81, %cst_55 {dimension_numbers = #tpu.dot_dimension_numbers<[1], [0], [0], [1], [0, 0, 1, 1], [], []>} : vector<128x8xbf16>, vector<8x8xbf16>, vector<128x8xf32> -> vector<128x8xf32>
    %83 = arith.addf %76, %82 : vector<128x8xf32>
    %c2_56 = arith.constant 2 : index
    %c1_57 = arith.constant 1 : index
    %c0_58 = arith.constant 0 : index
    %84 = vector.load %arg10[%c2_56, %c1_57, %c0_58] : memref<10x18x8xf32, #tpu.memory_space<vmem>>, vector<8x16x8xf32>
    %85 = vector.shape_cast %84 : vector<8x16x8xf32> to vector<128x8xf32>
    %86 = arith.truncf %85 : vector<128x8xf32> to vector<128x8xbf16>
    %c7 = arith.constant 7 : index
    %c0_59 = arith.constant 0 : index
    %c0_60 = arith.constant 0 : index
    %87 = vector.load %arg5[%c7, %c0_59, %c0_60] : memref<9x8x8xbf16, #tpu.memory_space<vmem>>, vector<1x8x8xbf16>
    %88 = vector.shape_cast %87 : vector<1x8x8xbf16> to vector<8x8xbf16>
    %cst_61 = arith.constant dense<0.000000e+00> : vector<128x8xf32>
    %89 = tpu.matmul %86, %88, %cst_61 {dimension_numbers = #tpu.dot_dimension_numbers<[1], [0], [0], [1], [0, 0, 1, 1], [], []>} : vector<128x8xbf16>, vector<8x8xbf16>, vector<128x8xf32> -> vector<128x8xf32>
    %90 = arith.addf %83, %89 : vector<128x8xf32>
    %c2_62 = arith.constant 2 : index
    %c2_63 = arith.constant 2 : index
    %c0_64 = arith.constant 0 : index
    %91 = vector.load %arg10[%c2_62, %c2_63, %c0_64] : memref<10x18x8xf32, #tpu.memory_space<vmem>>, vector<8x16x8xf32>
    %92 = vector.shape_cast %91 : vector<8x16x8xf32> to vector<128x8xf32>
    %93 = arith.truncf %92 : vector<128x8xf32> to vector<128x8xbf16>
    %c8 = arith.constant 8 : index
    %c0_65 = arith.constant 0 : index
    %c0_66 = arith.constant 0 : index
    %94 = vector.load %arg5[%c8, %c0_65, %c0_66] : memref<9x8x8xbf16, #tpu.memory_space<vmem>>, vector<1x8x8xbf16>
    %95 = vector.shape_cast %94 : vector<1x8x8xbf16> to vector<8x8xbf16>
    %cst_67 = arith.constant dense<0.000000e+00> : vector<128x8xf32>
    %96 = tpu.matmul %93, %95, %cst_67 {dimension_numbers = #tpu.dot_dimension_numbers<[1], [0], [0], [1], [0, 0, 1, 1], [], []>} : vector<128x8xbf16>, vector<8x8xbf16>, vector<128x8xf32> -> vector<128x8xf32>
    %97 = arith.addf %90, %96 : vector<128x8xf32>
    %c8_i32_68 = arith.constant 8 : i32
    %98 = arith.muli %arg1, %c8_i32_68 : i32
    %c1_i32_69 = arith.constant 1 : i32
    %99 = arith.muli %98, %c1_i32_69 : i32
    %c0_70 = arith.constant 0 : index
    %100 = arith.index_cast %99 : i32 to index
    %c0_71 = arith.constant 0 : index
    %c0_72 = arith.constant 0 : index
    %101 = vector.load %arg6[%c0_70, %100, %c0_71, %c0_72] : memref<1x18x18x4xf32, #tpu.memory_space<vmem>>, vector<1x10x18x4xf32>
    %102 = vector.shape_cast %101 : vector<1x10x18x4xf32> to vector<10x18x4xf32>
    %c0_73 = arith.constant 0 : index
    %c0_74 = arith.constant 0 : index
    %c0_75 = arith.constant 0 : index
    %103 = vector.load %arg11[%c0_73, %c0_74, %c0_75] : memref<10x18x4xf32, #tpu.memory_space<vmem>>, vector<10x18x4xf32>
    tpu.vector_store %arg11[%c0_73, %c0_74, %c0_75], %102 {strides = array<i32>} : memref<10x18x4xf32, #tpu.memory_space<vmem>>, vector<10x18x4xf32>,
    %c0_76 = arith.constant 0 : index
    %c0_77 = arith.constant 0 : index
    %c0_78 = arith.constant 0 : index
    %104 = vector.load %arg11[%c0_76, %c0_77, %c0_78] : memref<10x18x4xf32, #tpu.memory_space<vmem>>, vector<8x16x4xf32>
    %105 = vector.shape_cast %104 : vector<8x16x4xf32> to vector<128x4xf32>
    %106 = arith.truncf %105 : vector<128x4xf32> to vector<128x4xbf16>
    %c0_79 = arith.constant 0 : index
    %c0_80 = arith.constant 0 : index
    %c0_81 = arith.constant 0 : index
    %107 = vector.load %arg7[%c0_79, %c0_80, %c0_81] : memref<9x4x8xbf16, #tpu.memory_space<vmem>>, vector<1x4x8xbf16>
    %108 = vector.shape_cast %107 : vector<1x4x8xbf16> to vector<4x8xbf16>
    %cst_82 = arith.constant dense<0.000000e+00> : vector<128x8xf32>
    %109 = tpu.matmul %106, %108, %cst_82 {dimension_numbers = #tpu.dot_dimension_numbers<[1], [0], [0], [1], [0, 0, 1, 1], [], []>} : vector<128x4xbf16>, vector<4x8xbf16>, vector<128x8xf32> -> vector<128x8xf32>
    %110 = arith.addf %97, %109 : vector<128x8xf32>
    %c0_83 = arith.constant 0 : index
    %c1_84 = arith.constant 1 : index
    %c0_85 = arith.constant 0 : index
    %111 = vector.load %arg11[%c0_83, %c1_84, %c0_85] : memref<10x18x4xf32, #tpu.memory_space<vmem>>, vector<8x16x4xf32>
    %112 = vector.shape_cast %111 : vector<8x16x4xf32> to vector<128x4xf32>
    %113 = arith.truncf %112 : vector<128x4xf32> to vector<128x4xbf16>
    %c1_86 = arith.constant 1 : index
    %c0_87 = arith.constant 0 : index
    %c0_88 = arith.constant 0 : index
    %114 = vector.load %arg7[%c1_86, %c0_87, %c0_88] : memref<9x4x8xbf16, #tpu.memory_space<vmem>>, vector<1x4x8xbf16>
    %115 = vector.shape_cast %114 : vector<1x4x8xbf16> to vector<4x8xbf16>
    %cst_89 = arith.constant dense<0.000000e+00> : vector<128x8xf32>
    %116 = tpu.matmul %113, %115, %cst_89 {dimension_numbers = #tpu.dot_dimension_numbers<[1], [0], [0], [1], [0, 0, 1, 1], [], []>} : vector<128x4xbf16>, vector<4x8xbf16>, vector<128x8xf32> -> vector<128x8xf32>
    %117 = arith.addf %110, %116 : vector<128x8xf32>
    %c0_90 = arith.constant 0 : index
    %c2_91 = arith.constant 2 : index
    %c0_92 = arith.constant 0 : index
    %118 = vector.load %arg11[%c0_90, %c2_91, %c0_92] : memref<10x18x4xf32, #tpu.memory_space<vmem>>, vector<8x16x4xf32>
    %119 = vector.shape_cast %118 : vector<8x16x4xf32> to vector<128x4xf32>
    %120 = arith.truncf %119 : vector<128x4xf32> to vector<128x4xbf16>
    %c2_93 = arith.constant 2 : index
    %c0_94 = arith.constant 0 : index
    %c0_95 = arith.constant 0 : index
    %121 = vector.load %arg7[%c2_93, %c0_94, %c0_95] : memref<9x4x8xbf16, #tpu.memory_space<vmem>>, vector<1x4x8xbf16>
    %122 = vector.shape_cast %121 : vector<1x4x8xbf16> to vector<4x8xbf16>
    %cst_96 = arith.constant dense<0.000000e+00> : vector<128x8xf32>
    %123 = tpu.matmul %120, %122, %cst_96 {dimension_numbers = #tpu.dot_dimension_numbers<[1], [0], [0], [1], [0, 0, 1, 1], [], []>} : vector<128x4xbf16>, vector<4x8xbf16>, vector<128x8xf32> -> vector<128x8xf32>
    %124 = arith.addf %117, %123 : vector<128x8xf32>
    %c1_97 = arith.constant 1 : index
    %c0_98 = arith.constant 0 : index
    %c0_99 = arith.constant 0 : index
    %125 = vector.load %arg11[%c1_97, %c0_98, %c0_99] : memref<10x18x4xf32, #tpu.memory_space<vmem>>, vector<8x16x4xf32>
    %126 = vector.shape_cast %125 : vector<8x16x4xf32> to vector<128x4xf32>
    %127 = arith.truncf %126 : vector<128x4xf32> to vector<128x4xbf16>
    %c3_100 = arith.constant 3 : index
    %c0_101 = arith.constant 0 : index
    %c0_102 = arith.constant 0 : index
    %128 = vector.load %arg7[%c3_100, %c0_101, %c0_102] : memref<9x4x8xbf16, #tpu.memory_space<vmem>>, vector<1x4x8xbf16>
    %129 = vector.shape_cast %128 : vector<1x4x8xbf16> to vector<4x8xbf16>
    %cst_103 = arith.constant dense<0.000000e+00> : vector<128x8xf32>
    %130 = tpu.matmul %127, %129, %cst_103 {dimension_numbers = #tpu.dot_dimension_numbers<[1], [0], [0], [1], [0, 0, 1, 1], [], []>} : vector<128x4xbf16>, vector<4x8xbf16>, vector<128x8xf32> -> vector<128x8xf32>
    %131 = arith.addf %124, %130 : vector<128x8xf32>
    %c1_104 = arith.constant 1 : index
    %c1_105 = arith.constant 1 : index
    %c0_106 = arith.constant 0 : index
    %132 = vector.load %arg11[%c1_104, %c1_105, %c0_106] : memref<10x18x4xf32, #tpu.memory_space<vmem>>, vector<8x16x4xf32>
    %133 = vector.shape_cast %132 : vector<8x16x4xf32> to vector<128x4xf32>
    %134 = arith.truncf %133 : vector<128x4xf32> to vector<128x4xbf16>
    %c4_107 = arith.constant 4 : index
    %c0_108 = arith.constant 0 : index
    %c0_109 = arith.constant 0 : index
    %135 = vector.load %arg7[%c4_107, %c0_108, %c0_109] : memref<9x4x8xbf16, #tpu.memory_space<vmem>>, vector<1x4x8xbf16>
    %136 = vector.shape_cast %135 : vector<1x4x8xbf16> to vector<4x8xbf16>
    %cst_110 = arith.constant dense<0.000000e+00> : vector<128x8xf32>
    %137 = tpu.matmul %134, %136, %cst_110 {dimension_numbers = #tpu.dot_dimension_numbers<[1], [0], [0], [1], [0, 0, 1, 1], [], []>} : vector<128x4xbf16>, vector<4x8xbf16>, vector<128x8xf32> -> vector<128x8xf32>
    %138 = arith.addf %131, %137 : vector<128x8xf32>
    %c1_111 = arith.constant 1 : index
    %c2_112 = arith.constant 2 : index
    %c0_113 = arith.constant 0 : index
    %139 = vector.load %arg11[%c1_111, %c2_112, %c0_113] : memref<10x18x4xf32, #tpu.memory_space<vmem>>, vector<8x16x4xf32>
    %140 = vector.shape_cast %139 : vector<8x16x4xf32> to vector<128x4xf32>
    %141 = arith.truncf %140 : vector<128x4xf32> to vector<128x4xbf16>
    %c5_114 = arith.constant 5 : index
    %c0_115 = arith.constant 0 : index
    %c0_116 = arith.constant 0 : index
    %142 = vector.load %arg7[%c5_114, %c0_115, %c0_116] : memref<9x4x8xbf16, #tpu.memory_space<vmem>>, vector<1x4x8xbf16>
    %143 = vector.shape_cast %142 : vector<1x4x8xbf16> to vector<4x8xbf16>
    %cst_117 = arith.constant dense<0.000000e+00> : vector<128x8xf32>
    %144 = tpu.matmul %141, %143, %cst_117 {dimension_numbers = #tpu.dot_dimension_numbers<[1], [0], [0], [1], [0, 0, 1, 1], [], []>} : vector<128x4xbf16>, vector<4x8xbf16>, vector<128x8xf32> -> vector<128x8xf32>
    %145 = arith.addf %138, %144 : vector<128x8xf32>
    %c2_118 = arith.constant 2 : index
    %c0_119 = arith.constant 0 : index
    %c0_120 = arith.constant 0 : index
    %146 = vector.load %arg11[%c2_118, %c0_119, %c0_120] : memref<10x18x4xf32, #tpu.memory_space<vmem>>, vector<8x16x4xf32>
    %147 = vector.shape_cast %146 : vector<8x16x4xf32> to vector<128x4xf32>
    %148 = arith.truncf %147 : vector<128x4xf32> to vector<128x4xbf16>
    %c6_121 = arith.constant 6 : index
    %c0_122 = arith.constant 0 : index
    %c0_123 = arith.constant 0 : index
    %149 = vector.load %arg7[%c6_121, %c0_122, %c0_123] : memref<9x4x8xbf16, #tpu.memory_space<vmem>>, vector<1x4x8xbf16>
    %150 = vector.shape_cast %149 : vector<1x4x8xbf16> to vector<4x8xbf16>
    %cst_124 = arith.constant dense<0.000000e+00> : vector<128x8xf32>
    %151 = tpu.matmul %148, %150, %cst_124 {dimension_numbers = #tpu.dot_dimension_numbers<[1], [0], [0], [1], [0, 0, 1, 1], [], []>} : vector<128x4xbf16>, vector<4x8xbf16>, vector<128x8xf32> -> vector<128x8xf32>
    %152 = arith.addf %145, %151 : vector<128x8xf32>
    %c2_125 = arith.constant 2 : index
    %c1_126 = arith.constant 1 : index
    %c0_127 = arith.constant 0 : index
    %153 = vector.load %arg11[%c2_125, %c1_126, %c0_127] : memref<10x18x4xf32, #tpu.memory_space<vmem>>, vector<8x16x4xf32>
    %154 = vector.shape_cast %153 : vector<8x16x4xf32> to vector<128x4xf32>
    %155 = arith.truncf %154 : vector<128x4xf32> to vector<128x4xbf16>
    %c7_128 = arith.constant 7 : index
    %c0_129 = arith.constant 0 : index
    %c0_130 = arith.constant 0 : index
    %156 = vector.load %arg7[%c7_128, %c0_129, %c0_130] : memref<9x4x8xbf16, #tpu.memory_space<vmem>>, vector<1x4x8xbf16>
    %157 = vector.shape_cast %156 : vector<1x4x8xbf16> to vector<4x8xbf16>
    %cst_131 = arith.constant dense<0.000000e+00> : vector<128x8xf32>
    %158 = tpu.matmul %155, %157, %cst_131 {dimension_numbers = #tpu.dot_dimension_numbers<[1], [0], [0], [1], [0, 0, 1, 1], [], []>} : vector<128x4xbf16>, vector<4x8xbf16>, vector<128x8xf32> -> vector<128x8xf32>
    %159 = arith.addf %152, %158 : vector<128x8xf32>
    %c2_132 = arith.constant 2 : index
    %c2_133 = arith.constant 2 : index
    %c0_134 = arith.constant 0 : index
    %160 = vector.load %arg11[%c2_132, %c2_133, %c0_134] : memref<10x18x4xf32, #tpu.memory_space<vmem>>, vector<8x16x4xf32>
    %161 = vector.shape_cast %160 : vector<8x16x4xf32> to vector<128x4xf32>
    %162 = arith.truncf %161 : vector<128x4xf32> to vector<128x4xbf16>
    %c8_135 = arith.constant 8 : index
    %c0_136 = arith.constant 0 : index
    %c0_137 = arith.constant 0 : index
    %163 = vector.load %arg7[%c8_135, %c0_136, %c0_137] : memref<9x4x8xbf16, #tpu.memory_space<vmem>>, vector<1x4x8xbf16>
    %164 = vector.shape_cast %163 : vector<1x4x8xbf16> to vector<4x8xbf16>
    %cst_138 = arith.constant dense<0.000000e+00> : vector<128x8xf32>
    %165 = tpu.matmul %162, %164, %cst_138 {dimension_numbers = #tpu.dot_dimension_numbers<[1], [0], [0], [1], [0, 0, 1, 1], [], []>} : vector<128x4xbf16>, vector<4x8xbf16>, vector<128x8xf32> -> vector<128x8xf32>
    %166 = arith.addf %159, %165 : vector<128x8xf32>
    %c0_139 = arith.constant 0 : index
    %c0_140 = arith.constant 0 : index
    %167 = vector.load %arg8[%c0_139, %c0_140] : memref<1x8xf32, #tpu.memory_space<vmem>>, vector<1x8xf32>
    %168 = vector.broadcast %167 : vector<1x8xf32> to vector<128x8xf32>
    %169 = arith.addf %166, %168 : vector<128x8xf32>
    %c0_141 = arith.constant 0 : index
    %c0_142 = arith.constant 0 : index
    %c0_143 = arith.constant 0 : index
    %170 = vector.load %arg9[%c0_141, %c0_142, %c0_143] : memref<1x128x8xf32, #tpu.memory_space<vmem>>, vector<1x128x8xf32>
    %171 = vector.shape_cast %170 : vector<1x128x8xf32> to vector<128x8xf32>
    %172 = vector.shape_cast %169 : vector<128x8xf32> to vector<1x128x8xf32>
    tpu.vector_store %arg9[%c0_141, %c0_142, %c0_143], %172 {strides = array<i32>} : memref<1x128x8xf32, #tpu.memory_space<vmem>>, vector<1x128x8xf32>,
    return
  }
  func.func @transform_0(%arg0: i32, %arg1: i32) -> (i32, i32, i32, i32) {
    %c0_i32 = arith.constant 0 : i32
    %c0_i32_0 = arith.constant 0 : i32
    %c0_i32_1 = arith.constant 0 : i32
    %c0_i32_2 = arith.constant 0 : i32
    return %arg0, %c0_i32, %c0_i32_0, %c0_i32_1 : i32, i32, i32, i32
  }
  func.func @transform_1(%arg0: i32, %arg1: i32) -> (i32, i32) {
    %c0_i32 = arith.constant 0 : i32
    %c0_i32_0 = arith.constant 0 : i32
    %c0_i32_1 = arith.constant 0 : i32
    return %c0_i32, %c0_i32_0 : i32, i32
  }
  func.func @transform_2(%arg0: i32, %arg1: i32) -> (i32, i32) {
    %c0_i32 = arith.constant 0 : i32
    %c0_i32_0 = arith.constant 0 : i32
    %c0_i32_1 = arith.constant 0 : i32
    return %c0_i32, %c0_i32_0 : i32, i32
  }
  func.func @transform_3(%arg0: i32, %arg1: i32) -> (i32, i32, i32) {
    %c0_i32 = arith.constant 0 : i32
    %c0_i32_0 = arith.constant 0 : i32
    %c0_i32_1 = arith.constant 0 : i32
    %c0_i32_2 = arith.constant 0 : i32
    return %c0_i32, %c0_i32_0, %c0_i32_1 : i32, i32, i32
  }
  func.func @transform_4(%arg0: i32, %arg1: i32) -> (i32, i32, i32, i32) {
    %c0_i32 = arith.constant 0 : i32
    %c0_i32_0 = arith.constant 0 : i32
    %c0_i32_1 = arith.constant 0 : i32
    %c0_i32_2 = arith.constant 0 : i32
    return %arg0, %c0_i32, %c0_i32_0, %c0_i32_1 : i32, i32, i32, i32
  }
  func.func @transform_5(%arg0: i32, %arg1: i32) -> (i32, i32, i32) {
    %c0_i32 = arith.constant 0 : i32
    %c0_i32_0 = arith.constant 0 : i32
    %c0_i32_1 = arith.constant 0 : i32
    %c0_i32_2 = arith.constant 0 : i32
    return %c0_i32, %c0_i32_0, %c0_i32_1 : i32, i32, i32
  }
  func.func @transform_6(%arg0: i32, %arg1: i32) -> (i32, i32) {
    %c0_i32 = arith.constant 0 : i32
    %c0_i32_0 = arith.constant 0 : i32
    %c0_i32_1 = arith.constant 0 : i32
    return %c0_i32, %c0_i32_0 : i32, i32
  }
  func.func @transform_7(%arg0: i32, %arg1: i32) -> (i32, i32, i32) {
    %c0_i32 = arith.constant 0 : i32
    %c0_i32_0 = arith.constant 0 : i32
    return %arg0, %arg1, %c0_i32 : i32, i32, i32
  }
}

</mosaic_0001>

<llo_original>
// kernel: residual_block_forward.2
$region0: #{residual_block_forward.2}
  #allocation0 [shape = 'u32[]', space=smem, size = 0x4, offset = 0x4, fixed_abs, tag = 'smem constant byte address 0x4 - core index']
  #allocation1 [shape = 'u32[72,128]{1,0:T(1,128)}', space=vmem, size = 0x9000, scoped, tag = 'internal scratch']
  #allocation2 [shape = 'f32[10,18,4]{2,1,0:T(8,128)}', space=vmem, size = 0x1e000, scoped, tag = 'scratch operand']
  %s0 = inlined_call_operand.vmem [shape: f32[2,18,18,4], index: 0, kind: input, shape index: {}]
  %s1 = inlined_call_operand.vmem [shape: f32[1,4], index: 1, kind: input, shape index: {}]
  %s2 = inlined_call_operand.vmem [shape: f32[1,4], index: 2, kind: input, shape index: {}]
  %s3 = inlined_call_operand.vmem [shape: bf16[9,4,8], index: 3, kind: input, shape index: {}]
  %s4 = inlined_call_operand.vmem [shape: f32[1,8], index: 4, kind: input, shape index: {}]
  %s5 = inlined_call_operand.vmem [shape: f32[2,256,8], index: 5, kind: output, shape index: {}]
  %s6 = sld [smem:[#allocation0]]
  $region53: #{residual_block_forward.2} parent=0
    _
  %s8 = ssub.s32 1, %s6
  %s9 = scalar_select 0, %s8, %s6
  loop: start=0, step=1, limit=6
  $region2: #{residual_block_forward.2} parent=0 // loop_pre_header
    _
  $region3: #{residual_block_forward.2} parent=0 // loop_header
    %s11 = sphi 0, %s15
    %p12 = scmp.ge.s32.totalorder %s11, 6
    %s18 = sphi 0, %s30
    %s19 = sphi 0, %s26
    %s20 = sphi 0, %s18
    %s21 = sphi 0, %s19
    %s22 = sphi 0, %s20
    %s23 = sphi 0, %s21
    %s33 = sphi 0, %s35
    %s36 = sphi 0, %s33
    %s37 = sphi 0, %s36
    %s53 = sphi 0, %s37
    %s57 = sphi 0, %s57
    %s59 = sphi 0, %s57
    %s60 = sphi 0, %s59
    %s74 = sphi 0, %s60
    %s78 = sphi 0, %s78
    %s80 = sphi 0, %s78
    %s81 = sphi 0, %s80
    %s95 = sphi 0, %s81
    %s99 = sphi 0, %s99
    %s101 = sphi 0, %s99
    %s102 = sphi 0, %s101
    %s116 = sphi 0, %s102
    %s120 = sphi 0, %s120
    %s122 = sphi 0, %s120
    %s123 = sphi 0, %s122
    %s137 = sphi 0, %s123
    %s145 = sphi 0, %s147
    %s148 = sphi 0, %s145
    %s149 = sphi 0, %s148
    %s165 = sphi 0, %s149
  $region4: #{residual_block_forward.2} parent=0 // loop_header_branch
    %14 = sbr.rel (%p12) target = $region8
  $region5: #{residual_block_forward.2} parent=0 // loop_body
    %s16 = ssub.s32 %s11, 1
    %s17 = ssub.s32 %s11, 2
    %s24 = sadd.s32 1, %s19
    %p25 = scmp.ge.s32.totalorder %s24, 2
    %s26 = scalar_select %p25, 0, %s24
    %s27 = sadd.s32 1, %s18
    %s28 = scalar_select %p25, %s27, %s18
    %p29 = scmp.ge.s32.totalorder %s28, 2
    %s30 = scalar_select %p29, 0, %s28
    %s31 = ssub.s32 %s18, %s30
    %p32 = scmp.eq.s32.totalorder %s31, 0
    %s34 = sadd.s32 %s33, 1
    %s35 = scalar_select %p32, %s33, %s34
    %p38 = pneg %p32
    %p39 = scmp.eq.s32.totalorder %s11, 3
    %p40 = por %p38, %p39
    %p41 = scmp.ne.s32.totalorder %s33, %s36
    %p42 = scmp.eq.s32.totalorder %s11, 0
    %p43 = por %p41, %p42
    %p44 = scmp.ne.s32.totalorder %s33, %s36
    %p45 = scmp.eq.s32.totalorder %s16, 3
    %p46 = por %p44, %p45
    %p47 = scmp.ne.s32.totalorder %s36, %s37
    %p48 = scmp.eq.s32.totalorder %s16, 0
    %p49 = por %p47, %p48
    %p50 = scmp.ne.s32.totalorder %s36, %s37
    %p51 = scmp.eq.s32.totalorder %s17, 3
    %p52 = por %p50, %p51
    %p54 = scmp.ne.s32.totalorder %s37, %s53
    %p55 = scmp.eq.s32.totalorder %s17, 0
    %p56 = por %p54, %p55
    %s58 = sadd.s32 %s57, 1
    %p61 = scmp.eq.s32.totalorder %s11, 3
    %p62 = scmp.ne.s32.totalorder %s57, %s59
    %p63 = scmp.eq.s32.totalorder %s11, 0
    %p64 = por %p62, %p63
    %p65 = scmp.ne.s32.totalorder %s57, %s59
    %p66 = scmp.eq.s32.totalorder %s16, 3
    %p67 = por %p65, %p66
    %p68 = scmp.ne.s32.totalorder %s59, %s60
    %p69 = scmp.eq.s32.totalorder %s16, 0
    %p70 = por %p68, %p69
    %p71 = scmp.ne.s32.totalorder %s59, %s60
    %p72 = scmp.eq.s32.totalorder %s17, 3
    %p73 = por %p71, %p72
    %p75 = scmp.ne.s32.totalorder %s60, %s74
    %p76 = scmp.eq.s32.totalorder %s17, 0
    %p77 = por %p75, %p76
    %s79 = sadd.s32 %s78, 1
    %p82 = scmp.eq.s32.totalorder %s11, 3
    %p83 = scmp.ne.s32.totalorder %s78, %s80
    %p84 = scmp.eq.s32.totalorder %s11, 0
    %p85 = por %p83, %p84
    %p86 = scmp.ne.s32.totalorder %s78, %s80
    %p87 = scmp.eq.s32.totalorder %s16, 3
    %p88 = por %p86, %p87
    %p89 = scmp.ne.s32.totalorder %s80, %s81
    %p90 = scmp.eq.s32.totalorder %s16, 0
    %p91 = por %p89, %p90
    %p92 = scmp.ne.s32.totalorder %s80, %s81
    %p93 = scmp.eq.s32.totalorder %s17, 3
    %p94 = por %p92, %p93
    %p96 = scmp.ne.s32.totalorder %s81, %s95
    %p97 = scmp.eq.s32.totalorder %s17, 0
    %p98 = por %p96, %p97
    %s100 = sadd.s32 %s99, 1
    %p103 = scmp.eq.s32.totalorder %s11, 3
    %p104 = scmp.ne.s32.totalorder %s99, %s101
    %p105 = scmp.eq.s32.totalorder %s11, 0
    %p106 = por %p104, %p105
    %p107 = scmp.ne.s32.totalorder %s99, %s101
    %p108 = scmp.eq.s32.totalorder %s16, 3
    %p109 = por %p107, %p108
    %p110 = scmp.ne.s32.totalorder %s101, %s102
    %p111 = scmp.eq.s32.totalorder %s16, 0
    %p112 = por %p110, %p111
    %p113 = scmp.ne.s32.totalorder %s101, %s102
    %p114 = scmp.eq.s32.totalorder %s17, 3
    %p115 = por %p113, %p114
    %p117 = scmp.ne.s32.totalorder %s102, %s116
    %p118 = scmp.eq.s32.totalorder %s17, 0
    %p119 = por %p117, %p118
    %s121 = sadd.s32 %s120, 1
    %p124 = scmp.eq.s32.totalorder %s11, 3
    %p125 = scmp.ne.s32.totalorder %s120, %s122
    %p126 = scmp.eq.s32.totalorder %s11, 0
    %p127 = por %p125, %p126
    %p128 = scmp.ne.s32.totalorder %s120, %s122
    %p129 = scmp.eq.s32.totalorder %s16, 3
    %p130 = por %p128, %p129
    %p131 = scmp.ne.s32.totalorder %s122, %s123
    %p132 = scmp.eq.s32.totalorder %s16, 0
    %p133 = por %p131, %p132
    %p134 = scmp.ne.s32.totalorder %s122, %s123
    %p135 = scmp.eq.s32.totalorder %s17, 3
    %p136 = por %p134, %p135
    %p138 = scmp.ne.s32.totalorder %s123, %s137
    %p139 = scmp.eq.s32.totalorder %s17, 0
    %p140 = por %p138, %p139
    %s141 = ssub.s32 %s18, %s30
    %s142 = ssub.s32 %s19, %s26
    %s143 = sor.u32 %s141, %s142
    %p144 = scmp.eq.s32.totalorder %s143, 0
    %s146 = sadd.s32 %s145, 1
    %s147 = scalar_select %p144, %s145, %s146
    %p150 = pneg %p144
    %p151 = scmp.eq.s32.totalorder %s11, 3
    %p152 = por %p150, %p151
    %p153 = scmp.ne.s32.totalorder %s145, %s148
    %p154 = scmp.eq.s32.totalorder %s11, 0
    %p155 = por %p153, %p154
    %p156 = scmp.ne.s32.totalorder %s145, %s148
    %p157 = scmp.eq.s32.totalorder %s16, 3
    %p158 = por %p156, %p157
    %p159 = scmp.ne.s32.totalorder %s148, %s149
    %p160 = scmp.eq.s32.totalorder %s16, 0
    %p161 = por %p159, %p160
    %p162 = scmp.ne.s32.totalorder %s148, %s149
    %p163 = scmp.eq.s32.totalorder %s17, 3
    %p164 = por %p162, %p163
    %p166 = scmp.ne.s32.totalorder %s149, %s165
    %p167 = scmp.eq.s32.totalorder %s17, 0
    %p168 = por %p166, %p167
    %p169 = scmp.le.s32.totalorder 1, %s11
    %p170 = scmp.lt.s32.totalorder %s11, 5
    %p171 = pnand %p169, %p170
    %p172 = pneg %p171
    // Predicated region
    $region9: #{residual_block_forward.2} parent=5 // pred_check
      _
    $region10: #{residual_block_forward.2} parent=5 // pred_check_branch
      %174 = sbr.rel (%p171) target = $region12
    $region11: #{residual_block_forward.2} parent=5 // pred_region
      %s175 = ssub.s32 %s11, 1
      // Predicated region
      $region13: #{residual_block_forward.2} parent=11 // pred_check
        %p176 = pneg %p70
      $region14: #{residual_block_forward.2} parent=11 // pred_check_branch
        %178 = sbr.rel (%p176) target = $region16
      $region15: #{residual_block_forward.2} parent=11 // pred_region
        _
      $region16: #{residual_block_forward.2} parent=11 // pred_fallthru
        _
      // Predicated region
      $region17: #{residual_block_forward.2} parent=11 // pred_check
        %p179 = pneg %p91
      $region18: #{residual_block_forward.2} parent=11 // pred_check_branch
        %181 = sbr.rel (%p179) target = $region20
      $region19: #{residual_block_forward.2} parent=11 // pred_region
        _
      $region20: #{residual_block_forward.2} parent=11 // pred_fallthru
        _
      // Predicated region
      $region21: #{residual_block_forward.2} parent=11 // pred_check
        %p182 = pneg %p112
      $region22: #{residual_block_forward.2} parent=11 // pred_check_branch
        %184 = sbr.rel (%p182) target = $region24
      $region23: #{residual_block_forward.2} parent=11 // pred_region
        _
      $region24: #{residual_block_forward.2} parent=11 // pred_fallthru
        _
      // Predicated region
      $region25: #{residual_block_forward.2} parent=11 // pred_check
        %p185 = pneg %p133
      $region26: #{residual_block_forward.2} parent=11 // pred_check_branch
        %187 = sbr.rel (%p185) target = $region28
      $region27: #{residual_block_forward.2} parent=11 // pred_region
        _
      $region28: #{residual_block_forward.2} parent=11 // pred_fallthru
        _
    $region12: #{residual_block_forward.2} parent=5 // pred_fallthru
      _
    %p188 = scmp.lt.s32.totalorder %s11, 4
    // Predicated region
    $region29: #{residual_block_forward.2} parent=5 // pred_check
      %p189 = pneg %p188
    $region30: #{residual_block_forward.2} parent=5 // pred_check_branch
      %191 = sbr.rel (%p189) target = $region32
    $region31: #{residual_block_forward.2} parent=5 // pred_region
      // Predicated region
      $region33: #{residual_block_forward.2} parent=31 // pred_check
        %p192 = pneg %p43
      $region34: #{residual_block_forward.2} parent=31 // pred_check_branch
        %194 = sbr.rel (%p192) target = $region36
      $region35: #{residual_block_forward.2} parent=31 // pred_region
        %p195 = scmp.lt.s32.totalorder %s18, 1
        %s196 = scalar_select %p195, %s18, 1
        %s197 = smul.addr %s196, 54
        %s198 = smul.addr %s197, 8
        %s199 = scalar_lea.vmem %s0, %s198
      $region36: #{residual_block_forward.2} parent=31 // pred_fallthru
        _
    $region32: #{residual_block_forward.2} parent=5 // pred_fallthru
      _
    %p200 = scmp.le.s32.totalorder 1, %s11
    %p201 = scmp.lt.s32.totalorder %s11, 5
    %p202 = pnand %p200, %p201
    %p203 = pneg %p202
    // Predicated region
    $region37: #{residual_block_forward.2} parent=5 // pred_check
      _
    $region38: #{residual_block_forward.2} parent=5 // pred_check_branch
      %205 = sbr.rel (%p202) target = $region40
    $region39: #{residual_block_forward.2} parent=5 // pred_region
      %s206 = ssub.s32 %s11, 1
      %p207 = scmp.lt.s32.totalorder %s20, 1
      %s208 = scalar_select %p207, %s20, 1
      %s209 = smul.addr %s208, 54
      %s210 = smul.addr %s209, 8
      %s211 = scalar_lea.vmem %s0, %s210
      %p212 = pneg %p49
      %p213 = pneg %p46
      %p214 = pneg %p70
      %p215 = pneg %p67
      %p216 = pneg %p91
      %p217 = pneg %p88
      %p218 = pneg %p112
      %p219 = pneg %p109
      %p220 = pneg %p133
      %p221 = pneg %p130
      %p222 = pneg %p161
      %p223 = pneg %p158
      %s224 = smul.u32 16, %s21
      %p225 = scmp.lt.s32.totalorder %s20, 1
      %s226 = scalar_select %p225, %s20, 1
      %p227 = scmp.lt.s32.totalorder %s224, 31
      %s228 = scalar_select %p227, %s224, 31
      %s229 = smul.addr %s226, 32
      %s230 = sadd.s32 %s228, %s229
      %s231 = smul.addr %s230, 8
      %s232 = scalar_lea.vmem %s5, %s231
      %p233 = scmp.lt.s32.totalorder %s20, 1
      %s234 = scalar_select %p233, %s20, 1
      %s235 = smul.addr %s234, 54
      %s236 = smul.addr %s235, 8
      %s237 = scalar_lea.vmem %s0, %s236
      %s238 = smul.u32 16, %s21
      %p239 = scmp.lt.s32.totalorder %s20, 1
      %s240 = scalar_select %p239, %s20, 1
      %p241 = scmp.lt.s32.totalorder %s238, 31
      %s242 = scalar_select %p241, %s238, 31
      %s243 = smul.addr %s240, 32
      %s244 = sadd.s32 %s242, %s243
      %s245 = smul.addr %s244, 8
      %s246 = scalar_lea.vmem %s5, %s245
      %s247 = smul.u32 16, %s21
      %s249 = smul.u32 %s21, 8
      %v250 = vld [vmem:[%s1] sm:$0x1]
      %v251 = vld [vmem:[%s2] sm:$0x1]
      %s252 = smul.u32 %s249, 24
      %s253 = scalar_lea.vmem %s237, %s252
      %v254 = vld [vmem:[%s253] sm:$0xff]
      %v255 = vld [vmem:[%s253 + $0x8] sm:$0xff]
      %v256 = vld [vmem:[%s253 + $0x10] sm:$0x3]
      %v257 = vld [vmem:[%s253 + $0x18] sm:$0xff]
      %v258 = vld [vmem:[%s253 + $0x20] sm:$0xff]
      %v259 = vld [vmem:[%s253 + $0x28] sm:$0x3]
      %v260 = vld [vmem:[%s253 + $0x30] sm:$0xff]
      %v261 = vld [vmem:[%s253 + $0x38] sm:$0xff]
      %v262 = vld [vmem:[%s253 + $0x40] sm:$0x3]
      %v263 = vld [vmem:[%s253 + $0x48] sm:$0xff]
      %v264 = vld [vmem:[%s253 + $0x50] sm:$0xff]
      %v265 = vld [vmem:[%s253 + $0x58] sm:$0x3]
      %v266 = vld [vmem:[%s253 + $0x60] sm:$0xff]
      %v267 = vld [vmem:[%s253 + $0x68] sm:$0xff]
      %v268 = vld [vmem:[%s253 + $0x70] sm:$0x3]
      %v269 = vld [vmem:[%s253 + $0x78] sm:$0xff]
      %v270 = vld [vmem:[%s253 + $0x80] sm:$0xff]
      %v271 = vld [vmem:[%s253 + $0x88] sm:$0x3]
      %v272 = vld [vmem:[%s253 + $0x90] sm:$0xff]
      %v273 = vld [vmem:[%s253 + $0x98] sm:$0xff]
      %v274 = vld [vmem:[%s253 + $0xa0] sm:$0x3]
      %v275 = vld [vmem:[%s253 + $0xa8] sm:$0xff]
      %v276 = vld [vmem:[%s253 + $0xb0] sm:$0xff]
      %v277 = vld [vmem:[%s253 + $0xb8] sm:$0x3]
      %v278 = vld [vmem:[%s253 + $0xc0] sm:$0xff]
      %v279 = vld [vmem:[%s253 + $0xc8] sm:$0xff]
      %v280 = vld [vmem:[%s253 + $0xd0] sm:$0x3]
      %v281 = vld [vmem:[%s253 + $0xd8] sm:$0xff]
      %v282 = vld [vmem:[%s253 + $0xe0] sm:$0xff]
      %v283 = vld [vmem:[%s253 + $0xe8] sm:$0x3]
      %v284 = vstv %s249
      %v285 = vadd.s32 %v284, 1
      %v286 = vadd.s32 %v284, 2
      %v287 = vadd.s32 %v284, 3
      %v288 = vadd.s32 %v284, 4
      %v289 = vadd.s32 %v284, 5
      %v290 = vadd.s32 %v284, 6
      %v291 = vadd.s32 %v284, 7
      %v292 = vadd.s32 %v284, 8
      %v293 = vadd.s32 %v284, 9
      %v294 = vlaneseq
      %v295 = vshrl.u32 %v294, 7
      %v296 = vadd.s32 %v295, 8
      %v297 = vadd.s32 %v295, 16
      %vm298 = vcmp.ge.s32.totalorder %v284, 1
      %vm299 = vcmp.ge.s32.totalorder %v285, 1
      %vm300 = vcmp.ge.s32.totalorder %v286, 1
      %vm301 = vcmp.ge.s32.totalorder %v287, 1
      %vm302 = vcmp.ge.s32.totalorder %v288, 1
      %vm303 = vcmp.ge.s32.totalorder %v289, 1
      %vm304 = vcmp.ge.s32.totalorder %v290, 1
      %vm305 = vcmp.ge.s32.totalorder %v291, 1
      %vm306 = vcmp.ge.s32.totalorder %v292, 1
      %vm307 = vcmp.ge.s32.totalorder %v293, 1
      %vm308 = vcmp.le.s32.totalorder %v284, 16
      %vm309 = vcmp.le.s32.totalorder %v285, 16
      %vm310 = vcmp.le.s32.totalorder %v286, 16
      %vm311 = vcmp.le.s32.totalorder %v287, 16
      %vm312 = vcmp.le.s32.totalorder %v288, 16
      %vm313 = vcmp.le.s32.totalorder %v289, 16
      %vm314 = vcmp.le.s32.totalorder %v290, 16
      %vm315 = vcmp.le.s32.totalorder %v291, 16
      %vm316 = vcmp.le.s32.totalorder %v292, 16
      %vm317 = vcmp.le.s32.totalorder %v293, 16
      %vm318 = vmand %vm298, %vm308
      %vm319 = vmand %vm299, %vm309
      %vm320 = vmand %vm300, %vm310
      %vm321 = vmand %vm301, %vm311
      %vm322 = vmand %vm302, %vm312
      %vm323 = vmand %vm303, %vm313
      %vm324 = vmand %vm304, %vm314
      %vm325 = vmand %vm305, %vm315
      %vm326 = vmand %vm306, %vm316
      %vm327 = vmand %vm307, %vm317
      %vm328 = vcmp.ge.s32.totalorder %v295, 1
      %vm329 = vcmp.ge.s32.totalorder %v296, 1
      %vm330 = vcmp.ge.s32.totalorder %v297, 1
      %vm331 = vmand %vm318, %vm328
      %vm332 = vmand %vm318, %vm329
      %vm333 = vmand %vm318, %vm330
      %vm334 = vmand %vm319, %vm328
      %vm335 = vmand %vm319, %vm329
      %vm336 = vmand %vm319, %vm330
      %vm337 = vmand %vm320, %vm328
      %vm338 = vmand %vm320, %vm329
      %vm339 = vmand %vm320, %vm330
      %vm340 = vmand %vm321, %vm328
      %vm341 = vmand %vm321, %vm329
      %vm342 = vmand %vm321, %vm330
      %vm343 = vmand %vm322, %vm328
      %vm344 = vmand %vm322, %vm329
      %vm345 = vmand %vm322, %vm330
      %vm346 = vmand %vm323, %vm328
      %vm347 = vmand %vm323, %vm329
      %vm348 = vmand %vm323, %vm330
      %vm349 = vmand %vm324, %vm328
      %vm350 = vmand %vm324, %vm329
      %vm351 = vmand %vm324, %vm330
      %vm352 = vmand %vm325, %vm328
      %vm353 = vmand %vm325, %vm329
      %vm354 = vmand %vm325, %vm330
      %vm355 = vmand %vm326, %vm328
      %vm356 = vmand %vm326, %vm329
      %vm357 = vmand %vm326, %vm330
      %vm358 = vmand %vm327, %vm328
      %vm359 = vmand %vm327, %vm329
      %vm360 = vmand %vm327, %vm330
      %vm361 = vcmp.le.s32.totalorder %v295, 16
      %vm362 = vcmp.le.s32.totalorder %v296, 16
      %vm363 = vcmp.le.s32.totalorder %v297, 16
      %vm364 = vmand %vm331, %vm361
      %vm365 = vmand %vm332, %vm362
      %vm366 = vmand %vm333, %vm363
      %vm367 = vmand %vm334, %vm361
      %vm368 = vmand %vm335, %vm362
      %vm369 = vmand %vm336, %vm363
      %vm370 = vmand %vm337, %vm361
      %vm371 = vmand %vm338, %vm362
      %vm372 = vmand %vm339, %vm363
      %vm373 = vmand %vm340, %vm361
      %vm374 = vmand %vm341, %vm362
      %vm375 = vmand %vm342, %vm363
      %vm376 = vmand %vm343, %vm361
      %vm377 = vmand %vm344, %vm362
      %vm378 = vmand %vm345, %vm363
      %vm379 = vmand %vm346, %vm361
      %vm380 = vmand %vm347, %vm362
      %vm381 = vmand %vm348, %vm363
      %vm382 = vmand %vm349, %vm361
      %vm383 = vmand %vm350, %vm362
      %vm384 = vmand %vm351, %vm363
      %vm385 = vmand %vm352, %vm361
      %vm386 = vmand %vm353, %vm362
      %vm387 = vmand %vm354, %vm363
      %vm388 = vmand %vm355, %vm361
      %vm389 = vmand %vm356, %vm362
      %vm390 = vmand %vm357, %vm363
      %vm391 = vmand %vm358, %vm361
      %vm392 = vmand %vm359, %vm362
      %vm393 = vmand %vm360, %vm363
      %v395 = vperm.slane %v250, 0
      %v397 = vmul.f32 %v254, %v395
      %v398 = vmul.f32 %v255, %v395
      %v399 = vmul.f32 %v256, %v395
      %v400 = vmul.f32 %v257, %v395
      %v401 = vmul.f32 %v258, %v395
      %v402 = vmul.f32 %v259, %v395
      %v403 = vmul.f32 %v260, %v395
      %v404 = vmul.f32 %v261, %v395
      %v405 = vmul.f32 %v262, %v395
      %v406 = vmul.f32 %v263, %v395
      %v407 = vmul.f32 %v264, %v395
      %v408 = vmul.f32 %v265, %v395
      %v409 = vmul.f32 %v266, %v395
      %v410 = vmul.f32 %v267, %v395
      %v411 = vmul.f32 %v268, %v395
      %v412 = vmul.f32 %v269, %v395
      %v413 = vmul.f32 %v270, %v395
      %v414 = vmul.f32 %v271, %v395
      %v415 = vmul.f32 %v272, %v395
      %v416 = vmul.f32 %v273, %v395
      %v417 = vmul.f32 %v274, %v395
      %v418 = vmul.f32 %v275, %v395
      %v419 = vmul.f32 %v276, %v395
      %v420 = vmul.f32 %v277, %v395
      %v421 = vmul.f32 %v278, %v395
      %v422 = vmul.f32 %v279, %v395
      %v423 = vmul.f32 %v280, %v395
      %v424 = vmul.f32 %v281, %v395
      %v425 = vmul.f32 %v282, %v395
      %v426 = vmul.f32 %v283, %v395
      %v428 = vperm.slane %v251, 0
      %v430 = vadd.f32 %v397, %v428
      %v431 = vadd.f32 %v398, %v428
      %v432 = vadd.f32 %v399, %v428
      %v433 = vadd.f32 %v400, %v428
      %v434 = vadd.f32 %v401, %v428
      %v435 = vadd.f32 %v402, %v428
      %v436 = vadd.f32 %v403, %v428
      %v437 = vadd.f32 %v404, %v428
      %v438 = vadd.f32 %v405, %v428
      %v439 = vadd.f32 %v406, %v428
      %v440 = vadd.f32 %v407, %v428
      %v441 = vadd.f32 %v408, %v428
      %v442 = vadd.f32 %v409, %v428
      %v443 = vadd.f32 %v410, %v428
      %v444 = vadd.f32 %v411, %v428
      %v445 = vadd.f32 %v412, %v428
      %v446 = vadd.f32 %v413, %v428
      %v447 = vadd.f32 %v414, %v428
      %v448 = vadd.f32 %v415, %v428
      %v449 = vadd.f32 %v416, %v428
      %v450 = vadd.f32 %v417, %v428
      %v451 = vadd.f32 %v418, %v428
      %v452 = vadd.f32 %v419, %v428
      %v453 = vadd.f32 %v420, %v428
      %v454 = vadd.f32 %v421, %v428
      %v455 = vadd.f32 %v422, %v428
      %v456 = vadd.f32 %v423, %v428
      %v457 = vadd.f32 %v424, %v428
      %v458 = vadd.f32 %v425, %v428
      %v459 = vadd.f32 %v426, %v428
      %v460 = vmax.f32 %v430, 0.0
      %v461 = vmax.f32 %v431, 0.0
      %v462 = vmax.f32 %v432, 0.0
      %v463 = vmax.f32 %v433, 0.0
      %v464 = vmax.f32 %v434, 0.0
      %v465 = vmax.f32 %v435, 0.0
      %v466 = vmax.f32 %v436, 0.0
      %v467 = vmax.f32 %v437, 0.0
      %v468 = vmax.f32 %v438, 0.0
      %v469 = vmax.f32 %v439, 0.0
      %v470 = vmax.f32 %v440, 0.0
      %v471 = vmax.f32 %v441, 0.0
      %v472 = vmax.f32 %v442, 0.0
      %v473 = vmax.f32 %v443, 0.0
      %v474 = vmax.f32 %v444, 0.0
      %v475 = vmax.f32 %v445, 0.0
      %v476 = vmax.f32 %v446, 0.0
      %v477 = vmax.f32 %v447, 0.0
      %v478 = vmax.f32 %v448, 0.0
      %v479 = vmax.f32 %v449, 0.0
      %v480 = vmax.f32 %v450, 0.0
      %v481 = vmax.f32 %v451, 0.0
      %v482 = vmax.f32 %v452, 0.0
      %v483 = vmax.f32 %v453, 0.0
      %v484 = vmax.f32 %v454, 0.0
      %v485 = vmax.f32 %v455, 0.0
      %v486 = vmax.f32 %v456, 0.0
      %v487 = vmax.f32 %v457, 0.0
      %v488 = vmax.f32 %v458, 0.0
      %v489 = vmax.f32 %v459, 0.0
      %v490 = vsel %vm364, 1, 0
      %v491 = vsel %vm365, 1, 0
      %v492 = vsel %vm366, 1, 0
      %v493 = vsel %vm367, 1, 0
      %v494 = vsel %vm368, 1, 0
      %v495 = vsel %vm369, 1, 0
      %v496 = vsel %vm370, 1, 0
      %v497 = vsel %vm371, 1, 0
      %v498 = vsel %vm372, 1, 0
      %v499 = vsel %vm373, 1, 0
      %v500 = vsel %vm374, 1, 0
      %v501 = vsel %vm375, 1, 0
      %v502 = vsel %vm376, 1, 0
      %v503 = vsel %vm377, 1, 0
      %v504 = vsel %vm378, 1, 0
      %v505 = vsel %vm379, 1, 0
      %v506 = vsel %vm380, 1, 0
      %v507 = vsel %vm381, 1, 0
      %v508 = vsel %vm382, 1, 0
      %v509 = vsel %vm383, 1, 0
      %v510 = vsel %vm384, 1, 0
      %v511 = vsel %vm385, 1, 0
      %v512 = vsel %vm386, 1, 0
      %v513 = vsel %vm387, 1, 0
      %v514 = vsel %vm388, 1, 0
      %v515 = vsel %vm389, 1, 0
      %v516 = vsel %vm390, 1, 0
      %v517 = vsel %vm391, 1, 0
      %v518 = vsel %vm392, 1, 0
      %v519 = vsel %vm393, 1, 0
      %vm520 = vcmp.eq.s32.totalorder %v490, 1
      %vm521 = vcmp.eq.s32.totalorder %v491, 1
      %vm522 = vcmp.eq.s32.totalorder %v492, 1
      %vm523 = vcmp.eq.s32.totalorder %v493, 1
      %vm524 = vcmp.eq.s32.totalorder %v494, 1
      %vm525 = vcmp.eq.s32.totalorder %v495, 1
      %vm526 = vcmp.eq.s32.totalorder %v496, 1
      %vm527 = vcmp.eq.s32.totalorder %v497, 1
      %vm528 = vcmp.eq.s32.totalorder %v498, 1
      %vm529 = vcmp.eq.s32.totalorder %v499, 1
      %vm530 = vcmp.eq.s32.totalorder %v500, 1
      %vm531 = vcmp.eq.s32.totalorder %v501, 1
      %vm532 = vcmp.eq.s32.totalorder %v502, 1
      %vm533 = vcmp.eq.s32.totalorder %v503, 1
      %vm534 = vcmp.eq.s32.totalorder %v504, 1
      %vm535 = vcmp.eq.s32.totalorder %v505, 1
      %vm536 = vcmp.eq.s32.totalorder %v506, 1
      %vm537 = vcmp.eq.s32.totalorder %v507, 1
      %vm538 = vcmp.eq.s32.totalorder %v508, 1
      %vm539 = vcmp.eq.s32.totalorder %v509, 1
      %vm540 = vcmp.eq.s32.totalorder %v510, 1
      %vm541 = vcmp.eq.s32.totalorder %v511, 1
      %vm542 = vcmp.eq.s32.totalorder %v512, 1
      %vm543 = vcmp.eq.s32.totalorder %v513, 1
      %vm544 = vcmp.eq.s32.totalorder %v514, 1
      %vm545 = vcmp.eq.s32.totalorder %v515, 1
      %vm546 = vcmp.eq.s32.totalorder %v516, 1
      %vm547 = vcmp.eq.s32.totalorder %v517, 1
      %vm548 = vcmp.eq.s32.totalorder %v518, 1
      %vm549 = vcmp.eq.s32.totalorder %v519, 1
      %v550 = vsel %vm520, %v460, 0.0
      %v551 = vsel %vm521, %v461, 0.0
      %v552 = vsel %vm522, %v462, 0.0
      %v553 = vsel %vm523, %v463, 0.0
      %v554 = vsel %vm524, %v464, 0.0
      %v555 = vsel %vm525, %v465, 0.0
      %v556 = vsel %vm526, %v466, 0.0
      %v557 = vsel %vm527, %v467, 0.0
      %v558 = vsel %vm528, %v468, 0.0
      %v559 = vsel %vm529, %v469, 0.0
      %v560 = vsel %vm530, %v470, 0.0
      %v561 = vsel %vm531, %v471, 0.0
      %v562 = vsel %vm532, %v472, 0.0
      %v563 = vsel %vm533, %v473, 0.0
      %v564 = vsel %vm534, %v474, 0.0
      %v565 = vsel %vm535, %v475, 0.0
      %v566 = vsel %vm536, %v476, 0.0
      %v567 = vsel %vm537, %v477, 0.0
      %v568 = vsel %vm538, %v478, 0.0
      %v569 = vsel %vm539, %v479, 0.0
      %v570 = vsel %vm540, %v480, 0.0
      %v571 = vsel %vm541, %v481, 0.0
      %v572 = vsel %vm542, %v482, 0.0
      %v573 = vsel %vm543, %v483, 0.0
      %v574 = vsel %vm544, %v484, 0.0
      %v575 = vsel %vm545, %v485, 0.0
      %v576 = vsel %vm546, %v486, 0.0
      %v577 = vsel %vm547, %v487, 0.0
      %v578 = vsel %vm548, %v488, 0.0
      %v579 = vsel %vm549, %v489, 0.0
      %vm580 = vcmask 31744
      %581 = vst.msk [vmem:[#allocation2] sm:$0xff] %vm580, %v550
      %582 = vst.msk [vmem:[#allocation2 + $0x8] sm:$0xff] %vm580, %v551
      %vm583 = vcmask 25600
      %584 = vst.msk [vmem:[#allocation2 + $0x10] sm:$0x3] %vm583, %v552
      %585 = vst.msk [vmem:[#allocation2 + $0x18] sm:$0xff] %vm580, %v553
      %586 = vst.msk [vmem:[#allocation2 + $0x20] sm:$0xff] %vm580, %v554
      %587 = vst.msk [vmem:[#allocation2 + $0x28] sm:$0x3] %vm583, %v555
      %588 = vst.msk [vmem:[#allocation2 + $0x30] sm:$0xff] %vm580, %v556
      %589 = vst.msk [vmem:[#allocation2 + $0x38] sm:$0xff] %vm580, %v557
      %590 = vst.msk [vmem:[#allocation2 + $0x40] sm:$0x3] %vm583, %v558
      %591 = vst.msk [vmem:[#allocation2 + $0x48] sm:$0xff] %vm580, %v559
      %592 = vst.msk [vmem:[#allocation2 + $0x50] sm:$0xff] %vm580, %v560
      %593 = vst.msk [vmem:[#allocation2 + $0x58] sm:$0x3] %vm583, %v561
      %594 = vst.msk [vmem:[#allocation2 + $0x60] sm:$0xff] %vm580, %v562
      %595 = vst.msk [vmem:[#allocation2 + $0x68] sm:$0xff] %vm580, %v563
      %596 = vst.msk [vmem:[#allocation2 + $0x70] sm:$0x3] %vm583, %v564
      %597 = vst.msk [vmem:[#allocation2 + $0x78] sm:$0xff] %vm580, %v565
      %598 = vst.msk [vmem:[#allocation2 + $0x80] sm:$0xff] %vm580, %v566
      %599 = vst.msk [vmem:[#allocation2 + $0x88] sm:$0x3] %vm583, %v567
      %600 = vst.msk [vmem:[#allocation2 + $0x90] sm:$0xff] %vm580, %v568
      %601 = vst.msk [vmem:[#allocation2 + $0x98] sm:$0xff] %vm580, %v569
      %602 = vst.msk [vmem:[#allocation2 + $0xa0] sm:$0x3] %vm583, %v570
      %603 = vst.msk [vmem:[#allocation2 + $0xa8] sm:$0xff] %vm580, %v571
      %604 = vst.msk [vmem:[#allocation2 + $0xb0] sm:$0xff] %vm580, %v572
      %605 = vst.msk [vmem:[#allocation2 + $0xb8] sm:$0x3] %vm583, %v573
      %606 = vst.msk [vmem:[#allocation2 + $0xc0] sm:$0xff] %vm580, %v574
      %607 = vst.msk [vmem:[#allocation2 + $0xc8] sm:$0xff] %vm580, %v575
      %608 = vst.msk [vmem:[#allocation2 + $0xd0] sm:$0x3] %vm583, %v576
      %609 = vst.msk [vmem:[#allocation2 + $0xd8] sm:$0xff] %vm580, %v577
      %610 = vst.msk [vmem:[#allocation2 + $0xe0] sm:$0xff] %vm580, %v578
      %611 = vst.msk [vmem:[#allocation2 + $0xe8] sm:$0x3] %vm583, %v579
      %v612 = vld [vmem:[#allocation2] sm:$0xff]
      %v613 = vld [vmem:[#allocation2 + $0x8] sm:$0xff]
      %v614 = vld [vmem:[#allocation2 + $0x18] sm:$0xff]
      %v615 = vld [vmem:[#allocation2 + $0x20] sm:$0xff]
      %v616 = vld [vmem:[#allocation2 + $0x30] sm:$0xff]
      %v617 = vld [vmem:[#allocation2 + $0x38] sm:$0xff]
      %v618 = vld [vmem:[#allocation2 + $0x48] sm:$0xff]
      %v619 = vld [vmem:[#allocation2 + $0x50] sm:$0xff]
      %v620 = vld [vmem:[#allocation2 + $0x60] sm:$0xff]
      %v621 = vld [vmem:[#allocation2 + $0x68] sm:$0xff]
      %v622 = vld [vmem:[#allocation2 + $0x78] sm:$0xff]
      %v623 = vld [vmem:[#allocation2 + $0x80] sm:$0xff]
      %v624 = vld [vmem:[#allocation2 + $0x90] sm:$0xff]
      %v625 = vld [vmem:[#allocation2 + $0x98] sm:$0xff]
      %v626 = vld [vmem:[#allocation2 + $0xa8] sm:$0xff]
      %v627 = vld [vmem:[#allocation2 + $0xb0] sm:$0xff]
      %v628 = vpack.c.bf16 %v613, %v612
      %v629 = vpack.c.bf16 %v615, %v614
      %v630 = vpack.c.bf16 %v617, %v616
      %v631 = vpack.c.bf16 %v619, %v618
      %v632 = vpack.c.bf16 %v621, %v620
      %v633 = vpack.c.bf16 %v623, %v622
      %v634 = vpack.c.bf16 %v625, %v624
      %v635 = vpack.c.bf16 %v627, %v626
      %v636 = vld [vmem:[%s3] sm:$0x3]
      %v637 = vld [vmem:[#allocation2 + $0x1] sm:$0xff]
      %v638 = vld [vmem:[#allocation2 + $0x9] sm:$0xff]
      %v639 = vld [vmem:[#allocation2 + $0x19] sm:$0xff]
      %v640 = vld [vmem:[#allocation2 + $0x21] sm:$0xff]
      %v641 = vld [vmem:[#allocation2 + $0x31] sm:$0xff]
      %v642 = vld [vmem:[#allocation2 + $0x39] sm:$0xff]
      %v643 = vld [vmem:[#allocation2 + $0x49] sm:$0xff]
      %v644 = vld [vmem:[#allocation2 + $0x51] sm:$0xff]
      %v645 = vld [vmem:[#allocation2 + $0x61] sm:$0xff]
      %v646 = vld [vmem:[#allocation2 + $0x69] sm:$0xff]
      %v647 = vld [vmem:[#allocation2 + $0x79] sm:$0xff]
      %v648 = vld [vmem:[#allocation2 + $0x81] sm:$0xff]
      %v649 = vld [vmem:[#allocation2 + $0x91] sm:$0xff]
      %v650 = vld [vmem:[#allocation2 + $0x99] sm:$0xff]
      %v651 = vld [vmem:[#allocation2 + $0xa9] sm:$0xff]
      %v652 = vld [vmem:[#allocation2 + $0xb1] sm:$0xff]
      %v653 = vpack.c.bf16 %v638, %v637
      %v654 = vpack.c.bf16 %v640, %v639
      %v655 = vpack.c.bf16 %v642, %v641
      %v656 = vpack.c.bf16 %v644, %v643
      %v657 = vpack.c.bf16 %v646, %v645
      %v658 = vpack.c.bf16 %v648, %v647
      %v659 = vpack.c.bf16 %v650, %v649
      %v660 = vpack.c.bf16 %v652, %v651
      %s661 = scalar_lea.vmem %s3, 2
      %v662 = vld [vmem:[%s661] sm:$0x3]
      %v664 = vsel %vm580, %v653, 0
      %v667 = vsel %vm580, %v654, 0
      %v670 = vsel %vm580, %v655, 0
      %v673 = vsel %vm580, %v656, 0
      %v676 = vsel %vm580, %v657, 0
      %v679 = vsel %vm580, %v658, 0
      %v682 = vsel %vm580, %v659, 0
      %v685 = vsel %vm580, %v660, 0
      %vm687 = vcmask 1041408
      %v689 = vsel %vm687, %v662, 0
      %691 = vmatpush.bf16.msra.mxu0 0
      %692 = vmatpush.bf16.msra.mxu0 0
      %693 = vmatpush.bf16.msra.mxu0 0
      %694 = vmatpush.bf16.msra.mxu0 0
      %695 = vmatpush.bf16.msra.mxu0 0
      %696 = vmatpush.bf16.msra.mxu0 0
      %697 = vmatpush.bf16.msra.mxu0 0
      %698 = vmatpush.bf16.msra.mxu0 %v689
      %699 = vmatmul.bf16.gmra.mxu0 %v664
      %v700 = vpop.f32.mrf.mxu0
      %v701 = vadd.f32 0.0, %v700
      %v702 = vpop.f32.mrf.mxu0
      %v703 = vadd.f32 0.0, %v702
      %704 = vmatmul.bf16.gmra.mxu0 %v667
      %v705 = vpop.f32.mrf.mxu0
      %v706 = vadd.f32 0.0, %v705
      %v707 = vpop.f32.mrf.mxu0
      %v708 = vadd.f32 0.0, %v707
      %709 = vmatmul.bf16.gmra.mxu0 %v670
      %v710 = vpop.f32.mrf.mxu0
      %v711 = vadd.f32 0.0, %v710
      %v712 = vpop.f32.mrf.mxu0
      %v713 = vadd.f32 0.0, %v712
      %714 = vmatmul.bf16.gmra.mxu0 %v673
      %v715 = vpop.f32.mrf.mxu0
      %v716 = vadd.f32 0.0, %v715
      %v717 = vpop.f32.mrf.mxu0
      %v718 = vadd.f32 0.0, %v717
      %719 = vmatmul.bf16.gmra.mxu0 %v676
      %v720 = vpop.f32.mrf.mxu0
      %v721 = vadd.f32 0.0, %v720
      %v722 = vpop.f32.mrf.mxu0
      %v723 = vadd.f32 0.0, %v722
      %724 = vmatmul.bf16.gmra.mxu0 %v679
      %v725 = vpop.f32.mrf.mxu0
      %v726 = vadd.f32 0.0, %v725
      %v727 = vpop.f32.mrf.mxu0
      %v728 = vadd.f32 0.0, %v727
      %729 = vmatmul.bf16.gmra.mxu0 %v682
      %v730 = vpop.f32.mrf.mxu0
      %v731 = vadd.f32 0.0, %v730
      %v732 = vpop.f32.mrf.mxu0
      %v733 = vadd.f32 0.0, %v732
      %734 = vmatmul.bf16.gmra.mxu0 %v685
      %v735 = vpop.f32.mrf.mxu0
      %v736 = vadd.f32 0.0, %v735
      %v737 = vpop.f32.mrf.mxu0
      %v738 = vadd.f32 0.0, %v737
      %739 = vdwg.mxu0
      %v741 = vsel %vm580, %v628, 0
      %v744 = vsel %vm580, %v629, 0
      %v747 = vsel %vm580, %v630, 0
      %v750 = vsel %vm580, %v631, 0
      %v753 = vsel %vm580, %v632, 0
      %v756 = vsel %vm580, %v633, 0
      %v759 = vsel %vm580, %v634, 0
      %v762 = vsel %vm580, %v635, 0
      %v765 = vsel %vm687, %v636, 0
      %767 = vmatpush.bf16.msra.mxu0 0
      %768 = vmatpush.bf16.msra.mxu0 0
      %769 = vmatpush.bf16.msra.mxu0 0
      %770 = vmatpush.bf16.msra.mxu0 0
      %771 = vmatpush.bf16.msra.mxu0 0
      %772 = vmatpush.bf16.msra.mxu0 0
      %773 = vmatpush.bf16.msra.mxu0 0
      %774 = vmatpush.bf16.msra.mxu0 %v765
      %775 = vmatmul.bf16.gmra.mxu0 %v741
      %v776 = vpop.f32.mrf.mxu0
      %v777 = vadd.f32 %v701, %v776
      %v778 = vpop.f32.mrf.mxu0
      %v779 = vadd.f32 %v703, %v778
      %780 = vmatmul.bf16.gmra.mxu0 %v744
      %v781 = vpop.f32.mrf.mxu0
      %v782 = vadd.f32 %v706, %v781
      %v783 = vpop.f32.mrf.mxu0
      %v784 = vadd.f32 %v708, %v783
      %785 = vmatmul.bf16.gmra.mxu0 %v747
      %v786 = vpop.f32.mrf.mxu0
      %v787 = vadd.f32 %v711, %v786
      %v788 = vpop.f32.mrf.mxu0
      %v789 = vadd.f32 %v713, %v788
      %790 = vmatmul.bf16.gmra.mxu0 %v750
      %v791 = vpop.f32.mrf.mxu0
      %v792 = vadd.f32 %v716, %v791
      %v793 = vpop.f32.mrf.mxu0
      %v794 = vadd.f32 %v718, %v793
      %795 = vmatmul.bf16.gmra.mxu0 %v753
      %v796 = vpop.f32.mrf.mxu0
      %v797 = vadd.f32 %v721, %v796
      %v798 = vpop.f32.mrf.mxu0
      %v799 = vadd.f32 %v723, %v798
      %800 = vmatmul.bf16.gmra.mxu0 %v756
      %v801 = vpop.f32.mrf.mxu0
      %v802 = vadd.f32 %v726, %v801
      %v803 = vpop.f32.mrf.mxu0
      %v804 = vadd.f32 %v728, %v803
      %805 = vmatmul.bf16.gmra.mxu0 %v759
      %v806 = vpop.f32.mrf.mxu0
      %v807 = vadd.f32 %v731, %v806
      %v808 = vpop.f32.mrf.mxu0
      %v809 = vadd.f32 %v733, %v808
      %810 = vmatmul.bf16.gmra.mxu0 %v762
      %v811 = vpop.f32.mrf.mxu0
      %v812 = vadd.f32 %v736, %v811
      %v813 = vpop.f32.mrf.mxu0
      %v814 = vadd.f32 %v738, %v813
      %815 = vdwg.mxu0
      %v816 = vld [vmem:[#allocation2 + $0x2] sm:$0xff]
      %v817 = vld [vmem:[#allocation2 + $0xa] sm:$0xff]
      %v818 = vld [vmem:[#allocation2 + $0x1a] sm:$0xff]
      %v819 = vld [vmem:[#allocation2 + $0x22] sm:$0xff]
      %v820 = vld [vmem:[#allocation2 + $0x32] sm:$0xff]
      %v821 = vld [vmem:[#allocation2 + $0x3a] sm:$0xff]
      %v822 = vld [vmem:[#allocation2 + $0x4a] sm:$0xff]
      %v823 = vld [vmem:[#allocation2 + $0x52] sm:$0xff]
      %v824 = vld [vmem:[#allocation2 + $0x62] sm:$0xff]
      %v825 = vld [vmem:[#allocation2 + $0x6a] sm:$0xff]
      %v826 = vld [vmem:[#allocation2 + $0x7a] sm:$0xff]
      %v827 = vld [vmem:[#allocation2 + $0x82] sm:$0xff]
      %v828 = vld [vmem:[#allocation2 + $0x92] sm:$0xff]
      %v829 = vld [vmem:[#allocation2 + $0x9a] sm:$0xff]
      %v830 = vld [vmem:[#allocation2 + $0xaa] sm:$0xff]
      %v831 = vld [vmem:[#allocation2 + $0xb2] sm:$0xff]
      %v832 = vpack.c.bf16 %v817, %v816
      %v833 = vpack.c.bf16 %v819, %v818
      %v834 = vpack.c.bf16 %v821, %v820
      %v835 = vpack.c.bf16 %v823, %v822
      %v836 = vpack.c.bf16 %v825, %v824
      %v837 = vpack.c.bf16 %v827, %v826
      %v838 = vpack.c.bf16 %v829, %v828
      %v839 = vpack.c.bf16 %v831, %v830
      %s840 = scalar_lea.vmem %s3, 4
      %v841 = vld [vmem:[%s840] sm:$0x3]
      %v843 = vsel %vm580, %v832, 0
      %v846 = vsel %vm580, %v833, 0
      %v849 = vsel %vm580, %v834, 0
      %v852 = vsel %vm580, %v835, 0
      %v855 = vsel %vm580, %v836, 0
      %v858 = vsel %vm580, %v837, 0
      %v861 = vsel %vm580, %v838, 0
      %v864 = vsel %vm580, %v839, 0
      %v867 = vsel %vm687, %v841, 0
      %869 = vmatpush.bf16.msra.mxu0 0
      %870 = vmatpush.bf16.msra.mxu0 0
      %871 = vmatpush.bf16.msra.mxu0 0
      %872 = vmatpush.bf16.msra.mxu0 0
      %873 = vmatpush.bf16.msra.mxu0 0
      %874 = vmatpush.bf16.msra.mxu0 0
      %875 = vmatpush.bf16.msra.mxu0 0
      %876 = vmatpush.bf16.msra.mxu0 %v867
      %877 = vmatmul.bf16.gmra.mxu0 %v843
      %v878 = vpop.f32.mrf.mxu0
      %v879 = vadd.f32 0.0, %v878
      %v880 = vpop.f32.mrf.mxu0
      %v881 = vadd.f32 0.0, %v880
      %882 = vmatmul.bf16.gmra.mxu0 %v846
      %v883 = vpop.f32.mrf.mxu0
      %v884 = vadd.f32 0.0, %v883
      %v885 = vpop.f32.mrf.mxu0
      %v886 = vadd.f32 0.0, %v885
      %887 = vmatmul.bf16.gmra.mxu0 %v849
      %v888 = vpop.f32.mrf.mxu0
      %v889 = vadd.f32 0.0, %v888
      %v890 = vpop.f32.mrf.mxu0
      %v891 = vadd.f32 0.0, %v890
      %892 = vmatmul.bf16.gmra.mxu0 %v852
      %v893 = vpop.f32.mrf.mxu0
      %v894 = vadd.f32 0.0, %v893
      %v895 = vpop.f32.mrf.mxu0
      %v896 = vadd.f32 0.0, %v895
      %897 = vmatmul.bf16.gmra.mxu0 %v855
      %v898 = vpop.f32.mrf.mxu0
      %v899 = vadd.f32 0.0, %v898
      %v900 = vpop.f32.mrf.mxu0
      %v901 = vadd.f32 0.0, %v900
      %902 = vmatmul.bf16.gmra.mxu0 %v858
      %v903 = vpop.f32.mrf.mxu0
      %v904 = vadd.f32 0.0, %v903
      %v905 = vpop.f32.mrf.mxu0
      %v906 = vadd.f32 0.0, %v905
      %907 = vmatmul.bf16.gmra.mxu0 %v861
      %v908 = vpop.f32.mrf.mxu0
      %v909 = vadd.f32 0.0, %v908
      %v910 = vpop.f32.mrf.mxu0
      %v911 = vadd.f32 0.0, %v910
      %912 = vmatmul.bf16.gmra.mxu0 %v864
      %v913 = vpop.f32.mrf.mxu0
      %v914 = vadd.f32 0.0, %v913
      %v915 = vpop.f32.mrf.mxu0
      %v916 = vadd.f32 0.0, %v915
      %917 = vdwg.mxu0
      %v918 = vadd.f32 %v777, %v879
      %v919 = vadd.f32 %v779, %v881
      %v920 = vadd.f32 %v782, %v884
      %v921 = vadd.f32 %v784, %v886
      %v922 = vadd.f32 %v787, %v889
      %v923 = vadd.f32 %v789, %v891
      %v924 = vadd.f32 %v792, %v894
      %v925 = vadd.f32 %v794, %v896
      %v926 = vadd.f32 %v797, %v899
      %v927 = vadd.f32 %v799, %v901
      %v928 = vadd.f32 %v802, %v904
      %v929 = vadd.f32 %v804, %v906
      %v930 = vadd.f32 %v807, %v909
      %v931 = vadd.f32 %v809, %v911
      %v932 = vadd.f32 %v812, %v914
      %v933 = vadd.f32 %v814, %v916
      %s934 = scalar_lea.vmem [#allocation2], 24
      %v935 = vld [vmem:[%s934] sm:$0xff]
      %v936 = vld [vmem:[%s934 + $0x8] sm:$0xff]
      %v937 = vld [vmem:[%s934 + $0x18] sm:$0xff]
      %v938 = vld [vmem:[%s934 + $0x20] sm:$0xff]
      %v939 = vld [vmem:[%s934 + $0x30] sm:$0xff]
      %v940 = vld [vmem:[%s934 + $0x38] sm:$0xff]
      %v941 = vld [vmem:[%s934 + $0x48] sm:$0xff]
      %v942 = vld [vmem:[%s934 + $0x50] sm:$0xff]
      %v943 = vld [vmem:[%s934 + $0x60] sm:$0xff]
      %v944 = vld [vmem:[%s934 + $0x68] sm:$0xff]
      %v945 = vld [vmem:[%s934 + $0x78] sm:$0xff]
      %v946 = vld [vmem:[%s934 + $0x80] sm:$0xff]
      %v947 = vld [vmem:[%s934 + $0x90] sm:$0xff]
      %v948 = vld [vmem:[%s934 + $0x98] sm:$0xff]
      %v949 = vld [vmem:[%s934 + $0xa8] sm:$0xff]
      %v950 = vld [vmem:[%s934 + $0xb0] sm:$0xff]
      %v951 = vpack.c.bf16 %v936, %v935
      %v952 = vpack.c.bf16 %v938, %v937
      %v953 = vpack.c.bf16 %v940, %v939
      %v954 = vpack.c.bf16 %v942, %v941
      %v955 = vpack.c.bf16 %v944, %v943
      %v956 = vpack.c.bf16 %v946, %v945
      %v957 = vpack.c.bf16 %v948, %v947
      %v958 = vpack.c.bf16 %v950, %v949
      %s959 = scalar_lea.vmem %s3, 6
      %v960 = vld [vmem:[%s959] sm:$0x3]
      %v962 = vsel %vm580, %v951, 0
      %v965 = vsel %vm580, %v952, 0
      %v968 = vsel %vm580, %v953, 0
      %v971 = vsel %vm580, %v954, 0
      %v974 = vsel %vm580, %v955, 0
      %v977 = vsel %vm580, %v956, 0
      %v980 = vsel %vm580, %v957, 0
      %v983 = vsel %vm580, %v958, 0
      %v986 = vsel %vm687, %v960, 0
      %988 = vmatpush.bf16.msra.mxu0 0
      %989 = vmatpush.bf16.msra.mxu0 0
      %990 = vmatpush.bf16.msra.mxu0 0
      %991 = vmatpush.bf16.msra.mxu0 0
      %992 = vmatpush.bf16.msra.mxu0 0
      %993 = vmatpush.bf16.msra.mxu0 0
      %994 = vmatpush.bf16.msra.mxu0 0
      %995 = vmatpush.bf16.msra.mxu0 %v986
      %996 = vmatmul.bf16.gmra.mxu0 %v962
      %v997 = vpop.f32.mrf.mxu0
      %v998 = vadd.f32 0.0, %v997
      %v999 = vpop.f32.mrf.mxu0
      %v1000 = vadd.f32 0.0, %v999
      %1001 = vmatmul.bf16.gmra.mxu0 %v965
      %v1002 = vpop.f32.mrf.mxu0
      %v1003 = vadd.f32 0.0, %v1002
      %v1004 = vpop.f32.mrf.mxu0
      %v1005 = vadd.f32 0.0, %v1004
      %1006 = vmatmul.bf16.gmra.mxu0 %v968
      %v1007 = vpop.f32.mrf.mxu0
      %v1008 = vadd.f32 0.0, %v1007
      %v1009 = vpop.f32.mrf.mxu0
      %v1010 = vadd.f32 0.0, %v1009
      %1011 = vmatmul.bf16.gmra.mxu0 %v971
      %v1012 = vpop.f32.mrf.mxu0
      %v1013 = vadd.f32 0.0, %v1012
      %v1014 = vpop.f32.mrf.mxu0
      %v1015 = vadd.f32 0.0, %v1014
      %1016 = vmatmul.bf16.gmra.mxu0 %v974
      %v1017 = vpop.f32.mrf.mxu0
      %v1018 = vadd.f32 0.0, %v1017
      %v1019 = vpop.f32.mrf.mxu0
      %v1020 = vadd.f32 0.0, %v1019
      %1021 = vmatmul.bf16.gmra.mxu0 %v977
      %v1022 = vpop.f32.mrf.mxu0
      %v1023 = vadd.f32 0.0, %v1022
      %v1024 = vpop.f32.mrf.mxu0
      %v1025 = vadd.f32 0.0, %v1024
      %1026 = vmatmul.bf16.gmra.mxu0 %v980
      %v1027 = vpop.f32.mrf.mxu0
      %v1028 = vadd.f32 0.0, %v1027
      %v1029 = vpop.f32.mrf.mxu0
      %v1030 = vadd.f32 0.0, %v1029
      %1031 = vmatmul.bf16.gmra.mxu0 %v983
      %v1032 = vpop.f32.mrf.mxu0
      %v1033 = vadd.f32 0.0, %v1032
      %v1034 = vpop.f32.mrf.mxu0
      %v1035 = vadd.f32 0.0, %v1034
      %1036 = vdwg.mxu0
      %v1037 = vadd.f32 %v918, %v998
      %v1038 = vadd.f32 %v919, %v1000
      %v1039 = vadd.f32 %v920, %v1003
      %v1040 = vadd.f32 %v921, %v1005
      %v1041 = vadd.f32 %v922, %v1008
      %v1042 = vadd.f32 %v923, %v1010
      %v1043 = vadd.f32 %v924, %v1013
      %v1044 = vadd.f32 %v925, %v1015
      %v1045 = vadd.f32 %v926, %v1018
      %v1046 = vadd.f32 %v927, %v1020
      %v1047 = vadd.f32 %v928, %v1023
      %v1048 = vadd.f32 %v929, %v1025
      %v1049 = vadd.f32 %v930, %v1028
      %v1050 = vadd.f32 %v931, %v1030
      %v1051 = vadd.f32 %v932, %v1033
      %v1052 = vadd.f32 %v933, %v1035
      %v1053 = vld [vmem:[%s934 + $0x1] sm:$0xff]
      %v1054 = vld [vmem:[%s934 + $0x9] sm:$0xff]
      %v1055 = vld [vmem:[%s934 + $0x19] sm:$0xff]
      %v1056 = vld [vmem:[%s934 + $0x21] sm:$0xff]
      %v1057 = vld [vmem:[%s934 + $0x31] sm:$0xff]
      %v1058 = vld [vmem:[%s934 + $0x39] sm:$0xff]
      %v1059 = vld [vmem:[%s934 + $0x49] sm:$0xff]
      %v1060 = vld [vmem:[%s934 + $0x51] sm:$0xff]
      %v1061 = vld [vmem:[%s934 + $0x61] sm:$0xff]
      %v1062 = vld [vmem:[%s934 + $0x69] sm:$0xff]
      %v1063 = vld [vmem:[%s934 + $0x79] sm:$0xff]
      %v1064 = vld [vmem:[%s934 + $0x81] sm:$0xff]
      %v1065 = vld [vmem:[%s934 + $0x91] sm:$0xff]
      %v1066 = vld [vmem:[%s934 + $0x99] sm:$0xff]
      %v1067 = vld [vmem:[%s934 + $0xa9] sm:$0xff]
      %v1068 = vld [vmem:[%s934 + $0xb1] sm:$0xff]
      %v1069 = vpack.c.bf16 %v1054, %v1053
      %v1070 = vpack.c.bf16 %v1056, %v1055
      %v1071 = vpack.c.bf16 %v1058, %v1057
      %v1072 = vpack.c.bf16 %v1060, %v1059
      %v1073 = vpack.c.bf16 %v1062, %v1061
      %v1074 = vpack.c.bf16 %v1064, %v1063
      %v1075 = vpack.c.bf16 %v1066, %v1065
      %v1076 = vpack.c.bf16 %v1068, %v1067
      %s1077 = scalar_lea.vmem %s3, 8
      %v1078 = vld [vmem:[%s1077] sm:$0x3]
      %v1080 = vsel %vm580, %v1069, 0
      %v1083 = vsel %vm580, %v1070, 0
      %v1086 = vsel %vm580, %v1071, 0
      %v1089 = vsel %vm580, %v1072, 0
      %v1092 = vsel %vm580, %v1073, 0
      %v1095 = vsel %vm580, %v1074, 0
      %v1098 = vsel %vm580, %v1075, 0
      %v1101 = vsel %vm580, %v1076, 0
      %v1104 = vsel %vm687, %v1078, 0
      %1106 = vmatpush.bf16.msra.mxu0 0
      %1107 = vmatpush.bf16.msra.mxu0 0
      %1108 = vmatpush.bf16.msra.mxu0 0
      %1109 = vmatpush.bf16.msra.mxu0 0
      %1110 = vmatpush.bf16.msra.mxu0 0
      %1111 = vmatpush.bf16.msra.mxu0 0
      %1112 = vmatpush.bf16.msra.mxu0 0
      %1113 = vmatpush.bf16.msra.mxu0 %v1104
      %1114 = vmatmul.bf16.gmra.mxu0 %v1080
      %v1115 = vpop.f32.mrf.mxu0
      %v1116 = vadd.f32 0.0, %v1115
      %v1117 = vpop.f32.mrf.mxu0
      %v1118 = vadd.f32 0.0, %v1117
      %1119 = vmatmul.bf16.gmra.mxu0 %v1083
      %v1120 = vpop.f32.mrf.mxu0
      %v1121 = vadd.f32 0.0, %v1120
      %v1122 = vpop.f32.mrf.mxu0
      %v1123 = vadd.f32 0.0, %v1122
      %1124 = vmatmul.bf16.gmra.mxu0 %v1086
      %v1125 = vpop.f32.mrf.mxu0
      %v1126 = vadd.f32 0.0, %v1125
      %v1127 = vpop.f32.mrf.mxu0
      %v1128 = vadd.f32 0.0, %v1127
      %1129 = vmatmul.bf16.gmra.mxu0 %v1089
      %v1130 = vpop.f32.mrf.mxu0
      %v1131 = vadd.f32 0.0, %v1130
      %v1132 = vpop.f32.mrf.mxu0
      %v1133 = vadd.f32 0.0, %v1132
      %1134 = vmatmul.bf16.gmra.mxu0 %v1092
      %v1135 = vpop.f32.mrf.mxu0
      %v1136 = vadd.f32 0.0, %v1135
      %v1137 = vpop.f32.mrf.mxu0
      %v1138 = vadd.f32 0.0, %v1137
      %1139 = vmatmul.bf16.gmra.mxu0 %v1095
      %v1140 = vpop.f32.mrf.mxu0
      %v1141 = vadd.f32 0.0, %v1140
      %v1142 = vpop.f32.mrf.mxu0
      %v1143 = vadd.f32 0.0, %v1142
      %1144 = vmatmul.bf16.gmra.mxu0 %v1098
      %v1145 = vpop.f32.mrf.mxu0
      %v1146 = vadd.f32 0.0, %v1145
      %v1147 = vpop.f32.mrf.mxu0
      %v1148 = vadd.f32 0.0, %v1147
      %1149 = vmatmul.bf16.gmra.mxu0 %v1101
      %v1150 = vpop.f32.mrf.mxu0
      %v1151 = vadd.f32 0.0, %v1150
      %v1152 = vpop.f32.mrf.mxu0
      %v1153 = vadd.f32 0.0, %v1152
      %1154 = vdwg.mxu0
      %v1155 = vadd.f32 %v1037, %v1116
      %v1156 = vadd.f32 %v1038, %v1118
      %v1157 = vadd.f32 %v1039, %v1121
      %v1158 = vadd.f32 %v1040, %v1123
      %v1159 = vadd.f32 %v1041, %v1126
      %v1160 = vadd.f32 %v1042, %v1128
      %v1161 = vadd.f32 %v1043, %v1131
      %v1162 = vadd.f32 %v1044, %v1133
      %v1163 = vadd.f32 %v1045, %v1136
      %v1164 = vadd.f32 %v1046, %v1138
      %v1165 = vadd.f32 %v1047, %v1141
      %v1166 = vadd.f32 %v1048, %v1143
      %v1167 = vadd.f32 %v1049, %v1146
      %v1168 = vadd.f32 %v1050, %v1148
      %v1169 = vadd.f32 %v1051, %v1151
      %v1170 = vadd.f32 %v1052, %v1153
      %v1171 = vld [vmem:[%s934 + $0x2] sm:$0xff]
      %v1172 = vld [vmem:[%s934 + $0xa] sm:$0xff]
      %v1173 = vld [vmem:[%s934 + $0x1a] sm:$0xff]
      %v1174 = vld [vmem:[%s934 + $0x22] sm:$0xff]
      %v1175 = vld [vmem:[%s934 + $0x32] sm:$0xff]
      %v1176 = vld [vmem:[%s934 + $0x3a] sm:$0xff]
      %v1177 = vld [vmem:[%s934 + $0x4a] sm:$0xff]
      %v1178 = vld [vmem:[%s934 + $0x52] sm:$0xff]
      %v1179 = vld [vmem:[%s934 + $0x62] sm:$0xff]
      %v1180 = vld [vmem:[%s934 + $0x6a] sm:$0xff]
      %v1181 = vld [vmem:[%s934 + $0x7a] sm:$0xff]
      %v1182 = vld [vmem:[%s934 + $0x82] sm:$0xff]
      %v1183 = vld [vmem:[%s934 + $0x92] sm:$0xff]
      %v1184 = vld [vmem:[%s934 + $0x9a] sm:$0xff]
      %v1185 = vld [vmem:[%s934 + $0xaa] sm:$0xff]
      %v1186 = vld [vmem:[%s934 + $0xb2] sm:$0xff]
      %v1187 = vpack.c.bf16 %v1172, %v1171
      %v1188 = vpack.c.bf16 %v1174, %v1173
      %v1189 = vpack.c.bf16 %v1176, %v1175
      %v1190 = vpack.c.bf16 %v1178, %v1177
      %v1191 = vpack.c.bf16 %v1180, %v1179
      %v1192 = vpack.c.bf16 %v1182, %v1181
      %v1193 = vpack.c.bf16 %v1184, %v1183
      %v1194 = vpack.c.bf16 %v1186, %v1185
      %s1195 = scalar_lea.vmem %s3, 10
      %v1196 = vld [vmem:[%s1195] sm:$0x3]
      %v1198 = vsel %vm580, %v1187, 0
      %v1201 = vsel %vm580, %v1188, 0
      %v1204 = vsel %vm580, %v1189, 0
      %v1207 = vsel %vm580, %v1190, 0
      %v1210 = vsel %vm580, %v1191, 0
      %v1213 = vsel %vm580, %v1192, 0
      %v1216 = vsel %vm580, %v1193, 0
      %v1219 = vsel %vm580, %v1194, 0
      %v1222 = vsel %vm687, %v1196, 0
      %1224 = vmatpush.bf16.msra.mxu0 0
      %1225 = vmatpush.bf16.msra.mxu0 0
      %1226 = vmatpush.bf16.msra.mxu0 0
      %1227 = vmatpush.bf16.msra.mxu0 0
      %1228 = vmatpush.bf16.msra.mxu0 0
      %1229 = vmatpush.bf16.msra.mxu0 0
      %1230 = vmatpush.bf16.msra.mxu0 0
      %1231 = vmatpush.bf16.msra.mxu0 %v1222
      %1232 = vmatmul.bf16.gmra.mxu0 %v1198
      %v1233 = vpop.f32.mrf.mxu0
      %v1234 = vadd.f32 0.0, %v1233
      %v1235 = vpop.f32.mrf.mxu0
      %v1236 = vadd.f32 0.0, %v1235
      %1237 = vmatmul.bf16.gmra.mxu0 %v1201
      %v1238 = vpop.f32.mrf.mxu0
      %v1239 = vadd.f32 0.0, %v1238
      %v1240 = vpop.f32.mrf.mxu0
      %v1241 = vadd.f32 0.0, %v1240
      %1242 = vmatmul.bf16.gmra.mxu0 %v1204
      %v1243 = vpop.f32.mrf.mxu0
      %v1244 = vadd.f32 0.0, %v1243
      %v1245 = vpop.f32.mrf.mxu0
      %v1246 = vadd.f32 0.0, %v1245
      %1247 = vmatmul.bf16.gmra.mxu0 %v1207
      %v1248 = vpop.f32.mrf.mxu0
      %v1249 = vadd.f32 0.0, %v1248
      %v1250 = vpop.f32.mrf.mxu0
      %v1251 = vadd.f32 0.0, %v1250
      %1252 = vmatmul.bf16.gmra.mxu0 %v1210
      %v1253 = vpop.f32.mrf.mxu0
      %v1254 = vadd.f32 0.0, %v1253
      %v1255 = vpop.f32.mrf.mxu0
      %v1256 = vadd.f32 0.0, %v1255
      %1257 = vmatmul.bf16.gmra.mxu0 %v1213
      %v1258 = vpop.f32.mrf.mxu0
      %v1259 = vadd.f32 0.0, %v1258
      %v1260 = vpop.f32.mrf.mxu0
      %v1261 = vadd.f32 0.0, %v1260
      %1262 = vmatmul.bf16.gmra.mxu0 %v1216
      %v1263 = vpop.f32.mrf.mxu0
      %v1264 = vadd.f32 0.0, %v1263
      %v1265 = vpop.f32.mrf.mxu0
      %v1266 = vadd.f32 0.0, %v1265
      %1267 = vmatmul.bf16.gmra.mxu0 %v1219
      %v1268 = vpop.f32.mrf.mxu0
      %v1269 = vadd.f32 0.0, %v1268
      %v1270 = vpop.f32.mrf.mxu0
      %v1271 = vadd.f32 0.0, %v1270
      %1272 = vdwg.mxu0
      %v1273 = vadd.f32 %v1155, %v1234
      %v1274 = vadd.f32 %v1156, %v1236
      %v1275 = vadd.f32 %v1157, %v1239
      %v1276 = vadd.f32 %v1158, %v1241
      %v1277 = vadd.f32 %v1159, %v1244
      %v1278 = vadd.f32 %v1160, %v1246
      %v1279 = vadd.f32 %v1161, %v1249
      %v1280 = vadd.f32 %v1162, %v1251
      %v1281 = vadd.f32 %v1163, %v1254
      %v1282 = vadd.f32 %v1164, %v1256
      %v1283 = vadd.f32 %v1165, %v1259
      %v1284 = vadd.f32 %v1166, %v1261
      %v1285 = vadd.f32 %v1167, %v1264
      %v1286 = vadd.f32 %v1168, %v1266
      %v1287 = vadd.f32 %v1169, %v1269
      %v1288 = vadd.f32 %v1170, %v1271
      %s1289 = scalar_lea.vmem [#allocation2], 48
      %v1290 = vld [vmem:[%s1289] sm:$0xff]
      %v1291 = vld [vmem:[%s1289 + $0x8] sm:$0xff]
      %v1292 = vld [vmem:[%s1289 + $0x18] sm:$0xff]
      %v1293 = vld [vmem:[%s1289 + $0x20] sm:$0xff]
      %v1294 = vld [vmem:[%s1289 + $0x30] sm:$0xff]
      %v1295 = vld [vmem:[%s1289 + $0x38] sm:$0xff]
      %v1296 = vld [vmem:[%s1289 + $0x48] sm:$0xff]
      %v1297 = vld [vmem:[%s1289 + $0x50] sm:$0xff]
      %v1298 = vld [vmem:[%s1289 + $0x60] sm:$0xff]
      %v1299 = vld [vmem:[%s1289 + $0x68] sm:$0xff]
      %v1300 = vld [vmem:[%s1289 + $0x78] sm:$0xff]
      %v1301 = vld [vmem:[%s1289 + $0x80] sm:$0xff]
      %v1302 = vld [vmem:[%s1289 + $0x90] sm:$0xff]
      %v1303 = vld [vmem:[%s1289 + $0x98] sm:$0xff]
      %v1304 = vld [vmem:[%s1289 + $0xa8] sm:$0xff]
      %v1305 = vld [vmem:[%s1289 + $0xb0] sm:$0xff]
      %v1306 = vpack.c.bf16 %v1291, %v1290
      %v1307 = vpack.c.bf16 %v1293, %v1292
      %v1308 = vpack.c.bf16 %v1295, %v1294
      %v1309 = vpack.c.bf16 %v1297, %v1296
      %v1310 = vpack.c.bf16 %v1299, %v1298
      %v1311 = vpack.c.bf16 %v1301, %v1300
      %v1312 = vpack.c.bf16 %v1303, %v1302
      %v1313 = vpack.c.bf16 %v1305, %v1304
      %s1314 = scalar_lea.vmem %s3, 12
      %v1315 = vld [vmem:[%s1314] sm:$0x3]
      %v1317 = vsel %vm580, %v1306, 0
      %v1320 = vsel %vm580, %v1307, 0
      %v1323 = vsel %vm580, %v1308, 0
      %v1326 = vsel %vm580, %v1309, 0
      %v1329 = vsel %vm580, %v1310, 0
      %v1332 = vsel %vm580, %v1311, 0
      %v1335 = vsel %vm580, %v1312, 0
      %v1338 = vsel %vm580, %v1313, 0
      %v1341 = vsel %vm687, %v1315, 0
      %1343 = vmatpush.bf16.msra.mxu0 0
      %1344 = vmatpush.bf16.msra.mxu0 0
      %1345 = vmatpush.bf16.msra.mxu0 0
      %1346 = vmatpush.bf16.msra.mxu0 0
      %1347 = vmatpush.bf16.msra.mxu0 0
      %1348 = vmatpush.bf16.msra.mxu0 0
      %1349 = vmatpush.bf16.msra.mxu0 0
      %1350 = vmatpush.bf16.msra.mxu0 %v1341
      %1351 = vmatmul.bf16.gmra.mxu0 %v1317
      %v1352 = vpop.f32.mrf.mxu0
      %v1353 = vadd.f32 0.0, %v1352
      %v1354 = vpop.f32.mrf.mxu0
      %v1355 = vadd.f32 0.0, %v1354
      %1356 = vmatmul.bf16.gmra.mxu0 %v1320
      %v1357 = vpop.f32.mrf.mxu0
      %v1358 = vadd.f32 0.0, %v1357
      %v1359 = vpop.f32.mrf.mxu0
      %v1360 = vadd.f32 0.0, %v1359
      %1361 = vmatmul.bf16.gmra.mxu0 %v1323
      %v1362 = vpop.f32.mrf.mxu0
      %v1363 = vadd.f32 0.0, %v1362
      %v1364 = vpop.f32.mrf.mxu0
      %v1365 = vadd.f32 0.0, %v1364
      %1366 = vmatmul.bf16.gmra.mxu0 %v1326
      %v1367 = vpop.f32.mrf.mxu0
      %v1368 = vadd.f32 0.0, %v1367
      %v1369 = vpop.f32.mrf.mxu0
      %v1370 = vadd.f32 0.0, %v1369
      %1371 = vmatmul.bf16.gmra.mxu0 %v1329
      %v1372 = vpop.f32.mrf.mxu0
      %v1373 = vadd.f32 0.0, %v1372
      %v1374 = vpop.f32.mrf.mxu0
      %v1375 = vadd.f32 0.0, %v1374
      %1376 = vmatmul.bf16.gmra.mxu0 %v1332
      %v1377 = vpop.f32.mrf.mxu0
      %v1378 = vadd.f32 0.0, %v1377
      %v1379 = vpop.f32.mrf.mxu0
      %v1380 = vadd.f32 0.0, %v1379
      %1381 = vmatmul.bf16.gmra.mxu0 %v1335
      %v1382 = vpop.f32.mrf.mxu0
      %v1383 = vadd.f32 0.0, %v1382
      %v1384 = vpop.f32.mrf.mxu0
      %v1385 = vadd.f32 0.0, %v1384
      %1386 = vmatmul.bf16.gmra.mxu0 %v1338
      %v1387 = vpop.f32.mrf.mxu0
      %v1388 = vadd.f32 0.0, %v1387
      %v1389 = vpop.f32.mrf.mxu0
      %v1390 = vadd.f32 0.0, %v1389
      %1391 = vdwg.mxu0
      %v1392 = vadd.f32 %v1273, %v1353
      %v1393 = vadd.f32 %v1274, %v1355
      %v1394 = vadd.f32 %v1275, %v1358
      %v1395 = vadd.f32 %v1276, %v1360
      %v1396 = vadd.f32 %v1277, %v1363
      %v1397 = vadd.f32 %v1278, %v1365
      %v1398 = vadd.f32 %v1279, %v1368
      %v1399 = vadd.f32 %v1280, %v1370
      %v1400 = vadd.f32 %v1281, %v1373
      %v1401 = vadd.f32 %v1282, %v1375
      %v1402 = vadd.f32 %v1283, %v1378
      %v1403 = vadd.f32 %v1284, %v1380
      %v1404 = vadd.f32 %v1285, %v1383
      %v1405 = vadd.f32 %v1286, %v1385
      %v1406 = vadd.f32 %v1287, %v1388
      %v1407 = vadd.f32 %v1288, %v1390
      %v1408 = vld [vmem:[%s1289 + $0x1] sm:$0xff]
      %v1409 = vld [vmem:[%s1289 + $0x9] sm:$0xff]
      %v1410 = vld [vmem:[%s1289 + $0x19] sm:$0xff]
      %v1411 = vld [vmem:[%s1289 + $0x21] sm:$0xff]
      %v1412 = vld [vmem:[%s1289 + $0x31] sm:$0xff]
      %v1413 = vld [vmem:[%s1289 + $0x39] sm:$0xff]
      %v1414 = vld [vmem:[%s1289 + $0x49] sm:$0xff]
      %v1415 = vld [vmem:[%s1289 + $0x51] sm:$0xff]
      %v1416 = vld [vmem:[%s1289 + $0x61] sm:$0xff]
      %v1417 = vld [vmem:[%s1289 + $0x69] sm:$0xff]
      %v1418 = vld [vmem:[%s1289 + $0x79] sm:$0xff]
      %v1419 = vld [vmem:[%s1289 + $0x81] sm:$0xff]
      %v1420 = vld [vmem:[%s1289 + $0x91] sm:$0xff]
      %v1421 = vld [vmem:[%s1289 + $0x99] sm:$0xff]
      %v1422 = vld [vmem:[%s1289 + $0xa9] sm:$0xff]
      %v1423 = vld [vmem:[%s1289 + $0xb1] sm:$0xff]
      %v1424 = vpack.c.bf16 %v1409, %v1408
      %v1425 = vpack.c.bf16 %v1411, %v1410
      %v1426 = vpack.c.bf16 %v1413, %v1412
      %v1427 = vpack.c.bf16 %v1415, %v1414
      %v1428 = vpack.c.bf16 %v1417, %v1416
      %v1429 = vpack.c.bf16 %v1419, %v1418
      %v1430 = vpack.c.bf16 %v1421, %v1420
      %v1431 = vpack.c.bf16 %v1423, %v1422
      %s1432 = scalar_lea.vmem %s3, 14
      %v1433 = vld [vmem:[%s1432] sm:$0x3]
      %v1435 = vsel %vm580, %v1424, 0
      %v1438 = vsel %vm580, %v1425, 0
      %v1441 = vsel %vm580, %v1426, 0
      %v1444 = vsel %vm580, %v1427, 0
      %v1447 = vsel %vm580, %v1428, 0
      %v1450 = vsel %vm580, %v1429, 0
      %v1453 = vsel %vm580, %v1430, 0
      %v1456 = vsel %vm580, %v1431, 0
      %v1459 = vsel %vm687, %v1433, 0
      %1461 = vmatpush.bf16.msra.mxu0 0
      %1462 = vmatpush.bf16.msra.mxu0 0
      %1463 = vmatpush.bf16.msra.mxu0 0
      %1464 = vmatpush.bf16.msra.mxu0 0
      %1465 = vmatpush.bf16.msra.mxu0 0
      %1466 = vmatpush.bf16.msra.mxu0 0
      %1467 = vmatpush.bf16.msra.mxu0 0
      %1468 = vmatpush.bf16.msra.mxu0 %v1459
      %1469 = vmatmul.bf16.gmra.mxu0 %v1435
      %v1470 = vpop.f32.mrf.mxu0
      %v1471 = vadd.f32 0.0, %v1470
      %v1472 = vpop.f32.mrf.mxu0
      %v1473 = vadd.f32 0.0, %v1472
      %1474 = vmatmul.bf16.gmra.mxu0 %v1438
      %v1475 = vpop.f32.mrf.mxu0
      %v1476 = vadd.f32 0.0, %v1475
      %v1477 = vpop.f32.mrf.mxu0
      %v1478 = vadd.f32 0.0, %v1477
      %1479 = vmatmul.bf16.gmra.mxu0 %v1441
      %v1480 = vpop.f32.mrf.mxu0
      %v1481 = vadd.f32 0.0, %v1480
      %v1482 = vpop.f32.mrf.mxu0
      %v1483 = vadd.f32 0.0, %v1482
      %1484 = vmatmul.bf16.gmra.mxu0 %v1444
      %v1485 = vpop.f32.mrf.mxu0
      %v1486 = vadd.f32 0.0, %v1485
      %v1487 = vpop.f32.mrf.mxu0
      %v1488 = vadd.f32 0.0, %v1487
      %1489 = vmatmul.bf16.gmra.mxu0 %v1447
      %v1490 = vpop.f32.mrf.mxu0
      %v1491 = vadd.f32 0.0, %v1490
      %v1492 = vpop.f32.mrf.mxu0
      %v1493 = vadd.f32 0.0, %v1492
      %1494 = vmatmul.bf16.gmra.mxu0 %v1450
      %v1495 = vpop.f32.mrf.mxu0
      %v1496 = vadd.f32 0.0, %v1495
      %v1497 = vpop.f32.mrf.mxu0
      %v1498 = vadd.f32 0.0, %v1497
      %1499 = vmatmul.bf16.gmra.mxu0 %v1453
      %v1500 = vpop.f32.mrf.mxu0
      %v1501 = vadd.f32 0.0, %v1500
      %v1502 = vpop.f32.mrf.mxu0
      %v1503 = vadd.f32 0.0, %v1502
      %1504 = vmatmul.bf16.gmra.mxu0 %v1456
      %v1505 = vpop.f32.mrf.mxu0
      %v1506 = vadd.f32 0.0, %v1505
      %v1507 = vpop.f32.mrf.mxu0
      %v1508 = vadd.f32 0.0, %v1507
      %1509 = vdwg.mxu0
      %v1510 = vadd.f32 %v1392, %v1471
      %v1511 = vadd.f32 %v1393, %v1473
      %v1512 = vadd.f32 %v1394, %v1476
      %v1513 = vadd.f32 %v1395, %v1478
      %v1514 = vadd.f32 %v1396, %v1481
      %v1515 = vadd.f32 %v1397, %v1483
      %v1516 = vadd.f32 %v1398, %v1486
      %v1517 = vadd.f32 %v1399, %v1488
      %v1518 = vadd.f32 %v1400, %v1491
      %v1519 = vadd.f32 %v1401, %v1493
      %v1520 = vadd.f32 %v1402, %v1496
      %v1521 = vadd.f32 %v1403, %v1498
      %v1522 = vadd.f32 %v1404, %v1501
      %v1523 = vadd.f32 %v1405, %v1503
      %v1524 = vadd.f32 %v1406, %v1506
      %v1525 = vadd.f32 %v1407, %v1508
      %v1526 = vld [vmem:[%s1289 + $0x2] sm:$0xff]
      %v1527 = vld [vmem:[%s1289 + $0xa] sm:$0xff]
      %v1528 = vld [vmem:[%s1289 + $0x1a] sm:$0xff]
      %v1529 = vld [vmem:[%s1289 + $0x22] sm:$0xff]
      %v1530 = vld [vmem:[%s1289 + $0x32] sm:$0xff]
      %v1531 = vld [vmem:[%s1289 + $0x3a] sm:$0xff]
      %v1532 = vld [vmem:[%s1289 + $0x4a] sm:$0xff]
      %v1533 = vld [vmem:[%s1289 + $0x52] sm:$0xff]
      %v1534 = vld [vmem:[%s1289 + $0x62] sm:$0xff]
      %v1535 = vld [vmem:[%s1289 + $0x6a] sm:$0xff]
      %v1536 = vld [vmem:[%s1289 + $0x7a] sm:$0xff]
      %v1537 = vld [vmem:[%s1289 + $0x82] sm:$0xff]
      %v1538 = vld [vmem:[%s1289 + $0x92] sm:$0xff]
      %v1539 = vld [vmem:[%s1289 + $0x9a] sm:$0xff]
      %v1540 = vld [vmem:[%s1289 + $0xaa] sm:$0xff]
      %v1541 = vld [vmem:[%s1289 + $0xb2] sm:$0xff]
      %v1542 = vpack.c.bf16 %v1527, %v1526
      %v1543 = vpack.c.bf16 %v1529, %v1528
      %v1544 = vpack.c.bf16 %v1531, %v1530
      %v1545 = vpack.c.bf16 %v1533, %v1532
      %v1546 = vpack.c.bf16 %v1535, %v1534
      %v1547 = vpack.c.bf16 %v1537, %v1536
      %v1548 = vpack.c.bf16 %v1539, %v1538
      %v1549 = vpack.c.bf16 %v1541, %v1540
      %s1550 = scalar_lea.vmem %s3, 16
      %v1551 = vld [vmem:[%s1550] sm:$0x3]
      %v1553 = vsel %vm580, %v1542, 0
      %v1556 = vsel %vm580, %v1543, 0
      %v1559 = vsel %vm580, %v1544, 0
      %v1562 = vsel %vm580, %v1545, 0
      %v1565 = vsel %vm580, %v1546, 0
      %v1568 = vsel %vm580, %v1547, 0
      %v1571 = vsel %vm580, %v1548, 0
      %v1574 = vsel %vm580, %v1549, 0
      %v1577 = vsel %vm687, %v1551, 0
      %1579 = vmatpush.bf16.msra.mxu0 0
      %1580 = vmatpush.bf16.msra.mxu0 0
      %1581 = vmatpush.bf16.msra.mxu0 0
      %1582 = vmatpush.bf16.msra.mxu0 0
      %1583 = vmatpush.bf16.msra.mxu0 0
      %1584 = vmatpush.bf16.msra.mxu0 0
      %1585 = vmatpush.bf16.msra.mxu0 0
      %1586 = vmatpush.bf16.msra.mxu0 %v1577
      %1587 = vmatmul.bf16.gmra.mxu0 %v1553
      %v1588 = vpop.f32.mrf.mxu0
      %v1589 = vadd.f32 0.0, %v1588
      %v1590 = vpop.f32.mrf.mxu0
      %v1591 = vadd.f32 0.0, %v1590
      %1592 = vmatmul.bf16.gmra.mxu0 %v1556
      %v1593 = vpop.f32.mrf.mxu0
      %v1594 = vadd.f32 0.0, %v1593
      %v1595 = vpop.f32.mrf.mxu0
      %v1596 = vadd.f32 0.0, %v1595
      %1597 = vmatmul.bf16.gmra.mxu0 %v1559
      %v1598 = vpop.f32.mrf.mxu0
      %v1599 = vadd.f32 0.0, %v1598
      %v1600 = vpop.f32.mrf.mxu0
      %v1601 = vadd.f32 0.0, %v1600
      %1602 = vmatmul.bf16.gmra.mxu0 %v1562
      %v1603 = vpop.f32.mrf.mxu0
      %v1604 = vadd.f32 0.0, %v1603
      %v1605 = vpop.f32.mrf.mxu0
      %v1606 = vadd.f32 0.0, %v1605
      %1607 = vmatmul.bf16.gmra.mxu0 %v1565
      %v1608 = vpop.f32.mrf.mxu0
      %v1609 = vadd.f32 0.0, %v1608
      %v1610 = vpop.f32.mrf.mxu0
      %v1611 = vadd.f32 0.0, %v1610
      %1612 = vmatmul.bf16.gmra.mxu0 %v1568
      %v1613 = vpop.f32.mrf.mxu0
      %v1614 = vadd.f32 0.0, %v1613
      %v1615 = vpop.f32.mrf.mxu0
      %v1616 = vadd.f32 0.0, %v1615
      %1617 = vmatmul.bf16.gmra.mxu0 %v1571
      %v1618 = vpop.f32.mrf.mxu0
      %v1619 = vadd.f32 0.0, %v1618
      %v1620 = vpop.f32.mrf.mxu0
      %v1621 = vadd.f32 0.0, %v1620
      %1622 = vmatmul.bf16.gmra.mxu0 %v1574
      %v1623 = vpop.f32.mrf.mxu0
      %v1624 = vadd.f32 0.0, %v1623
      %v1625 = vpop.f32.mrf.mxu0
      %v1626 = vadd.f32 0.0, %v1625
      %1627 = vdwg.mxu0
      %v1628 = vadd.f32 %v1510, %v1589
      %v1629 = vadd.f32 %v1511, %v1591
      %v1630 = vadd.f32 %v1512, %v1594
      %v1631 = vadd.f32 %v1513, %v1596
      %v1632 = vadd.f32 %v1514, %v1599
      %v1633 = vadd.f32 %v1515, %v1601
      %v1634 = vadd.f32 %v1516, %v1604
      %v1635 = vadd.f32 %v1517, %v1606
      %v1636 = vadd.f32 %v1518, %v1609
      %v1637 = vadd.f32 %v1519, %v1611
      %v1638 = vadd.f32 %v1520, %v1614
      %v1639 = vadd.f32 %v1521, %v1616
      %v1640 = vadd.f32 %v1522, %v1619
      %v1641 = vadd.f32 %v1523, %v1621
      %v1642 = vadd.f32 %v1524, %v1624
      %v1643 = vadd.f32 %v1525, %v1626
      %v1644 = vld [vmem:[%s4] sm:$0x1]
      %v1646 = vperm.slane %v1644, 0
      %v1648 = vadd.f32 %v1628, %v1646
      %v1649 = vadd.f32 %v1629, %v1646
      %v1650 = vadd.f32 %v1630, %v1646
      %v1651 = vadd.f32 %v1631, %v1646
      %v1652 = vadd.f32 %v1632, %v1646
      %v1653 = vadd.f32 %v1633, %v1646
      %v1654 = vadd.f32 %v1634, %v1646
      %v1655 = vadd.f32 %v1635, %v1646
      %v1656 = vadd.f32 %v1636, %v1646
      %v1657 = vadd.f32 %v1637, %v1646
      %v1658 = vadd.f32 %v1638, %v1646
      %v1659 = vadd.f32 %v1639, %v1646
      %v1660 = vadd.f32 %v1640, %v1646
      %v1661 = vadd.f32 %v1641, %v1646
      %v1662 = vadd.f32 %v1642, %v1646
      %v1663 = vadd.f32 %v1643, %v1646
      %vm1664 = vcmask 64512
      %1665 = vst.msk [vmem:[%s246] sm:$0xff] %vm1664, %v1648
      %1666 = vst.msk [vmem:[%s246 + $0x8] sm:$0xff] %vm1664, %v1649
      %1667 = vst.msk [vmem:[%s246 + $0x10] sm:$0xff] %vm1664, %v1650
      %1668 = vst.msk [vmem:[%s246 + $0x18] sm:$0xff] %vm1664, %v1651
      %1669 = vst.msk [vmem:[%s246 + $0x20] sm:$0xff] %vm1664, %v1652
      %1670 = vst.msk [vmem:[%s246 + $0x28] sm:$0xff] %vm1664, %v1653
      %1671 = vst.msk [vmem:[%s246 + $0x30] sm:$0xff] %vm1664, %v1654
      %1672 = vst.msk [vmem:[%s246 + $0x38] sm:$0xff] %vm1664, %v1655
      %1673 = vst.msk [vmem:[%s246 + $0x40] sm:$0xff] %vm1664, %v1656
      %1674 = vst.msk [vmem:[%s246 + $0x48] sm:$0xff] %vm1664, %v1657
      %1675 = vst.msk [vmem:[%s246 + $0x50] sm:$0xff] %vm1664, %v1658
      %1676 = vst.msk [vmem:[%s246 + $0x58] sm:$0xff] %vm1664, %v1659
      %1677 = vst.msk [vmem:[%s246 + $0x60] sm:$0xff] %vm1664, %v1660
      %1678 = vst.msk [vmem:[%s246 + $0x68] sm:$0xff] %vm1664, %v1661
      %1679 = vst.msk [vmem:[%s246 + $0x70] sm:$0xff] %vm1664, %v1662
      %1680 = vst.msk [vmem:[%s246 + $0x78] sm:$0xff] %vm1664, %v1663
      %s1681 = smul.u32 16, %s21
      %p1682 = scmp.lt.s32.totalorder %s20, 1
      %s1683 = scalar_select %p1682, %s20, 1
      %p1684 = scmp.lt.s32.totalorder %s1681, 31
      %s1685 = scalar_select %p1684, %s1681, 31
      %s1686 = smul.addr %s1683, 32
      %s1687 = sadd.s32 %s1685, %s1686
      %s1688 = smul.addr %s1687, 8
      %s1689 = scalar_lea.vmem %s5, %s1688
      // Predicated region
      $region41: #{residual_block_forward.2} parent=39 // pred_check
        %p1690 = pneg %p158
      $region42: #{residual_block_forward.2} parent=39 // pred_check_branch
        %1692 = sbr.rel (%p1690) target = $region44
      $region43: #{residual_block_forward.2} parent=39 // pred_region
        %s1693 = smul.u32 16, %s21
      $region44: #{residual_block_forward.2} parent=39 // pred_fallthru
        _
    $region40: #{residual_block_forward.2} parent=5 // pred_fallthru
      _
    %p1694 = scmp.le.s32.totalorder 2, %s11
    // Predicated region
    $region45: #{residual_block_forward.2} parent=5 // pred_check
      %p1695 = pneg %p1694
    $region46: #{residual_block_forward.2} parent=5 // pred_check_branch
      %1697 = sbr.rel (%p1695) target = $region48
    $region47: #{residual_block_forward.2} parent=5 // pred_region
      %s1698 = ssub.s32 %s11, 2
      // Predicated region
      $region49: #{residual_block_forward.2} parent=47 // pred_check
        %p1699 = pneg %p164
      $region50: #{residual_block_forward.2} parent=47 // pred_check_branch
        %1701 = sbr.rel (%p1699) target = $region52
      $region51: #{residual_block_forward.2} parent=47 // pred_region
        %s1702 = smul.u32 16, %s23
        %p1703 = scmp.lt.s32.totalorder %s22, 1
        %s1704 = scalar_select %p1703, %s22, 1
        %p1705 = scmp.lt.s32.totalorder %s1702, 31
        %s1706 = scalar_select %p1705, %s1702, 31
        %s1707 = smul.addr %s1704, 32
        %s1708 = sadd.s32 %s1706, %s1707
        %s1709 = smul.addr %s1708, 8
        %s1710 = scalar_lea.vmem %s5, %s1709
      $region52: #{residual_block_forward.2} parent=47 // pred_fallthru
        _
    $region48: #{residual_block_forward.2} parent=5 // pred_fallthru
      _
  $region6: #{residual_block_forward.2} parent=0 // loop_footer
    %s15 = sadd.s32 1, %s11
  $region7: #{residual_block_forward.2} parent=0 // loop_footer_branch
    %10 = sbr.rel target = $region3
  $region8: #{residual_block_forward.2} parent=0 // loop_exit
    _

// kernel: residual_block_forward.3
$region0: #{residual_block_forward.3}
  #allocation0 [shape = 'u32[]', space=smem, size = 0x4, offset = 0x4, fixed_abs, tag = 'smem constant byte address 0x4 - core index']
  #allocation1 [shape = 'u32[72,128]{1,0:T(1,128)}', space=vmem, size = 0x9000, scoped, tag = 'internal scratch']
  #allocation2 [shape = 'f32[10,18,8]{2,1,0:T(8,128)}', space=vmem, size = 0x1e000, scoped, tag = 'scratch operand']
  #allocation3 [shape = 'f32[10,18,4]{2,1,0:T(8,128)}', space=vmem, size = 0x1e000, scoped, tag = 'scratch operand']
  %s0 = inlined_call_operand.vmem [shape: f32[2,18,18,8], index: 0, kind: input, shape index: {}]
  %s1 = inlined_call_operand.vmem [shape: f32[1,8], index: 1, kind: input, shape index: {}]
  %s2 = inlined_call_operand.vmem [shape: f32[1,8], index: 2, kind: input, shape index: {}]
  %s3 = inlined_call_operand.vmem [shape: bf16[9,8,8], index: 3, kind: input, shape index: {}]
  %s4 = inlined_call_operand.vmem [shape: f32[2,18,18,4], index: 4, kind: input, shape index: {}]
  %s5 = inlined_call_operand.vmem [shape: bf16[9,4,8], index: 5, kind: input, shape index: {}]
  %s6 = inlined_call_operand.vmem [shape: f32[1,8], index: 6, kind: input, shape index: {}]
  %s7 = inlined_call_operand.vmem [shape: f32[2,256,8], index: 7, kind: output, shape index: {}]
  %s8 = sld [smem:[#allocation0]]
  $region61: #{residual_block_forward.3} parent=0
    _
  %s10 = ssub.s32 1, %s8
  %s11 = scalar_select 0, %s10, %s8
  loop: start=0, step=1, limit=6
  $region2: #{residual_block_forward.3} parent=0 // loop_pre_header
    _
  $region3: #{residual_block_forward.3} parent=0 // loop_header
    %s13 = sphi 0, %s17
    %p14 = scmp.ge.s32.totalorder %s13, 6
    %s20 = sphi 0, %s32
    %s21 = sphi 0, %s28
    %s22 = sphi 0, %s20
    %s23 = sphi 0, %s21
    %s24 = sphi 0, %s22
    %s25 = sphi 0, %s23
    %s35 = sphi 0, %s37
    %s38 = sphi 0, %s35
    %s39 = sphi 0, %s38
    %s55 = sphi 0, %s39
    %s59 = sphi 0, %s59
    %s61 = sphi 0, %s59
    %s62 = sphi 0, %s61
    %s76 = sphi 0, %s62
    %s80 = sphi 0, %s80
    %s82 = sphi 0, %s80
    %s83 = sphi 0, %s82
    %s97 = sphi 0, %s83
    %s101 = sphi 0, %s101
    %s103 = sphi 0, %s101
    %s104 = sphi 0, %s103
    %s118 = sphi 0, %s104
    %s124 = sphi 0, %s126
    %s127 = sphi 0, %s124
    %s128 = sphi 0, %s127
    %s144 = sphi 0, %s128
    %s148 = sphi 0, %s148
    %s150 = sphi 0, %s148
    %s151 = sphi 0, %s150
    %s165 = sphi 0, %s151
    %s169 = sphi 0, %s169
    %s171 = sphi 0, %s169
    %s172 = sphi 0, %s171
    %s186 = sphi 0, %s172
    %s194 = sphi 0, %s196
    %s197 = sphi 0, %s194
    %s198 = sphi 0, %s197
    %s214 = sphi 0, %s198
  $region4: #{residual_block_forward.3} parent=0 // loop_header_branch
    %16 = sbr.rel (%p14) target = $region8
  $region5: #{residual_block_forward.3} parent=0 // loop_body
    %s18 = ssub.s32 %s13, 1
    %s19 = ssub.s32 %s13, 2
    %s26 = sadd.s32 1, %s21
    %p27 = scmp.ge.s32.totalorder %s26, 2
    %s28 = scalar_select %p27, 0, %s26
    %s29 = sadd.s32 1, %s20
    %s30 = scalar_select %p27, %s29, %s20
    %p31 = scmp.ge.s32.totalorder %s30, 2
    %s32 = scalar_select %p31, 0, %s30
    %s33 = ssub.s32 %s20, %s32
    %p34 = scmp.eq.s32.totalorder %s33, 0
    %s36 = sadd.s32 %s35, 1
    %s37 = scalar_select %p34, %s35, %s36
    %p40 = pneg %p34
    %p41 = scmp.eq.s32.totalorder %s13, 3
    %p42 = por %p40, %p41
    %p43 = scmp.ne.s32.totalorder %s35, %s38
    %p44 = scmp.eq.s32.totalorder %s13, 0
    %p45 = por %p43, %p44
    %p46 = scmp.ne.s32.totalorder %s35, %s38
    %p47 = scmp.eq.s32.totalorder %s18, 3
    %p48 = por %p46, %p47
    %p49 = scmp.ne.s32.totalorder %s38, %s39
    %p50 = scmp.eq.s32.totalorder %s18, 0
    %p51 = por %p49, %p50
    %p52 = scmp.ne.s32.totalorder %s38, %s39
    %p53 = scmp.eq.s32.totalorder %s19, 3
    %p54 = por %p52, %p53
    %p56 = scmp.ne.s32.totalorder %s39, %s55
    %p57 = scmp.eq.s32.totalorder %s19, 0
    %p58 = por %p56, %p57
    %s60 = sadd.s32 %s59, 1
    %p63 = scmp.eq.s32.totalorder %s13, 3
    %p64 = scmp.ne.s32.totalorder %s59, %s61
    %p65 = scmp.eq.s32.totalorder %s13, 0
    %p66 = por %p64, %p65
    %p67 = scmp.ne.s32.totalorder %s59, %s61
    %p68 = scmp.eq.s32.totalorder %s18, 3
    %p69 = por %p67, %p68
    %p70 = scmp.ne.s32.totalorder %s61, %s62
    %p71 = scmp.eq.s32.totalorder %s18, 0
    %p72 = por %p70, %p71
    %p73 = scmp.ne.s32.totalorder %s61, %s62
    %p74 = scmp.eq.s32.totalorder %s19, 3
    %p75 = por %p73, %p74
    %p77 = scmp.ne.s32.totalorder %s62, %s76
    %p78 = scmp.eq.s32.totalorder %s19, 0
    %p79 = por %p77, %p78
    %s81 = sadd.s32 %s80, 1
    %p84 = scmp.eq.s32.totalorder %s13, 3
    %p85 = scmp.ne.s32.totalorder %s80, %s82
    %p86 = scmp.eq.s32.totalorder %s13, 0
    %p87 = por %p85, %p86
    %p88 = scmp.ne.s32.totalorder %s80, %s82
    %p89 = scmp.eq.s32.totalorder %s18, 3
    %p90 = por %p88, %p89
    %p91 = scmp.ne.s32.totalorder %s82, %s83
    %p92 = scmp.eq.s32.totalorder %s18, 0
    %p93 = por %p91, %p92
    %p94 = scmp.ne.s32.totalorder %s82, %s83
    %p95 = scmp.eq.s32.totalorder %s19, 3
    %p96 = por %p94, %p95
    %p98 = scmp.ne.s32.totalorder %s83, %s97
    %p99 = scmp.eq.s32.totalorder %s19, 0
    %p100 = por %p98, %p99
    %s102 = sadd.s32 %s101, 1
    %p105 = scmp.eq.s32.totalorder %s13, 3
    %p106 = scmp.ne.s32.totalorder %s101, %s103
    %p107 = scmp.eq.s32.totalorder %s13, 0
    %p108 = por %p106, %p107
    %p109 = scmp.ne.s32.totalorder %s101, %s103
    %p110 = scmp.eq.s32.totalorder %s18, 3
    %p111 = por %p109, %p110
    %p112 = scmp.ne.s32.totalorder %s103, %s104
    %p113 = scmp.eq.s32.totalorder %s18, 0
    %p114 = por %p112, %p113
    %p115 = scmp.ne.s32.totalorder %s103, %s104
    %p116 = scmp.eq.s32.totalorder %s19, 3
    %p117 = por %p115, %p116
    %p119 = scmp.ne.s32.totalorder %s104, %s118
    %p120 = scmp.eq.s32.totalorder %s19, 0
    %p121 = por %p119, %p120
    %s122 = ssub.s32 %s20, %s32
    %p123 = scmp.eq.s32.totalorder %s122, 0
    %s125 = sadd.s32 %s124, 1
    %s126 = scalar_select %p123, %s124, %s125
    %p129 = pneg %p123
    %p130 = scmp.eq.s32.totalorder %s13, 3
    %p131 = por %p129, %p130
    %p132 = scmp.ne.s32.totalorder %s124, %s127
    %p133 = scmp.eq.s32.totalorder %s13, 0
    %p134 = por %p132, %p133
    %p135 = scmp.ne.s32.totalorder %s124, %s127
    %p136 = scmp.eq.s32.totalorder %s18, 3
    %p137 = por %p135, %p136
    %p138 = scmp.ne.s32.totalorder %s127, %s128
    %p139 = scmp.eq.s32.totalorder %s18, 0
    %p140 = por %p138, %p139
    %p141 = scmp.ne.s32.totalorder %s127, %s128
    %p142 = scmp.eq.s32.totalorder %s19, 3
    %p143 = por %p141, %p142
    %p145 = scmp.ne.s32.totalorder %s128, %s144
    %p146 = scmp.eq.s32.totalorder %s19, 0
    %p147 = por %p145, %p146
    %s149 = sadd.s32 %s148, 1
    %p152 = scmp.eq.s32.totalorder %s13, 3
    %p153 = scmp.ne.s32.totalorder %s148, %s150
    %p154 = scmp.eq.s32.totalorder %s13, 0
    %p155 = por %p153, %p154
    %p156 = scmp.ne.s32.totalorder %s148, %s150
    %p157 = scmp.eq.s32.totalorder %s18, 3
    %p158 = por %p156, %p157
    %p159 = scmp.ne.s32.totalorder %s150, %s151
    %p160 = scmp.eq.s32.totalorder %s18, 0
    %p161 = por %p159, %p160
    %p162 = scmp.ne.s32.totalorder %s150, %s151
    %p163 = scmp.eq.s32.totalorder %s19, 3
    %p164 = por %p162, %p163
    %p166 = scmp.ne.s32.totalorder %s151, %s165
    %p167 = scmp.eq.s32.totalorder %s19, 0
    %p168 = por %p166, %p167
    %s170 = sadd.s32 %s169, 1
    %p173 = scmp.eq.s32.totalorder %s13, 3
    %p174 = scmp.ne.s32.totalorder %s169, %s171
    %p175 = scmp.eq.s32.totalorder %s13, 0
    %p176 = por %p174, %p175
    %p177 = scmp.ne.s32.totalorder %s169, %s171
    %p178 = scmp.eq.s32.totalorder %s18, 3
    %p179 = por %p177, %p178
    %p180 = scmp.ne.s32.totalorder %s171, %s172
    %p181 = scmp.eq.s32.totalorder %s18, 0
    %p182 = por %p180, %p181
    %p183 = scmp.ne.s32.totalorder %s171, %s172
    %p184 = scmp.eq.s32.totalorder %s19, 3
    %p185 = por %p183, %p184
    %p187 = scmp.ne.s32.totalorder %s172, %s186
    %p188 = scmp.eq.s32.totalorder %s19, 0
    %p189 = por %p187, %p188
    %s190 = ssub.s32 %s20, %s32
    %s191 = ssub.s32 %s21, %s28
    %s192 = sor.u32 %s190, %s191
    %p193 = scmp.eq.s32.totalorder %s192, 0
    %s195 = sadd.s32 %s194, 1
    %s196 = scalar_select %p193, %s194, %s195
    %p199 = pneg %p193
    %p200 = scmp.eq.s32.totalorder %s13, 3
    %p201 = por %p199, %p200
    %p202 = scmp.ne.s32.totalorder %s194, %s197
    %p203 = scmp.eq.s32.totalorder %s13, 0
    %p204 = por %p202, %p203
    %p205 = scmp.ne.s32.totalorder %s194, %s197
    %p206 = scmp.eq.s32.totalorder %s18, 3
    %p207 = por %p205, %p206
    %p208 = scmp.ne.s32.totalorder %s197, %s198
    %p209 = scmp.eq.s32.totalorder %s18, 0
    %p210 = por %p208, %p209
    %p211 = scmp.ne.s32.totalorder %s197, %s198
    %p212 = scmp.eq.s32.totalorder %s19, 3
    %p213 = por %p211, %p212
    %p215 = scmp.ne.s32.totalorder %s198, %s214
    %p216 = scmp.eq.s32.totalorder %s19, 0
    %p217 = por %p215, %p216
    %p218 = scmp.le.s32.totalorder 1, %s13
    %p219 = scmp.lt.s32.totalorder %s13, 5
    %p220 = pnand %p218, %p219
    %p221 = pneg %p220
    // Predicated region
    $region9: #{residual_block_forward.3} parent=5 // pred_check
      _
    $region10: #{residual_block_forward.3} parent=5 // pred_check_branch
      %223 = sbr.rel (%p220) target = $region12
    $region11: #{residual_block_forward.3} parent=5 // pred_region
      %s224 = ssub.s32 %s13, 1
      // Predicated region
      $region13: #{residual_block_forward.3} parent=11 // pred_check
        %p225 = pneg %p72
      $region14: #{residual_block_forward.3} parent=11 // pred_check_branch
        %227 = sbr.rel (%p225) target = $region16
      $region15: #{residual_block_forward.3} parent=11 // pred_region
        _
      $region16: #{residual_block_forward.3} parent=11 // pred_fallthru
        _
      // Predicated region
      $region17: #{residual_block_forward.3} parent=11 // pred_check
        %p228 = pneg %p93
      $region18: #{residual_block_forward.3} parent=11 // pred_check_branch
        %230 = sbr.rel (%p228) target = $region20
      $region19: #{residual_block_forward.3} parent=11 // pred_region
        _
      $region20: #{residual_block_forward.3} parent=11 // pred_fallthru
        _
      // Predicated region
      $region21: #{residual_block_forward.3} parent=11 // pred_check
        %p231 = pneg %p114
      $region22: #{residual_block_forward.3} parent=11 // pred_check_branch
        %233 = sbr.rel (%p231) target = $region24
      $region23: #{residual_block_forward.3} parent=11 // pred_region
        _
      $region24: #{residual_block_forward.3} parent=11 // pred_fallthru
        _
      // Predicated region
      $region25: #{residual_block_forward.3} parent=11 // pred_check
        %p234 = pneg %p161
      $region26: #{residual_block_forward.3} parent=11 // pred_check_branch
        %236 = sbr.rel (%p234) target = $region28
      $region27: #{residual_block_forward.3} parent=11 // pred_region
        _
      $region28: #{residual_block_forward.3} parent=11 // pred_fallthru
        _
      // Predicated region
      $region29: #{residual_block_forward.3} parent=11 // pred_check
        %p237 = pneg %p182
      $region30: #{residual_block_forward.3} parent=11 // pred_check_branch
        %239 = sbr.rel (%p237) target = $region32
      $region31: #{residual_block_forward.3} parent=11 // pred_region
        _
      $region32: #{residual_block_forward.3} parent=11 // pred_fallthru
        _
    $region12: #{residual_block_forward.3} parent=5 // pred_fallthru
      _
    %p240 = scmp.lt.s32.totalorder %s13, 4
    // Predicated region
    $region33: #{residual_block_forward.3} parent=5 // pred_check
      %p241 = pneg %p240
    $region34: #{residual_block_forward.3} parent=5 // pred_check_branch
      %243 = sbr.rel (%p241) target = $region36
    $region35: #{residual_block_forward.3} parent=5 // pred_region
      // Predicated region
      $region37: #{residual_block_forward.3} parent=35 // pred_check
        %p244 = pneg %p45
      $region38: #{residual_block_forward.3} parent=35 // pred_check_branch
        %246 = sbr.rel (%p244) target = $region40
      $region39: #{residual_block_forward.3} parent=35 // pred_region
        %p247 = scmp.lt.s32.totalorder %s20, 1
        %s248 = scalar_select %p247, %s20, 1
        %s249 = smul.addr %s248, 54
        %s250 = smul.addr %s249, 8
        %s251 = scalar_lea.vmem %s0, %s250
      $region40: #{residual_block_forward.3} parent=35 // pred_fallthru
        _
      // Predicated region
      $region41: #{residual_block_forward.3} parent=35 // pred_check
        %p252 = pneg %p134
      $region42: #{residual_block_forward.3} parent=35 // pred_check_branch
        %254 = sbr.rel (%p252) target = $region44
      $region43: #{residual_block_forward.3} parent=35 // pred_region
        %p255 = scmp.lt.s32.totalorder %s20, 1
        %s256 = scalar_select %p255, %s20, 1
        %s257 = smul.addr %s256, 54
        %s258 = smul.addr %s257, 8
        %s259 = scalar_lea.vmem %s4, %s258
      $region44: #{residual_block_forward.3} parent=35 // pred_fallthru
        _
    $region36: #{residual_block_forward.3} parent=5 // pred_fallthru
      _
    %p260 = scmp.le.s32.totalorder 1, %s13
    %p261 = scmp.lt.s32.totalorder %s13, 5
    %p262 = pnand %p260, %p261
    %p263 = pneg %p262
    // Predicated region
    $region45: #{residual_block_forward.3} parent=5 // pred_check
      _
    $region46: #{residual_block_forward.3} parent=5 // pred_check_branch
      %265 = sbr.rel (%p262) target = $region48
    $region47: #{residual_block_forward.3} parent=5 // pred_region
      %s266 = ssub.s32 %s13, 1
      %p267 = scmp.lt.s32.totalorder %s22, 1
      %s268 = scalar_select %p267, %s22, 1
      %s269 = smul.addr %s268, 54
      %s270 = smul.addr %s269, 8
      %s271 = scalar_lea.vmem %s0, %s270
      %p272 = pneg %p51
      %p273 = pneg %p48
      %p274 = pneg %p72
      %p275 = pneg %p69
      %p276 = pneg %p93
      %p277 = pneg %p90
      %p278 = pneg %p114
      %p279 = pneg %p111
      %p280 = scmp.lt.s32.totalorder %s22, 1
      %s281 = scalar_select %p280, %s22, 1
      %s282 = smul.addr %s281, 54
      %s283 = smul.addr %s282, 8
      %s284 = scalar_lea.vmem %s4, %s283
      %p285 = pneg %p140
      %p286 = pneg %p137
      %p287 = pneg %p161
      %p288 = pneg %p158
      %p289 = pneg %p182
      %p290 = pneg %p179
      %p291 = pneg %p210
      %p292 = pneg %p207
      %s293 = smul.u32 16, %s23
      %p294 = scmp.lt.s32.totalorder %s22, 1
      %s295 = scalar_select %p294, %s22, 1
      %p296 = scmp.lt.s32.totalorder %s293, 31
      %s297 = scalar_select %p296, %s293, 31
      %s298 = smul.addr %s295, 32
      %s299 = sadd.s32 %s297, %s298
      %s300 = smul.addr %s299, 8
      %s301 = scalar_lea.vmem %s7, %s300
      %p302 = scmp.lt.s32.totalorder %s22, 1
      %s303 = scalar_select %p302, %s22, 1
      %s304 = smul.addr %s303, 54
      %s305 = smul.addr %s304, 8
      %s306 = scalar_lea.vmem %s0, %s305
      %p307 = scmp.lt.s32.totalorder %s22, 1
      %s308 = scalar_select %p307, %s22, 1
      %s309 = smul.addr %s308, 54
      %s310 = smul.addr %s309, 8
      %s311 = scalar_lea.vmem %s4, %s310
      %s312 = smul.u32 16, %s23
      %p313 = scmp.lt.s32.totalorder %s22, 1
      %s314 = scalar_select %p313, %s22, 1
      %p315 = scmp.lt.s32.totalorder %s312, 31
      %s316 = scalar_select %p315, %s312, 31
      %s317 = smul.addr %s314, 32
      %s318 = sadd.s32 %s316, %s317
      %s319 = smul.addr %s318, 8
      %s320 = scalar_lea.vmem %s7, %s319
      %s321 = smul.u32 16, %s23
      %v323 = vld [vmem:[%s1] sm:$0x1]
      %v324 = vld [vmem:[%s2] sm:$0x1]
      %s325 = smul.u32 %s23, 8
      %s326 = smul.u32 %s325, 24
      %s327 = scalar_lea.vmem %s306, %s326
      %v328 = vld [vmem:[%s327] sm:$0xff]
      %v329 = vld [vmem:[%s327 + $0x8] sm:$0xff]
      %v330 = vld [vmem:[%s327 + $0x10] sm:$0x3]
      %v331 = vld [vmem:[%s327 + $0x18] sm:$0xff]
      %v332 = vld [vmem:[%s327 + $0x20] sm:$0xff]
      %v333 = vld [vmem:[%s327 + $0x28] sm:$0x3]
      %v334 = vld [vmem:[%s327 + $0x30] sm:$0xff]
      %v335 = vld [vmem:[%s327 + $0x38] sm:$0xff]
      %v336 = vld [vmem:[%s327 + $0x40] sm:$0x3]
      %v337 = vld [vmem:[%s327 + $0x48] sm:$0xff]
      %v338 = vld [vmem:[%s327 + $0x50] sm:$0xff]
      %v339 = vld [vmem:[%s327 + $0x58] sm:$0x3]
      %v340 = vld [vmem:[%s327 + $0x60] sm:$0xff]
      %v341 = vld [vmem:[%s327 + $0x68] sm:$0xff]
      %v342 = vld [vmem:[%s327 + $0x70] sm:$0x3]
      %v343 = vld [vmem:[%s327 + $0x78] sm:$0xff]
      %v344 = vld [vmem:[%s327 + $0x80] sm:$0xff]
      %v345 = vld [vmem:[%s327 + $0x88] sm:$0x3]
      %v346 = vld [vmem:[%s327 + $0x90] sm:$0xff]
      %v347 = vld [vmem:[%s327 + $0x98] sm:$0xff]
      %v348 = vld [vmem:[%s327 + $0xa0] sm:$0x3]
      %v349 = vld [vmem:[%s327 + $0xa8] sm:$0xff]
      %v350 = vld [vmem:[%s327 + $0xb0] sm:$0xff]
      %v351 = vld [vmem:[%s327 + $0xb8] sm:$0x3]
      %v352 = vld [vmem:[%s327 + $0xc0] sm:$0xff]
      %v353 = vld [vmem:[%s327 + $0xc8] sm:$0xff]
      %v354 = vld [vmem:[%s327 + $0xd0] sm:$0x3]
      %v355 = vld [vmem:[%s327 + $0xd8] sm:$0xff]
      %v356 = vld [vmem:[%s327 + $0xe0] sm:$0xff]
      %v357 = vld [vmem:[%s327 + $0xe8] sm:$0x3]
      %v358 = vstv %s325
      %v359 = vadd.s32 %v358, 1
      %v360 = vadd.s32 %v358, 2
      %v361 = vadd.s32 %v358, 3
      %v362 = vadd.s32 %v358, 4
      %v363 = vadd.s32 %v358, 5
      %v364 = vadd.s32 %v358, 6
      %v365 = vadd.s32 %v358, 7
      %v366 = vadd.s32 %v358, 8
      %v367 = vadd.s32 %v358, 9
      %v368 = vlaneseq
      %v369 = vshrl.u32 %v368, 7
      %v370 = vadd.s32 %v369, 8
      %v371 = vadd.s32 %v369, 16
      %vm372 = vcmp.ge.s32.totalorder %v358, 1
      %vm373 = vcmp.ge.s32.totalorder %v359, 1
      %vm374 = vcmp.ge.s32.totalorder %v360, 1
      %vm375 = vcmp.ge.s32.totalorder %v361, 1
      %vm376 = vcmp.ge.s32.totalorder %v362, 1
      %vm377 = vcmp.ge.s32.totalorder %v363, 1
      %vm378 = vcmp.ge.s32.totalorder %v364, 1
      %vm379 = vcmp.ge.s32.totalorder %v365, 1
      %vm380 = vcmp.ge.s32.totalorder %v366, 1
      %vm381 = vcmp.ge.s32.totalorder %v367, 1
      %vm382 = vcmp.le.s32.totalorder %v358, 16
      %vm383 = vcmp.le.s32.totalorder %v359, 16
      %vm384 = vcmp.le.s32.totalorder %v360, 16
      %vm385 = vcmp.le.s32.totalorder %v361, 16
      %vm386 = vcmp.le.s32.totalorder %v362, 16
      %vm387 = vcmp.le.s32.totalorder %v363, 16
      %vm388 = vcmp.le.s32.totalorder %v364, 16
      %vm389 = vcmp.le.s32.totalorder %v365, 16
      %vm390 = vcmp.le.s32.totalorder %v366, 16
      %vm391 = vcmp.le.s32.totalorder %v367, 16
      %vm392 = vmand %vm372, %vm382
      %vm393 = vmand %vm373, %vm383
      %vm394 = vmand %vm374, %vm384
      %vm395 = vmand %vm375, %vm385
      %vm396 = vmand %vm376, %vm386
      %vm397 = vmand %vm377, %vm387
      %vm398 = vmand %vm378, %vm388
      %vm399 = vmand %vm379, %vm389
      %vm400 = vmand %vm380, %vm390
      %vm401 = vmand %vm381, %vm391
      %vm402 = vcmp.ge.s32.totalorder %v369, 1
      %vm403 = vcmp.ge.s32.totalorder %v370, 1
      %vm404 = vcmp.ge.s32.totalorder %v371, 1
      %vm405 = vmand %vm392, %vm402
      %vm406 = vmand %vm392, %vm403
      %vm407 = vmand %vm392, %vm404
      %vm408 = vmand %vm393, %vm402
      %vm409 = vmand %vm393, %vm403
      %vm410 = vmand %vm393, %vm404
      %vm411 = vmand %vm394, %vm402
      %vm412 = vmand %vm394, %vm403
      %vm413 = vmand %vm394, %vm404
      %vm414 = vmand %vm395, %vm402
      %vm415 = vmand %vm395, %vm403
      %vm416 = vmand %vm395, %vm404
      %vm417 = vmand %vm396, %vm402
      %vm418 = vmand %vm396, %vm403
      %vm419 = vmand %vm396, %vm404
      %vm420 = vmand %vm397, %vm402
      %vm421 = vmand %vm397, %vm403
      %vm422 = vmand %vm397, %vm404
      %vm423 = vmand %vm398, %vm402
      %vm424 = vmand %vm398, %vm403
      %vm425 = vmand %vm398, %vm404
      %vm426 = vmand %vm399, %vm402
      %vm427 = vmand %vm399, %vm403
      %vm428 = vmand %vm399, %vm404
      %vm429 = vmand %vm400, %vm402
      %vm430 = vmand %vm400, %vm403
      %vm431 = vmand %vm400, %vm404
      %vm432 = vmand %vm401, %vm402
      %vm433 = vmand %vm401, %vm403
      %vm434 = vmand %vm401, %vm404
      %vm435 = vcmp.le.s32.totalorder %v369, 16
      %vm436 = vcmp.le.s32.totalorder %v370, 16
      %vm437 = vcmp.le.s32.totalorder %v371, 16
      %vm438 = vmand %vm405, %vm435
      %vm439 = vmand %vm406, %vm436
      %vm440 = vmand %vm407, %vm437
      %vm441 = vmand %vm408, %vm435
      %vm442 = vmand %vm409, %vm436
      %vm443 = vmand %vm410, %vm437
      %vm444 = vmand %vm411, %vm435
      %vm445 = vmand %vm412, %vm436
      %vm446 = vmand %vm413, %vm437
      %vm447 = vmand %vm414, %vm435
      %vm448 = vmand %vm415, %vm436
      %vm449 = vmand %vm416, %vm437
      %vm450 = vmand %vm417, %vm435
      %vm451 = vmand %vm418, %vm436
      %vm452 = vmand %vm419, %vm437
      %vm453 = vmand %vm420, %vm435
      %vm454 = vmand %vm421, %vm436
      %vm455 = vmand %vm422, %vm437
      %vm456 = vmand %vm423, %vm435
      %vm457 = vmand %vm424, %vm436
      %vm458 = vmand %vm425, %vm437
      %vm459 = vmand %vm426, %vm435
      %vm460 = vmand %vm427, %vm436
      %vm461 = vmand %vm428, %vm437
      %vm462 = vmand %vm429, %vm435
      %vm463 = vmand %vm430, %vm436
      %vm464 = vmand %vm431, %vm437
      %vm465 = vmand %vm432, %vm435
      %vm466 = vmand %vm433, %vm436
      %vm467 = vmand %vm434, %vm437
      %v469 = vperm.slane %v323, 0
      %v471 = vmul.f32 %v328, %v469
      %v472 = vmul.f32 %v329, %v469
      %v473 = vmul.f32 %v330, %v469
      %v474 = vmul.f32 %v331, %v469
      %v475 = vmul.f32 %v332, %v469
      %v476 = vmul.f32 %v333, %v469
      %v477 = vmul.f32 %v334, %v469
      %v478 = vmul.f32 %v335, %v469
      %v479 = vmul.f32 %v336, %v469
      %v480 = vmul.f32 %v337, %v469
      %v481 = vmul.f32 %v338, %v469
      %v482 = vmul.f32 %v339, %v469
      %v483 = vmul.f32 %v340, %v469
      %v484 = vmul.f32 %v341, %v469
      %v485 = vmul.f32 %v342, %v469
      %v486 = vmul.f32 %v343, %v469
      %v487 = vmul.f32 %v344, %v469
      %v488 = vmul.f32 %v345, %v469
      %v489 = vmul.f32 %v346, %v469
      %v490 = vmul.f32 %v347, %v469
      %v491 = vmul.f32 %v348, %v469
      %v492 = vmul.f32 %v349, %v469
      %v493 = vmul.f32 %v350, %v469
      %v494 = vmul.f32 %v351, %v469
      %v495 = vmul.f32 %v352, %v469
      %v496 = vmul.f32 %v353, %v469
      %v497 = vmul.f32 %v354, %v469
      %v498 = vmul.f32 %v355, %v469
      %v499 = vmul.f32 %v356, %v469
      %v500 = vmul.f32 %v357, %v469
      %v502 = vperm.slane %v324, 0
      %v504 = vadd.f32 %v471, %v502
      %v505 = vadd.f32 %v472, %v502
      %v506 = vadd.f32 %v473, %v502
      %v507 = vadd.f32 %v474, %v502
      %v508 = vadd.f32 %v475, %v502
      %v509 = vadd.f32 %v476, %v502
      %v510 = vadd.f32 %v477, %v502
      %v511 = vadd.f32 %v478, %v502
      %v512 = vadd.f32 %v479, %v502
      %v513 = vadd.f32 %v480, %v502
      %v514 = vadd.f32 %v481, %v502
      %v515 = vadd.f32 %v482, %v502
      %v516 = vadd.f32 %v483, %v502
      %v517 = vadd.f32 %v484, %v502
      %v518 = vadd.f32 %v485, %v502
      %v519 = vadd.f32 %v486, %v502
      %v520 = vadd.f32 %v487, %v502
      %v521 = vadd.f32 %v488, %v502
      %v522 = vadd.f32 %v489, %v502
      %v523 = vadd.f32 %v490, %v502
      %v524 = vadd.f32 %v491, %v502
      %v525 = vadd.f32 %v492, %v502
      %v526 = vadd.f32 %v493, %v502
      %v527 = vadd.f32 %v494, %v502
      %v528 = vadd.f32 %v495, %v502
      %v529 = vadd.f32 %v496, %v502
      %v530 = vadd.f32 %v497, %v502
      %v531 = vadd.f32 %v498, %v502
      %v532 = vadd.f32 %v499, %v502
      %v533 = vadd.f32 %v500, %v502
      %v534 = vmax.f32 %v504, 0.0
      %v535 = vmax.f32 %v505, 0.0
      %v536 = vmax.f32 %v506, 0.0
      %v537 = vmax.f32 %v507, 0.0
      %v538 = vmax.f32 %v508, 0.0
      %v539 = vmax.f32 %v509, 0.0
      %v540 = vmax.f32 %v510, 0.0
      %v541 = vmax.f32 %v511, 0.0
      %v542 = vmax.f32 %v512, 0.0
      %v543 = vmax.f32 %v513, 0.0
      %v544 = vmax.f32 %v514, 0.0
      %v545 = vmax.f32 %v515, 0.0
      %v546 = vmax.f32 %v516, 0.0
      %v547 = vmax.f32 %v517, 0.0
      %v548 = vmax.f32 %v518, 0.0
      %v549 = vmax.f32 %v519, 0.0
      %v550 = vmax.f32 %v520, 0.0
      %v551 = vmax.f32 %v521, 0.0
      %v552 = vmax.f32 %v522, 0.0
      %v553 = vmax.f32 %v523, 0.0
      %v554 = vmax.f32 %v524, 0.0
      %v555 = vmax.f32 %v525, 0.0
      %v556 = vmax.f32 %v526, 0.0
      %v557 = vmax.f32 %v527, 0.0
      %v558 = vmax.f32 %v528, 0.0
      %v559 = vmax.f32 %v529, 0.0
      %v560 = vmax.f32 %v530, 0.0
      %v561 = vmax.f32 %v531, 0.0
      %v562 = vmax.f32 %v532, 0.0
      %v563 = vmax.f32 %v533, 0.0
      %v564 = vsel %vm438, 1, 0
      %v565 = vsel %vm439, 1, 0
      %v566 = vsel %vm440, 1, 0
      %v567 = vsel %vm441, 1, 0
      %v568 = vsel %vm442, 1, 0
      %v569 = vsel %vm443, 1, 0
      %v570 = vsel %vm444, 1, 0
      %v571 = vsel %vm445, 1, 0
      %v572 = vsel %vm446, 1, 0
      %v573 = vsel %vm447, 1, 0
      %v574 = vsel %vm448, 1, 0
      %v575 = vsel %vm449, 1, 0
      %v576 = vsel %vm450, 1, 0
      %v577 = vsel %vm451, 1, 0
      %v578 = vsel %vm452, 1, 0
      %v579 = vsel %vm453, 1, 0
      %v580 = vsel %vm454, 1, 0
      %v581 = vsel %vm455, 1, 0
      %v582 = vsel %vm456, 1, 0
      %v583 = vsel %vm457, 1, 0
      %v584 = vsel %vm458, 1, 0
      %v585 = vsel %vm459, 1, 0
      %v586 = vsel %vm460, 1, 0
      %v587 = vsel %vm461, 1, 0
      %v588 = vsel %vm462, 1, 0
      %v589 = vsel %vm463, 1, 0
      %v590 = vsel %vm464, 1, 0
      %v591 = vsel %vm465, 1, 0
      %v592 = vsel %vm466, 1, 0
      %v593 = vsel %vm467, 1, 0
      %vm594 = vcmp.eq.s32.totalorder %v564, 1
      %vm595 = vcmp.eq.s32.totalorder %v565, 1
      %vm596 = vcmp.eq.s32.totalorder %v566, 1
      %vm597 = vcmp.eq.s32.totalorder %v567, 1
      %vm598 = vcmp.eq.s32.totalorder %v568, 1
      %vm599 = vcmp.eq.s32.totalorder %v569, 1
      %vm600 = vcmp.eq.s32.totalorder %v570, 1
      %vm601 = vcmp.eq.s32.totalorder %v571, 1
      %vm602 = vcmp.eq.s32.totalorder %v572, 1
      %vm603 = vcmp.eq.s32.totalorder %v573, 1
      %vm604 = vcmp.eq.s32.totalorder %v574, 1
      %vm605 = vcmp.eq.s32.totalorder %v575, 1
      %vm606 = vcmp.eq.s32.totalorder %v576, 1
      %vm607 = vcmp.eq.s32.totalorder %v577, 1
      %vm608 = vcmp.eq.s32.totalorder %v578, 1
      %vm609 = vcmp.eq.s32.totalorder %v579, 1
      %vm610 = vcmp.eq.s32.totalorder %v580, 1
      %vm611 = vcmp.eq.s32.totalorder %v581, 1
      %vm612 = vcmp.eq.s32.totalorder %v582, 1
      %vm613 = vcmp.eq.s32.totalorder %v583, 1
      %vm614 = vcmp.eq.s32.totalorder %v584, 1
      %vm615 = vcmp.eq.s32.totalorder %v585, 1
      %vm616 = vcmp.eq.s32.totalorder %v586, 1
      %vm617 = vcmp.eq.s32.totalorder %v587, 1
      %vm618 = vcmp.eq.s32.totalorder %v588, 1
      %vm619 = vcmp.eq.s32.totalorder %v589, 1
      %vm620 = vcmp.eq.s32.totalorder %v590, 1
      %vm621 = vcmp.eq.s32.totalorder %v591, 1
      %vm622 = vcmp.eq.s32.totalorder %v592, 1
      %vm623 = vcmp.eq.s32.totalorder %v593, 1
      %v624 = vsel %vm594, %v534, 0.0
      %v625 = vsel %vm595, %v535, 0.0
      %v626 = vsel %vm596, %v536, 0.0
      %v627 = vsel %vm597, %v537, 0.0
      %v628 = vsel %vm598, %v538, 0.0
      %v629 = vsel %vm599, %v539, 0.0
      %v630 = vsel %vm600, %v540, 0.0
      %v631 = vsel %vm601, %v541, 0.0
      %v632 = vsel %vm602, %v542, 0.0
      %v633 = vsel %vm603, %v543, 0.0
      %v634 = vsel %vm604, %v544, 0.0
      %v635 = vsel %vm605, %v545, 0.0
      %v636 = vsel %vm606, %v546, 0.0
      %v637 = vsel %vm607, %v547, 0.0
      %v638 = vsel %vm608, %v548, 0.0
      %v639 = vsel %vm609, %v549, 0.0
      %v640 = vsel %vm610, %v550, 0.0
      %v641 = vsel %vm611, %v551, 0.0
      %v642 = vsel %vm612, %v552, 0.0
      %v643 = vsel %vm613, %v553, 0.0
      %v644 = vsel %vm614, %v554, 0.0
      %v645 = vsel %vm615, %v555, 0.0
      %v646 = vsel %vm616, %v556, 0.0
      %v647 = vsel %vm617, %v557, 0.0
      %v648 = vsel %vm618, %v558, 0.0
      %v649 = vsel %vm619, %v559, 0.0
      %v650 = vsel %vm620, %v560, 0.0
      %v651 = vsel %vm621, %v561, 0.0
      %v652 = vsel %vm622, %v562, 0.0
      %v653 = vsel %vm623, %v563, 0.0
      %vm654 = vcmask 64512
      %655 = vst.msk [vmem:[#allocation2] sm:$0xff] %vm654, %v624
      %656 = vst.msk [vmem:[#allocation2 + $0x8] sm:$0xff] %vm654, %v625
      %vm657 = vcmask 58368
      %658 = vst.msk [vmem:[#allocation2 + $0x10] sm:$0x3] %vm657, %v626
      %659 = vst.msk [vmem:[#allocation2 + $0x18] sm:$0xff] %vm654, %v627
      %660 = vst.msk [vmem:[#allocation2 + $0x20] sm:$0xff] %vm654, %v628
      %661 = vst.msk [vmem:[#allocation2 + $0x28] sm:$0x3] %vm657, %v629
      %662 = vst.msk [vmem:[#allocation2 + $0x30] sm:$0xff] %vm654, %v630
      %663 = vst.msk [vmem:[#allocation2 + $0x38] sm:$0xff] %vm654, %v631
      %664 = vst.msk [vmem:[#allocation2 + $0x40] sm:$0x3] %vm657, %v632
      %665 = vst.msk [vmem:[#allocation2 + $0x48] sm:$0xff] %vm654, %v633
      %666 = vst.msk [vmem:[#allocation2 + $0x50] sm:$0xff] %vm654, %v634
      %667 = vst.msk [vmem:[#allocation2 + $0x58] sm:$0x3] %vm657, %v635
      %668 = vst.msk [vmem:[#allocation2 + $0x60] sm:$0xff] %vm654, %v636
      %669 = vst.msk [vmem:[#allocation2 + $0x68] sm:$0xff] %vm654, %v637
      %670 = vst.msk [vmem:[#allocation2 + $0x70] sm:$0x3] %vm657, %v638
      %671 = vst.msk [vmem:[#allocation2 + $0x78] sm:$0xff] %vm654, %v639
      %672 = vst.msk [vmem:[#allocation2 + $0x80] sm:$0xff] %vm654, %v640
      %673 = vst.msk [vmem:[#allocation2 + $0x88] sm:$0x3] %vm657, %v641
      %674 = vst.msk [vmem:[#allocation2 + $0x90] sm:$0xff] %vm654, %v642
      %675 = vst.msk [vmem:[#allocation2 + $0x98] sm:$0xff] %vm654, %v643
      %676 = vst.msk [vmem:[#allocation2 + $0xa0] sm:$0x3] %vm657, %v644
      %677 = vst.msk [vmem:[#allocation2 + $0xa8] sm:$0xff] %vm654, %v645
      %678 = vst.msk [vmem:[#allocation2 + $0xb0] sm:$0xff] %vm654, %v646
      %679 = vst.msk [vmem:[#allocation2 + $0xb8] sm:$0x3] %vm657, %v647
      %680 = vst.msk [vmem:[#allocation2 + $0xc0] sm:$0xff] %vm654, %v648
      %681 = vst.msk [vmem:[#allocation2 + $0xc8] sm:$0xff] %vm654, %v649
      %682 = vst.msk [vmem:[#allocation2 + $0xd0] sm:$0x3] %vm657, %v650
      %683 = vst.msk [vmem:[#allocation2 + $0xd8] sm:$0xff] %vm654, %v651
      %684 = vst.msk [vmem:[#allocation2 + $0xe0] sm:$0xff] %vm654, %v652
      %685 = vst.msk [vmem:[#allocation2 + $0xe8] sm:$0x3] %vm657, %v653
      %v686 = vld [vmem:[#allocation2] sm:$0xff]
      %v687 = vld [vmem:[#allocation2 + $0x8] sm:$0xff]
      %v688 = vld [vmem:[#allocation2 + $0x18] sm:$0xff]
      %v689 = vld [vmem:[#allocation2 + $0x20] sm:$0xff]
      %v690 = vld [vmem:[#allocation2 + $0x30] sm:$0xff]
      %v691 = vld [vmem:[#allocation2 + $0x38] sm:$0xff]
      %v692 = vld [vmem:[#allocation2 + $0x48] sm:$0xff]
      %v693 = vld [vmem:[#allocation2 + $0x50] sm:$0xff]
      %v694 = vld [vmem:[#allocation2 + $0x60] sm:$0xff]
      %v695 = vld [vmem:[#allocation2 + $0x68] sm:$0xff]
      %v696 = vld [vmem:[#allocation2 + $0x78] sm:$0xff]
      %v697 = vld [vmem:[#allocation2 + $0x80] sm:$0xff]
      %v698 = vld [vmem:[#allocation2 + $0x90] sm:$0xff]
      %v699 = vld [vmem:[#allocation2 + $0x98] sm:$0xff]
      %v700 = vld [vmem:[#allocation2 + $0xa8] sm:$0xff]
      %v701 = vld [vmem:[#allocation2 + $0xb0] sm:$0xff]
      %v702 = vpack.c.bf16 %v687, %v686
      %v703 = vpack.c.bf16 %v689, %v688
      %v704 = vpack.c.bf16 %v691, %v690
      %v705 = vpack.c.bf16 %v693, %v692
      %v706 = vpack.c.bf16 %v695, %v694
      %v707 = vpack.c.bf16 %v697, %v696
      %v708 = vpack.c.bf16 %v699, %v698
      %v709 = vpack.c.bf16 %v701, %v700
      %v710 = vld [vmem:[%s3] sm:$0xf]
      %v711 = vld [vmem:[#allocation2 + $0x1] sm:$0xff]
      %v712 = vld [vmem:[#allocation2 + $0x9] sm:$0xff]
      %v713 = vld [vmem:[#allocation2 + $0x19] sm:$0xff]
      %v714 = vld [vmem:[#allocation2 + $0x21] sm:$0xff]
      %v715 = vld [vmem:[#allocation2 + $0x31] sm:$0xff]
      %v716 = vld [vmem:[#allocation2 + $0x39] sm:$0xff]
      %v717 = vld [vmem:[#allocation2 + $0x49] sm:$0xff]
      %v718 = vld [vmem:[#allocation2 + $0x51] sm:$0xff]
      %v719 = vld [vmem:[#allocation2 + $0x61] sm:$0xff]
      %v720 = vld [vmem:[#allocation2 + $0x69] sm:$0xff]
      %v721 = vld [vmem:[#allocation2 + $0x79] sm:$0xff]
      %v722 = vld [vmem:[#allocation2 + $0x81] sm:$0xff]
      %v723 = vld [vmem:[#allocation2 + $0x91] sm:$0xff]
      %v724 = vld [vmem:[#allocation2 + $0x99] sm:$0xff]
      %v725 = vld [vmem:[#allocation2 + $0xa9] sm:$0xff]
      %v726 = vld [vmem:[#allocation2 + $0xb1] sm:$0xff]
      %v727 = vpack.c.bf16 %v712, %v711
      %v728 = vpack.c.bf16 %v714, %v713
      %v729 = vpack.c.bf16 %v716, %v715
      %v730 = vpack.c.bf16 %v718, %v717
      %v731 = vpack.c.bf16 %v720, %v719
      %v732 = vpack.c.bf16 %v722, %v721
      %v733 = vpack.c.bf16 %v724, %v723
      %v734 = vpack.c.bf16 %v726, %v725
      %s735 = scalar_lea.vmem %s3, 4
      %v736 = vld [vmem:[%s735] sm:$0xf]
      %v738 = vsel %vm654, %v727, 0
      %v741 = vsel %vm654, %v728, 0
      %v744 = vsel %vm654, %v729, 0
      %v747 = vsel %vm654, %v730, 0
      %v750 = vsel %vm654, %v731, 0
      %v753 = vsel %vm654, %v732, 0
      %v756 = vsel %vm654, %v733, 0
      %v759 = vsel %vm654, %v734, 0
      %vm761 = vcmask 1043456
      %v763 = vsel %vm761, %v736, 0
      %765 = vmatpush.bf16.msra.mxu0 0
      %766 = vmatpush.bf16.msra.mxu0 0
      %767 = vmatpush.bf16.msra.mxu0 0
      %768 = vmatpush.bf16.msra.mxu0 0
      %769 = vmatpush.bf16.msra.mxu0 0
      %770 = vmatpush.bf16.msra.mxu0 0
      %771 = vmatpush.bf16.msra.mxu0 0
      %772 = vmatpush.bf16.msra.mxu0 %v763
      %773 = vmatmul.bf16.gmra.mxu0 %v738
      %v774 = vpop.f32.mrf.mxu0
      %v775 = vadd.f32 0.0, %v774
      %v776 = vpop.f32.mrf.mxu0
      %v777 = vadd.f32 0.0, %v776
      %778 = vmatmul.bf16.gmra.mxu0 %v741
      %v779 = vpop.f32.mrf.mxu0
      %v780 = vadd.f32 0.0, %v779
      %v781 = vpop.f32.mrf.mxu0
      %v782 = vadd.f32 0.0, %v781
      %783 = vmatmul.bf16.gmra.mxu0 %v744
      %v784 = vpop.f32.mrf.mxu0
      %v785 = vadd.f32 0.0, %v784
      %v786 = vpop.f32.mrf.mxu0
      %v787 = vadd.f32 0.0, %v786
      %788 = vmatmul.bf16.gmra.mxu0 %v747
      %v789 = vpop.f32.mrf.mxu0
      %v790 = vadd.f32 0.0, %v789
      %v791 = vpop.f32.mrf.mxu0
      %v792 = vadd.f32 0.0, %v791
      %793 = vmatmul.bf16.gmra.mxu0 %v750
      %v794 = vpop.f32.mrf.mxu0
      %v795 = vadd.f32 0.0, %v794
      %v796 = vpop.f32.mrf.mxu0
      %v797 = vadd.f32 0.0, %v796
      %798 = vmatmul.bf16.gmra.mxu0 %v753
      %v799 = vpop.f32.mrf.mxu0
      %v800 = vadd.f32 0.0, %v799
      %v801 = vpop.f32.mrf.mxu0
      %v802 = vadd.f32 0.0, %v801
      %803 = vmatmul.bf16.gmra.mxu0 %v756
      %v804 = vpop.f32.mrf.mxu0
      %v805 = vadd.f32 0.0, %v804
      %v806 = vpop.f32.mrf.mxu0
      %v807 = vadd.f32 0.0, %v806
      %808 = vmatmul.bf16.gmra.mxu0 %v759
      %v809 = vpop.f32.mrf.mxu0
      %v810 = vadd.f32 0.0, %v809
      %v811 = vpop.f32.mrf.mxu0
      %v812 = vadd.f32 0.0, %v811
      %813 = vdwg.mxu0
      %v815 = vsel %vm654, %v702, 0
      %v818 = vsel %vm654, %v703, 0
      %v821 = vsel %vm654, %v704, 0
      %v824 = vsel %vm654, %v705, 0
      %v827 = vsel %vm654, %v706, 0
      %v830 = vsel %vm654, %v707, 0
      %v833 = vsel %vm654, %v708, 0
      %v836 = vsel %vm654, %v709, 0
      %v839 = vsel %vm761, %v710, 0
      %841 = vmatpush.bf16.msra.mxu0 0
      %842 = vmatpush.bf16.msra.mxu0 0
      %843 = vmatpush.bf16.msra.mxu0 0
      %844 = vmatpush.bf16.msra.mxu0 0
      %845 = vmatpush.bf16.msra.mxu0 0
      %846 = vmatpush.bf16.msra.mxu0 0
      %847 = vmatpush.bf16.msra.mxu0 0
      %848 = vmatpush.bf16.msra.mxu0 %v839
      %849 = vmatmul.bf16.gmra.mxu0 %v815
      %v850 = vpop.f32.mrf.mxu0
      %v851 = vadd.f32 %v775, %v850
      %v852 = vpop.f32.mrf.mxu0
      %v853 = vadd.f32 %v777, %v852
      %854 = vmatmul.bf16.gmra.mxu0 %v818
      %v855 = vpop.f32.mrf.mxu0
      %v856 = vadd.f32 %v780, %v855
      %v857 = vpop.f32.mrf.mxu0
      %v858 = vadd.f32 %v782, %v857
      %859 = vmatmul.bf16.gmra.mxu0 %v821
      %v860 = vpop.f32.mrf.mxu0
      %v861 = vadd.f32 %v785, %v860
      %v862 = vpop.f32.mrf.mxu0
      %v863 = vadd.f32 %v787, %v862
      %864 = vmatmul.bf16.gmra.mxu0 %v824
      %v865 = vpop.f32.mrf.mxu0
      %v866 = vadd.f32 %v790, %v865
      %v867 = vpop.f32.mrf.mxu0
      %v868 = vadd.f32 %v792, %v867
      %869 = vmatmul.bf16.gmra.mxu0 %v827
      %v870 = vpop.f32.mrf.mxu0
      %v871 = vadd.f32 %v795, %v870
      %v872 = vpop.f32.mrf.mxu0
      %v873 = vadd.f32 %v797, %v872
      %874 = vmatmul.bf16.gmra.mxu0 %v830
      %v875 = vpop.f32.mrf.mxu0
      %v876 = vadd.f32 %v800, %v875
      %v877 = vpop.f32.mrf.mxu0
      %v878 = vadd.f32 %v802, %v877
      %879 = vmatmul.bf16.gmra.mxu0 %v833
      %v880 = vpop.f32.mrf.mxu0
      %v881 = vadd.f32 %v805, %v880
      %v882 = vpop.f32.mrf.mxu0
      %v883 = vadd.f32 %v807, %v882
      %884 = vmatmul.bf16.gmra.mxu0 %v836
      %v885 = vpop.f32.mrf.mxu0
      %v886 = vadd.f32 %v810, %v885
      %v887 = vpop.f32.mrf.mxu0
      %v888 = vadd.f32 %v812, %v887
      %889 = vdwg.mxu0
      %v890 = vld [vmem:[#allocation2 + $0x2] sm:$0xff]
      %v891 = vld [vmem:[#allocation2 + $0xa] sm:$0xff]
      %v892 = vld [vmem:[#allocation2 + $0x1a] sm:$0xff]
      %v893 = vld [vmem:[#allocation2 + $0x22] sm:$0xff]
      %v894 = vld [vmem:[#allocation2 + $0x32] sm:$0xff]
      %v895 = vld [vmem:[#allocation2 + $0x3a] sm:$0xff]
      %v896 = vld [vmem:[#allocation2 + $0x4a] sm:$0xff]
      %v897 = vld [vmem:[#allocation2 + $0x52] sm:$0xff]
      %v898 = vld [vmem:[#allocation2 + $0x62] sm:$0xff]
      %v899 = vld [vmem:[#allocation2 + $0x6a] sm:$0xff]
      %v900 = vld [vmem:[#allocation2 + $0x7a] sm:$0xff]
      %v901 = vld [vmem:[#allocation2 + $0x82] sm:$0xff]
      %v902 = vld [vmem:[#allocation2 + $0x92] sm:$0xff]
      %v903 = vld [vmem:[#allocation2 + $0x9a] sm:$0xff]
      %v904 = vld [vmem:[#allocation2 + $0xaa] sm:$0xff]
      %v905 = vld [vmem:[#allocation2 + $0xb2] sm:$0xff]
      %v906 = vpack.c.bf16 %v891, %v890
      %v907 = vpack.c.bf16 %v893, %v892
      %v908 = vpack.c.bf16 %v895, %v894
      %v909 = vpack.c.bf16 %v897, %v896
      %v910 = vpack.c.bf16 %v899, %v898
      %v911 = vpack.c.bf16 %v901, %v900
      %v912 = vpack.c.bf16 %v903, %v902
      %v913 = vpack.c.bf16 %v905, %v904
      %s914 = scalar_lea.vmem %s3, 8
      %v915 = vld [vmem:[%s914] sm:$0xf]
      %v917 = vsel %vm654, %v906, 0
      %v920 = vsel %vm654, %v907, 0
      %v923 = vsel %vm654, %v908, 0
      %v926 = vsel %vm654, %v909, 0
      %v929 = vsel %vm654, %v910, 0
      %v932 = vsel %vm654, %v911, 0
      %v935 = vsel %vm654, %v912, 0
      %v938 = vsel %vm654, %v913, 0
      %v941 = vsel %vm761, %v915, 0
      %943 = vmatpush.bf16.msra.mxu0 0
      %944 = vmatpush.bf16.msra.mxu0 0
      %945 = vmatpush.bf16.msra.mxu0 0
      %946 = vmatpush.bf16.msra.mxu0 0
      %947 = vmatpush.bf16.msra.mxu0 0
      %948 = vmatpush.bf16.msra.mxu0 0
      %949 = vmatpush.bf16.msra.mxu0 0
      %950 = vmatpush.bf16.msra.mxu0 %v941
      %951 = vmatmul.bf16.gmra.mxu0 %v917
      %v952 = vpop.f32.mrf.mxu0
      %v953 = vadd.f32 0.0, %v952
      %v954 = vpop.f32.mrf.mxu0
      %v955 = vadd.f32 0.0, %v954
      %956 = vmatmul.bf16.gmra.mxu0 %v920
      %v957 = vpop.f32.mrf.mxu0
      %v958 = vadd.f32 0.0, %v957
      %v959 = vpop.f32.mrf.mxu0
      %v960 = vadd.f32 0.0, %v959
      %961 = vmatmul.bf16.gmra.mxu0 %v923
      %v962 = vpop.f32.mrf.mxu0
      %v963 = vadd.f32 0.0, %v962
      %v964 = vpop.f32.mrf.mxu0
      %v965 = vadd.f32 0.0, %v964
      %966 = vmatmul.bf16.gmra.mxu0 %v926
      %v967 = vpop.f32.mrf.mxu0
      %v968 = vadd.f32 0.0, %v967
      %v969 = vpop.f32.mrf.mxu0
      %v970 = vadd.f32 0.0, %v969
      %971 = vmatmul.bf16.gmra.mxu0 %v929
      %v972 = vpop.f32.mrf.mxu0
      %v973 = vadd.f32 0.0, %v972
      %v974 = vpop.f32.mrf.mxu0
      %v975 = vadd.f32 0.0, %v974
      %976 = vmatmul.bf16.gmra.mxu0 %v932
      %v977 = vpop.f32.mrf.mxu0
      %v978 = vadd.f32 0.0, %v977
      %v979 = vpop.f32.mrf.mxu0
      %v980 = vadd.f32 0.0, %v979
      %981 = vmatmul.bf16.gmra.mxu0 %v935
      %v982 = vpop.f32.mrf.mxu0
      %v983 = vadd.f32 0.0, %v982
      %v984 = vpop.f32.mrf.mxu0
      %v985 = vadd.f32 0.0, %v984
      %986 = vmatmul.bf16.gmra.mxu0 %v938
      %v987 = vpop.f32.mrf.mxu0
      %v988 = vadd.f32 0.0, %v987
      %v989 = vpop.f32.mrf.mxu0
      %v990 = vadd.f32 0.0, %v989
      %991 = vdwg.mxu0
      %v992 = vadd.f32 %v851, %v953
      %v993 = vadd.f32 %v853, %v955
      %v994 = vadd.f32 %v856, %v958
      %v995 = vadd.f32 %v858, %v960
      %v996 = vadd.f32 %v861, %v963
      %v997 = vadd.f32 %v863, %v965
      %v998 = vadd.f32 %v866, %v968
      %v999 = vadd.f32 %v868, %v970
      %v1000 = vadd.f32 %v871, %v973
      %v1001 = vadd.f32 %v873, %v975
      %v1002 = vadd.f32 %v876, %v978
      %v1003 = vadd.f32 %v878, %v980
      %v1004 = vadd.f32 %v881, %v983
      %v1005 = vadd.f32 %v883, %v985
      %v1006 = vadd.f32 %v886, %v988
      %v1007 = vadd.f32 %v888, %v990
      %s1008 = scalar_lea.vmem [#allocation2], 24
      %v1009 = vld [vmem:[%s1008] sm:$0xff]
      %v1010 = vld [vmem:[%s1008 + $0x8] sm:$0xff]
      %v1011 = vld [vmem:[%s1008 + $0x18] sm:$0xff]
      %v1012 = vld [vmem:[%s1008 + $0x20] sm:$0xff]
      %v1013 = vld [vmem:[%s1008 + $0x30] sm:$0xff]
      %v1014 = vld [vmem:[%s1008 + $0x38] sm:$0xff]
      %v1015 = vld [vmem:[%s1008 + $0x48] sm:$0xff]
      %v1016 = vld [vmem:[%s1008 + $0x50] sm:$0xff]
      %v1017 = vld [vmem:[%s1008 + $0x60] sm:$0xff]
      %v1018 = vld [vmem:[%s1008 + $0x68] sm:$0xff]
      %v1019 = vld [vmem:[%s1008 + $0x78] sm:$0xff]
      %v1020 = vld [vmem:[%s1008 + $0x80] sm:$0xff]
      %v1021 = vld [vmem:[%s1008 + $0x90] sm:$0xff]
      %v1022 = vld [vmem:[%s1008 + $0x98] sm:$0xff]
      %v1023 = vld [vmem:[%s1008 + $0xa8] sm:$0xff]
      %v1024 = vld [vmem:[%s1008 + $0xb0] sm:$0xff]
      %v1025 = vpack.c.bf16 %v1010, %v1009
      %v1026 = vpack.c.bf16 %v1012, %v1011
      %v1027 = vpack.c.bf16 %v1014, %v1013
      %v1028 = vpack.c.bf16 %v1016, %v1015
      %v1029 = vpack.c.bf16 %v1018, %v1017
      %v1030 = vpack.c.bf16 %v1020, %v1019
      %v1031 = vpack.c.bf16 %v1022, %v1021
      %v1032 = vpack.c.bf16 %v1024, %v1023
      %s1033 = scalar_lea.vmem %s3, 12
      %v1034 = vld [vmem:[%s1033] sm:$0xf]
      %v1036 = vsel %vm654, %v1025, 0
      %v1039 = vsel %vm654, %v1026, 0
      %v1042 = vsel %vm654, %v1027, 0
      %v1045 = vsel %vm654, %v1028, 0
      %v1048 = vsel %vm654, %v1029, 0
      %v1051 = vsel %vm654, %v1030, 0
      %v1054 = vsel %vm654, %v1031, 0
      %v1057 = vsel %vm654, %v1032, 0
      %v1060 = vsel %vm761, %v1034, 0
      %1062 = vmatpush.bf16.msra.mxu0 0
      %1063 = vmatpush.bf16.msra.mxu0 0
      %1064 = vmatpush.bf16.msra.mxu0 0
      %1065 = vmatpush.bf16.msra.mxu0 0
      %1066 = vmatpush.bf16.msra.mxu0 0
      %1067 = vmatpush.bf16.msra.mxu0 0
      %1068 = vmatpush.bf16.msra.mxu0 0
      %1069 = vmatpush.bf16.msra.mxu0 %v1060
      %1070 = vmatmul.bf16.gmra.mxu0 %v1036
      %v1071 = vpop.f32.mrf.mxu0
      %v1072 = vadd.f32 0.0, %v1071
      %v1073 = vpop.f32.mrf.mxu0
      %v1074 = vadd.f32 0.0, %v1073
      %1075 = vmatmul.bf16.gmra.mxu0 %v1039
      %v1076 = vpop.f32.mrf.mxu0
      %v1077 = vadd.f32 0.0, %v1076
      %v1078 = vpop.f32.mrf.mxu0
      %v1079 = vadd.f32 0.0, %v1078
      %1080 = vmatmul.bf16.gmra.mxu0 %v1042
      %v1081 = vpop.f32.mrf.mxu0
      %v1082 = vadd.f32 0.0, %v1081
      %v1083 = vpop.f32.mrf.mxu0
      %v1084 = vadd.f32 0.0, %v1083
      %1085 = vmatmul.bf16.gmra.mxu0 %v1045
      %v1086 = vpop.f32.mrf.mxu0
      %v1087 = vadd.f32 0.0, %v1086
      %v1088 = vpop.f32.mrf.mxu0
      %v1089 = vadd.f32 0.0, %v1088
      %1090 = vmatmul.bf16.gmra.mxu0 %v1048
      %v1091 = vpop.f32.mrf.mxu0
      %v1092 = vadd.f32 0.0, %v1091
      %v1093 = vpop.f32.mrf.mxu0
      %v1094 = vadd.f32 0.0, %v1093
      %1095 = vmatmul.bf16.gmra.mxu0 %v1051
      %v1096 = vpop.f32.mrf.mxu0
      %v1097 = vadd.f32 0.0, %v1096
      %v1098 = vpop.f32.mrf.mxu0
      %v1099 = vadd.f32 0.0, %v1098
      %1100 = vmatmul.bf16.gmra.mxu0 %v1054
      %v1101 = vpop.f32.mrf.mxu0
      %v1102 = vadd.f32 0.0, %v1101
      %v1103 = vpop.f32.mrf.mxu0
      %v1104 = vadd.f32 0.0, %v1103
      %1105 = vmatmul.bf16.gmra.mxu0 %v1057
      %v1106 = vpop.f32.mrf.mxu0
      %v1107 = vadd.f32 0.0, %v1106
      %v1108 = vpop.f32.mrf.mxu0
      %v1109 = vadd.f32 0.0, %v1108
      %1110 = vdwg.mxu0
      %v1111 = vadd.f32 %v992, %v1072
      %v1112 = vadd.f32 %v993, %v1074
      %v1113 = vadd.f32 %v994, %v1077
      %v1114 = vadd.f32 %v995, %v1079
      %v1115 = vadd.f32 %v996, %v1082
      %v1116 = vadd.f32 %v997, %v1084
      %v1117 = vadd.f32 %v998, %v1087
      %v1118 = vadd.f32 %v999, %v1089
      %v1119 = vadd.f32 %v1000, %v1092
      %v1120 = vadd.f32 %v1001, %v1094
      %v1121 = vadd.f32 %v1002, %v1097
      %v1122 = vadd.f32 %v1003, %v1099
      %v1123 = vadd.f32 %v1004, %v1102
      %v1124 = vadd.f32 %v1005, %v1104
      %v1125 = vadd.f32 %v1006, %v1107
      %v1126 = vadd.f32 %v1007, %v1109
      %v1127 = vld [vmem:[%s1008 + $0x1] sm:$0xff]
      %v1128 = vld [vmem:[%s1008 + $0x9] sm:$0xff]
      %v1129 = vld [vmem:[%s1008 + $0x19] sm:$0xff]
      %v1130 = vld [vmem:[%s1008 + $0x21] sm:$0xff]
      %v1131 = vld [vmem:[%s1008 + $0x31] sm:$0xff]
      %v1132 = vld [vmem:[%s1008 + $0x39] sm:$0xff]
      %v1133 = vld [vmem:[%s1008 + $0x49] sm:$0xff]
      %v1134 = vld [vmem:[%s1008 + $0x51] sm:$0xff]
      %v1135 = vld [vmem:[%s1008 + $0x61] sm:$0xff]
      %v1136 = vld [vmem:[%s1008 + $0x69] sm:$0xff]
      %v1137 = vld [vmem:[%s1008 + $0x79] sm:$0xff]
      %v1138 = vld [vmem:[%s1008 + $0x81] sm:$0xff]
      %v1139 = vld [vmem:[%s1008 + $0x91] sm:$0xff]
      %v1140 = vld [vmem:[%s1008 + $0x99] sm:$0xff]
      %v1141 = vld [vmem:[%s1008 + $0xa9] sm:$0xff]
      %v1142 = vld [vmem:[%s1008 + $0xb1] sm:$0xff]
      %v1143 = vpack.c.bf16 %v1128, %v1127
      %v1144 = vpack.c.bf16 %v1130, %v1129
      %v1145 = vpack.c.bf16 %v1132, %v1131
      %v1146 = vpack.c.bf16 %v1134, %v1133
      %v1147 = vpack.c.bf16 %v1136, %v1135
      %v1148 = vpack.c.bf16 %v1138, %v1137
      %v1149 = vpack.c.bf16 %v1140, %v1139
      %v1150 = vpack.c.bf16 %v1142, %v1141
      %s1151 = scalar_lea.vmem %s3, 16
      %v1152 = vld [vmem:[%s1151] sm:$0xf]
      %v1154 = vsel %vm654, %v1143, 0
      %v1157 = vsel %vm654, %v1144, 0
      %v1160 = vsel %vm654, %v1145, 0
      %v1163 = vsel %vm654, %v1146, 0
      %v1166 = vsel %vm654, %v1147, 0
      %v1169 = vsel %vm654, %v1148, 0
      %v1172 = vsel %vm654, %v1149, 0
      %v1175 = vsel %vm654, %v1150, 0
      %v1178 = vsel %vm761, %v1152, 0
      %1180 = vmatpush.bf16.msra.mxu0 0
      %1181 = vmatpush.bf16.msra.mxu0 0
      %1182 = vmatpush.bf16.msra.mxu0 0
      %1183 = vmatpush.bf16.msra.mxu0 0
      %1184 = vmatpush.bf16.msra.mxu0 0
      %1185 = vmatpush.bf16.msra.mxu0 0
      %1186 = vmatpush.bf16.msra.mxu0 0
      %1187 = vmatpush.bf16.msra.mxu0 %v1178
      %1188 = vmatmul.bf16.gmra.mxu0 %v1154
      %v1189 = vpop.f32.mrf.mxu0
      %v1190 = vadd.f32 0.0, %v1189
      %v1191 = vpop.f32.mrf.mxu0
      %v1192 = vadd.f32 0.0, %v1191
      %1193 = vmatmul.bf16.gmra.mxu0 %v1157
      %v1194 = vpop.f32.mrf.mxu0
      %v1195 = vadd.f32 0.0, %v1194
      %v1196 = vpop.f32.mrf.mxu0
      %v1197 = vadd.f32 0.0, %v1196
      %1198 = vmatmul.bf16.gmra.mxu0 %v1160
      %v1199 = vpop.f32.mrf.mxu0
      %v1200 = vadd.f32 0.0, %v1199
      %v1201 = vpop.f32.mrf.mxu0
      %v1202 = vadd.f32 0.0, %v1201
      %1203 = vmatmul.bf16.gmra.mxu0 %v1163
      %v1204 = vpop.f32.mrf.mxu0
      %v1205 = vadd.f32 0.0, %v1204
      %v1206 = vpop.f32.mrf.mxu0
      %v1207 = vadd.f32 0.0, %v1206
      %1208 = vmatmul.bf16.gmra.mxu0 %v1166
      %v1209 = vpop.f32.mrf.mxu0
      %v1210 = vadd.f32 0.0, %v1209
      %v1211 = vpop.f32.mrf.mxu0
      %v1212 = vadd.f32 0.0, %v1211
      %1213 = vmatmul.bf16.gmra.mxu0 %v1169
      %v1214 = vpop.f32.mrf.mxu0
      %v1215 = vadd.f32 0.0, %v1214
      %v1216 = vpop.f32.mrf.mxu0
      %v1217 = vadd.f32 0.0, %v1216
      %1218 = vmatmul.bf16.gmra.mxu0 %v1172
      %v1219 = vpop.f32.mrf.mxu0
      %v1220 = vadd.f32 0.0, %v1219
      %v1221 = vpop.f32.mrf.mxu0
      %v1222 = vadd.f32 0.0, %v1221
      %1223 = vmatmul.bf16.gmra.mxu0 %v1175
      %v1224 = vpop.f32.mrf.mxu0
      %v1225 = vadd.f32 0.0, %v1224
      %v1226 = vpop.f32.mrf.mxu0
      %v1227 = vadd.f32 0.0, %v1226
      %1228 = vdwg.mxu0
      %v1229 = vadd.f32 %v1111, %v1190
      %v1230 = vadd.f32 %v1112, %v1192
      %v1231 = vadd.f32 %v1113, %v1195
      %v1232 = vadd.f32 %v1114, %v1197
      %v1233 = vadd.f32 %v1115, %v1200
      %v1234 = vadd.f32 %v1116, %v1202
      %v1235 = vadd.f32 %v1117, %v1205
      %v1236 = vadd.f32 %v1118, %v1207
      %v1237 = vadd.f32 %v1119, %v1210
      %v1238 = vadd.f32 %v1120, %v1212
      %v1239 = vadd.f32 %v1121, %v1215
      %v1240 = vadd.f32 %v1122, %v1217
      %v1241 = vadd.f32 %v1123, %v1220
      %v1242 = vadd.f32 %v1124, %v1222
      %v1243 = vadd.f32 %v1125, %v1225
      %v1244 = vadd.f32 %v1126, %v1227
      %v1245 = vld [vmem:[%s1008 + $0x2] sm:$0xff]
      %v1246 = vld [vmem:[%s1008 + $0xa] sm:$0xff]
      %v1247 = vld [vmem:[%s1008 + $0x1a] sm:$0xff]
      %v1248 = vld [vmem:[%s1008 + $0x22] sm:$0xff]
      %v1249 = vld [vmem:[%s1008 + $0x32] sm:$0xff]
      %v1250 = vld [vmem:[%s1008 + $0x3a] sm:$0xff]
      %v1251 = vld [vmem:[%s1008 + $0x4a] sm:$0xff]
      %v1252 = vld [vmem:[%s1008 + $0x52] sm:$0xff]
      %v1253 = vld [vmem:[%s1008 + $0x62] sm:$0xff]
      %v1254 = vld [vmem:[%s1008 + $0x6a] sm:$0xff]
      %v1255 = vld [vmem:[%s1008 + $0x7a] sm:$0xff]
      %v1256 = vld [vmem:[%s1008 + $0x82] sm:$0xff]
      %v1257 = vld [vmem:[%s1008 + $0x92] sm:$0xff]
      %v1258 = vld [vmem:[%s1008 + $0x9a] sm:$0xff]
      %v1259 = vld [vmem:[%s1008 + $0xaa] sm:$0xff]
      %v1260 = vld [vmem:[%s1008 + $0xb2] sm:$0xff]
      %v1261 = vpack.c.bf16 %v1246, %v1245
      %v1262 = vpack.c.bf16 %v1248, %v1247
      %v1263 = vpack.c.bf16 %v1250, %v1249
      %v1264 = vpack.c.bf16 %v1252, %v1251
      %v1265 = vpack.c.bf16 %v1254, %v1253
      %v1266 = vpack.c.bf16 %v1256, %v1255
      %v1267 = vpack.c.bf16 %v1258, %v1257
      %v1268 = vpack.c.bf16 %v1260, %v1259
      %s1269 = scalar_lea.vmem %s3, 20
      %v1270 = vld [vmem:[%s1269] sm:$0xf]
      %v1272 = vsel %vm654, %v1261, 0
      %v1275 = vsel %vm654, %v1262, 0
      %v1278 = vsel %vm654, %v1263, 0
      %v1281 = vsel %vm654, %v1264, 0
      %v1284 = vsel %vm654, %v1265, 0
      %v1287 = vsel %vm654, %v1266, 0
      %v1290 = vsel %vm654, %v1267, 0
      %v1293 = vsel %vm654, %v1268, 0
      %v1296 = vsel %vm761, %v1270, 0
      %1298 = vmatpush.bf16.msra.mxu0 0
      %1299 = vmatpush.bf16.msra.mxu0 0
      %1300 = vmatpush.bf16.msra.mxu0 0
      %1301 = vmatpush.bf16.msra.mxu0 0
      %1302 = vmatpush.bf16.msra.mxu0 0
      %1303 = vmatpush.bf16.msra.mxu0 0
      %1304 = vmatpush.bf16.msra.mxu0 0
      %1305 = vmatpush.bf16.msra.mxu0 %v1296
      %1306 = vmatmul.bf16.gmra.mxu0 %v1272
      %v1307 = vpop.f32.mrf.mxu0
      %v1308 = vadd.f32 0.0, %v1307
      %v1309 = vpop.f32.mrf.mxu0
      %v1310 = vadd.f32 0.0, %v1309
      %1311 = vmatmul.bf16.gmra.mxu0 %v1275
      %v1312 = vpop.f32.mrf.mxu0
      %v1313 = vadd.f32 0.0, %v1312
      %v1314 = vpop.f32.mrf.mxu0
      %v1315 = vadd.f32 0.0, %v1314
      %1316 = vmatmul.bf16.gmra.mxu0 %v1278
      %v1317 = vpop.f32.mrf.mxu0
      %v1318 = vadd.f32 0.0, %v1317
      %v1319 = vpop.f32.mrf.mxu0
      %v1320 = vadd.f32 0.0, %v1319
      %1321 = vmatmul.bf16.gmra.mxu0 %v1281
      %v1322 = vpop.f32.mrf.mxu0
      %v1323 = vadd.f32 0.0, %v1322
      %v1324 = vpop.f32.mrf.mxu0
      %v1325 = vadd.f32 0.0, %v1324
      %1326 = vmatmul.bf16.gmra.mxu0 %v1284
      %v1327 = vpop.f32.mrf.mxu0
      %v1328 = vadd.f32 0.0, %v1327
      %v1329 = vpop.f32.mrf.mxu0
      %v1330 = vadd.f32 0.0, %v1329
      %1331 = vmatmul.bf16.gmra.mxu0 %v1287
      %v1332 = vpop.f32.mrf.mxu0
      %v1333 = vadd.f32 0.0, %v1332
      %v1334 = vpop.f32.mrf.mxu0
      %v1335 = vadd.f32 0.0, %v1334
      %1336 = vmatmul.bf16.gmra.mxu0 %v1290
      %v1337 = vpop.f32.mrf.mxu0
      %v1338 = vadd.f32 0.0, %v1337
      %v1339 = vpop.f32.mrf.mxu0
      %v1340 = vadd.f32 0.0, %v1339
      %1341 = vmatmul.bf16.gmra.mxu0 %v1293
      %v1342 = vpop.f32.mrf.mxu0
      %v1343 = vadd.f32 0.0, %v1342
      %v1344 = vpop.f32.mrf.mxu0
      %v1345 = vadd.f32 0.0, %v1344
      %1346 = vdwg.mxu0
      %v1347 = vadd.f32 %v1229, %v1308
      %v1348 = vadd.f32 %v1230, %v1310
      %v1349 = vadd.f32 %v1231, %v1313
      %v1350 = vadd.f32 %v1232, %v1315
      %v1351 = vadd.f32 %v1233, %v1318
      %v1352 = vadd.f32 %v1234, %v1320
      %v1353 = vadd.f32 %v1235, %v1323
      %v1354 = vadd.f32 %v1236, %v1325
      %v1355 = vadd.f32 %v1237, %v1328
      %v1356 = vadd.f32 %v1238, %v1330
      %v1357 = vadd.f32 %v1239, %v1333
      %v1358 = vadd.f32 %v1240, %v1335
      %v1359 = vadd.f32 %v1241, %v1338
      %v1360 = vadd.f32 %v1242, %v1340
      %v1361 = vadd.f32 %v1243, %v1343
      %v1362 = vadd.f32 %v1244, %v1345
      %s1363 = scalar_lea.vmem [#allocation2], 48
      %v1364 = vld [vmem:[%s1363] sm:$0xff]
      %v1365 = vld [vmem:[%s1363 + $0x8] sm:$0xff]
      %v1366 = vld [vmem:[%s1363 + $0x18] sm:$0xff]
      %v1367 = vld [vmem:[%s1363 + $0x20] sm:$0xff]
      %v1368 = vld [vmem:[%s1363 + $0x30] sm:$0xff]
      %v1369 = vld [vmem:[%s1363 + $0x38] sm:$0xff]
      %v1370 = vld [vmem:[%s1363 + $0x48] sm:$0xff]
      %v1371 = vld [vmem:[%s1363 + $0x50] sm:$0xff]
      %v1372 = vld [vmem:[%s1363 + $0x60] sm:$0xff]
      %v1373 = vld [vmem:[%s1363 + $0x68] sm:$0xff]
      %v1374 = vld [vmem:[%s1363 + $0x78] sm:$0xff]
      %v1375 = vld [vmem:[%s1363 + $0x80] sm:$0xff]
      %v1376 = vld [vmem:[%s1363 + $0x90] sm:$0xff]
      %v1377 = vld [vmem:[%s1363 + $0x98] sm:$0xff]
      %v1378 = vld [vmem:[%s1363 + $0xa8] sm:$0xff]
      %v1379 = vld [vmem:[%s1363 + $0xb0] sm:$0xff]
      %v1380 = vpack.c.bf16 %v1365, %v1364
      %v1381 = vpack.c.bf16 %v1367, %v1366
      %v1382 = vpack.c.bf16 %v1369, %v1368
      %v1383 = vpack.c.bf16 %v1371, %v1370
      %v1384 = vpack.c.bf16 %v1373, %v1372
      %v1385 = vpack.c.bf16 %v1375, %v1374
      %v1386 = vpack.c.bf16 %v1377, %v1376
      %v1387 = vpack.c.bf16 %v1379, %v1378
      %s1388 = scalar_lea.vmem %s3, 24
      %v1389 = vld [vmem:[%s1388] sm:$0xf]
      %v1391 = vsel %vm654, %v1380, 0
      %v1394 = vsel %vm654, %v1381, 0
      %v1397 = vsel %vm654, %v1382, 0
      %v1400 = vsel %vm654, %v1383, 0
      %v1403 = vsel %vm654, %v1384, 0
      %v1406 = vsel %vm654, %v1385, 0
      %v1409 = vsel %vm654, %v1386, 0
      %v1412 = vsel %vm654, %v1387, 0
      %v1415 = vsel %vm761, %v1389, 0
      %1417 = vmatpush.bf16.msra.mxu0 0
      %1418 = vmatpush.bf16.msra.mxu0 0
      %1419 = vmatpush.bf16.msra.mxu0 0
      %1420 = vmatpush.bf16.msra.mxu0 0
      %1421 = vmatpush.bf16.msra.mxu0 0
      %1422 = vmatpush.bf16.msra.mxu0 0
      %1423 = vmatpush.bf16.msra.mxu0 0
      %1424 = vmatpush.bf16.msra.mxu0 %v1415
      %1425 = vmatmul.bf16.gmra.mxu0 %v1391
      %v1426 = vpop.f32.mrf.mxu0
      %v1427 = vadd.f32 0.0, %v1426
      %v1428 = vpop.f32.mrf.mxu0
      %v1429 = vadd.f32 0.0, %v1428
      %1430 = vmatmul.bf16.gmra.mxu0 %v1394
      %v1431 = vpop.f32.mrf.mxu0
      %v1432 = vadd.f32 0.0, %v1431
      %v1433 = vpop.f32.mrf.mxu0
      %v1434 = vadd.f32 0.0, %v1433
      %1435 = vmatmul.bf16.gmra.mxu0 %v1397
      %v1436 = vpop.f32.mrf.mxu0
      %v1437 = vadd.f32 0.0, %v1436
      %v1438 = vpop.f32.mrf.mxu0
      %v1439 = vadd.f32 0.0, %v1438
      %1440 = vmatmul.bf16.gmra.mxu0 %v1400
      %v1441 = vpop.f32.mrf.mxu0
      %v1442 = vadd.f32 0.0, %v1441
      %v1443 = vpop.f32.mrf.mxu0
      %v1444 = vadd.f32 0.0, %v1443
      %1445 = vmatmul.bf16.gmra.mxu0 %v1403
      %v1446 = vpop.f32.mrf.mxu0
      %v1447 = vadd.f32 0.0, %v1446
      %v1448 = vpop.f32.mrf.mxu0
      %v1449 = vadd.f32 0.0, %v1448
      %1450 = vmatmul.bf16.gmra.mxu0 %v1406
      %v1451 = vpop.f32.mrf.mxu0
      %v1452 = vadd.f32 0.0, %v1451
      %v1453 = vpop.f32.mrf.mxu0
      %v1454 = vadd.f32 0.0, %v1453
      %1455 = vmatmul.bf16.gmra.mxu0 %v1409
      %v1456 = vpop.f32.mrf.mxu0
      %v1457 = vadd.f32 0.0, %v1456
      %v1458 = vpop.f32.mrf.mxu0
      %v1459 = vadd.f32 0.0, %v1458
      %1460 = vmatmul.bf16.gmra.mxu0 %v1412
      %v1461 = vpop.f32.mrf.mxu0
      %v1462 = vadd.f32 0.0, %v1461
      %v1463 = vpop.f32.mrf.mxu0
      %v1464 = vadd.f32 0.0, %v1463
      %1465 = vdwg.mxu0
      %v1466 = vadd.f32 %v1347, %v1427
      %v1467 = vadd.f32 %v1348, %v1429
      %v1468 = vadd.f32 %v1349, %v1432
      %v1469 = vadd.f32 %v1350, %v1434
      %v1470 = vadd.f32 %v1351, %v1437
      %v1471 = vadd.f32 %v1352, %v1439
      %v1472 = vadd.f32 %v1353, %v1442
      %v1473 = vadd.f32 %v1354, %v1444
      %v1474 = vadd.f32 %v1355, %v1447
      %v1475 = vadd.f32 %v1356, %v1449
      %v1476 = vadd.f32 %v1357, %v1452
      %v1477 = vadd.f32 %v1358, %v1454
      %v1478 = vadd.f32 %v1359, %v1457
      %v1479 = vadd.f32 %v1360, %v1459
      %v1480 = vadd.f32 %v1361, %v1462
      %v1481 = vadd.f32 %v1362, %v1464
      %v1482 = vld [vmem:[%s1363 + $0x1] sm:$0xff]
      %v1483 = vld [vmem:[%s1363 + $0x9] sm:$0xff]
      %v1484 = vld [vmem:[%s1363 + $0x19] sm:$0xff]
      %v1485 = vld [vmem:[%s1363 + $0x21] sm:$0xff]
      %v1486 = vld [vmem:[%s1363 + $0x31] sm:$0xff]
      %v1487 = vld [vmem:[%s1363 + $0x39] sm:$0xff]
      %v1488 = vld [vmem:[%s1363 + $0x49] sm:$0xff]
      %v1489 = vld [vmem:[%s1363 + $0x51] sm:$0xff]
      %v1490 = vld [vmem:[%s1363 + $0x61] sm:$0xff]
      %v1491 = vld [vmem:[%s1363 + $0x69] sm:$0xff]
      %v1492 = vld [vmem:[%s1363 + $0x79] sm:$0xff]
      %v1493 = vld [vmem:[%s1363 + $0x81] sm:$0xff]
      %v1494 = vld [vmem:[%s1363 + $0x91] sm:$0xff]
      %v1495 = vld [vmem:[%s1363 + $0x99] sm:$0xff]
      %v1496 = vld [vmem:[%s1363 + $0xa9] sm:$0xff]
      %v1497 = vld [vmem:[%s1363 + $0xb1] sm:$0xff]
      %v1498 = vpack.c.bf16 %v1483, %v1482
      %v1499 = vpack.c.bf16 %v1485, %v1484
      %v1500 = vpack.c.bf16 %v1487, %v1486
      %v1501 = vpack.c.bf16 %v1489, %v1488
      %v1502 = vpack.c.bf16 %v1491, %v1490
      %v1503 = vpack.c.bf16 %v1493, %v1492
      %v1504 = vpack.c.bf16 %v1495, %v1494
      %v1505 = vpack.c.bf16 %v1497, %v1496
      %s1506 = scalar_lea.vmem %s3, 28
      %v1507 = vld [vmem:[%s1506] sm:$0xf]
      %v1509 = vsel %vm654, %v1498, 0
      %v1512 = vsel %vm654, %v1499, 0
      %v1515 = vsel %vm654, %v1500, 0
      %v1518 = vsel %vm654, %v1501, 0
      %v1521 = vsel %vm654, %v1502, 0
      %v1524 = vsel %vm654, %v1503, 0
      %v1527 = vsel %vm654, %v1504, 0
      %v1530 = vsel %vm654, %v1505, 0
      %v1533 = vsel %vm761, %v1507, 0
      %1535 = vmatpush.bf16.msra.mxu0 0
      %1536 = vmatpush.bf16.msra.mxu0 0
      %1537 = vmatpush.bf16.msra.mxu0 0
      %1538 = vmatpush.bf16.msra.mxu0 0
      %1539 = vmatpush.bf16.msra.mxu0 0
      %1540 = vmatpush.bf16.msra.mxu0 0
      %1541 = vmatpush.bf16.msra.mxu0 0
      %1542 = vmatpush.bf16.msra.mxu0 %v1533
      %1543 = vmatmul.bf16.gmra.mxu0 %v1509
      %v1544 = vpop.f32.mrf.mxu0
      %v1545 = vadd.f32 0.0, %v1544
      %v1546 = vpop.f32.mrf.mxu0
      %v1547 = vadd.f32 0.0, %v1546
      %1548 = vmatmul.bf16.gmra.mxu0 %v1512
      %v1549 = vpop.f32.mrf.mxu0
      %v1550 = vadd.f32 0.0, %v1549
      %v1551 = vpop.f32.mrf.mxu0
      %v1552 = vadd.f32 0.0, %v1551
      %1553 = vmatmul.bf16.gmra.mxu0 %v1515
      %v1554 = vpop.f32.mrf.mxu0
      %v1555 = vadd.f32 0.0, %v1554
      %v1556 = vpop.f32.mrf.mxu0
      %v1557 = vadd.f32 0.0, %v1556
      %1558 = vmatmul.bf16.gmra.mxu0 %v1518
      %v1559 = vpop.f32.mrf.mxu0
      %v1560 = vadd.f32 0.0, %v1559
      %v1561 = vpop.f32.mrf.mxu0
      %v1562 = vadd.f32 0.0, %v1561
      %1563 = vmatmul.bf16.gmra.mxu0 %v1521
      %v1564 = vpop.f32.mrf.mxu0
      %v1565 = vadd.f32 0.0, %v1564
      %v1566 = vpop.f32.mrf.mxu0
      %v1567 = vadd.f32 0.0, %v1566
      %1568 = vmatmul.bf16.gmra.mxu0 %v1524
      %v1569 = vpop.f32.mrf.mxu0
      %v1570 = vadd.f32 0.0, %v1569
      %v1571 = vpop.f32.mrf.mxu0
      %v1572 = vadd.f32 0.0, %v1571
      %1573 = vmatmul.bf16.gmra.mxu0 %v1527
      %v1574 = vpop.f32.mrf.mxu0
      %v1575 = vadd.f32 0.0, %v1574
      %v1576 = vpop.f32.mrf.mxu0
      %v1577 = vadd.f32 0.0, %v1576
      %1578 = vmatmul.bf16.gmra.mxu0 %v1530
      %v1579 = vpop.f32.mrf.mxu0
      %v1580 = vadd.f32 0.0, %v1579
      %v1581 = vpop.f32.mrf.mxu0
      %v1582 = vadd.f32 0.0, %v1581
      %1583 = vdwg.mxu0
      %v1584 = vadd.f32 %v1466, %v1545
      %v1585 = vadd.f32 %v1467, %v1547
      %v1586 = vadd.f32 %v1468, %v1550
      %v1587 = vadd.f32 %v1469, %v1552
      %v1588 = vadd.f32 %v1470, %v1555
      %v1589 = vadd.f32 %v1471, %v1557
      %v1590 = vadd.f32 %v1472, %v1560
      %v1591 = vadd.f32 %v1473, %v1562
      %v1592 = vadd.f32 %v1474, %v1565
      %v1593 = vadd.f32 %v1475, %v1567
      %v1594 = vadd.f32 %v1476, %v1570
      %v1595 = vadd.f32 %v1477, %v1572
      %v1596 = vadd.f32 %v1478, %v1575
      %v1597 = vadd.f32 %v1479, %v1577
      %v1598 = vadd.f32 %v1480, %v1580
      %v1599 = vadd.f32 %v1481, %v1582
      %v1600 = vld [vmem:[%s1363 + $0x2] sm:$0xff]
      %v1601 = vld [vmem:[%s1363 + $0xa] sm:$0xff]
      %v1602 = vld [vmem:[%s1363 + $0x1a] sm:$0xff]
      %v1603 = vld [vmem:[%s1363 + $0x22] sm:$0xff]
      %v1604 = vld [vmem:[%s1363 + $0x32] sm:$0xff]
      %v1605 = vld [vmem:[%s1363 + $0x3a] sm:$0xff]
      %v1606 = vld [vmem:[%s1363 + $0x4a] sm:$0xff]
      %v1607 = vld [vmem:[%s1363 + $0x52] sm:$0xff]
      %v1608 = vld [vmem:[%s1363 + $0x62] sm:$0xff]
      %v1609 = vld [vmem:[%s1363 + $0x6a] sm:$0xff]
      %v1610 = vld [vmem:[%s1363 + $0x7a] sm:$0xff]
      %v1611 = vld [vmem:[%s1363 + $0x82] sm:$0xff]
      %v1612 = vld [vmem:[%s1363 + $0x92] sm:$0xff]
      %v1613 = vld [vmem:[%s1363 + $0x9a] sm:$0xff]
      %v1614 = vld [vmem:[%s1363 + $0xaa] sm:$0xff]
      %v1615 = vld [vmem:[%s1363 + $0xb2] sm:$0xff]
      %v1616 = vpack.c.bf16 %v1601, %v1600
      %v1617 = vpack.c.bf16 %v1603, %v1602
      %v1618 = vpack.c.bf16 %v1605, %v1604
      %v1619 = vpack.c.bf16 %v1607, %v1606
      %v1620 = vpack.c.bf16 %v1609, %v1608
      %v1621 = vpack.c.bf16 %v1611, %v1610
      %v1622 = vpack.c.bf16 %v1613, %v1612
      %v1623 = vpack.c.bf16 %v1615, %v1614
      %s1624 = scalar_lea.vmem %s3, 32
      %v1625 = vld [vmem:[%s1624] sm:$0xf]
      %v1627 = vsel %vm654, %v1616, 0
      %v1630 = vsel %vm654, %v1617, 0
      %v1633 = vsel %vm654, %v1618, 0
      %v1636 = vsel %vm654, %v1619, 0
      %v1639 = vsel %vm654, %v1620, 0
      %v1642 = vsel %vm654, %v1621, 0
      %v1645 = vsel %vm654, %v1622, 0
      %v1648 = vsel %vm654, %v1623, 0
      %v1651 = vsel %vm761, %v1625, 0
      %1653 = vmatpush.bf16.msra.mxu0 0
      %1654 = vmatpush.bf16.msra.mxu0 0
      %1655 = vmatpush.bf16.msra.mxu0 0
      %1656 = vmatpush.bf16.msra.mxu0 0
      %1657 = vmatpush.bf16.msra.mxu0 0
      %1658 = vmatpush.bf16.msra.mxu0 0
      %1659 = vmatpush.bf16.msra.mxu0 0
      %1660 = vmatpush.bf16.msra.mxu0 %v1651
      %1661 = vmatmul.bf16.gmra.mxu0 %v1627
      %v1662 = vpop.f32.mrf.mxu0
      %v1663 = vadd.f32 0.0, %v1662
      %v1664 = vpop.f32.mrf.mxu0
      %v1665 = vadd.f32 0.0, %v1664
      %1666 = vmatmul.bf16.gmra.mxu0 %v1630
      %v1667 = vpop.f32.mrf.mxu0
      %v1668 = vadd.f32 0.0, %v1667
      %v1669 = vpop.f32.mrf.mxu0
      %v1670 = vadd.f32 0.0, %v1669
      %1671 = vmatmul.bf16.gmra.mxu0 %v1633
      %v1672 = vpop.f32.mrf.mxu0
      %v1673 = vadd.f32 0.0, %v1672
      %v1674 = vpop.f32.mrf.mxu0
      %v1675 = vadd.f32 0.0, %v1674
      %1676 = vmatmul.bf16.gmra.mxu0 %v1636
      %v1677 = vpop.f32.mrf.mxu0
      %v1678 = vadd.f32 0.0, %v1677
      %v1679 = vpop.f32.mrf.mxu0
      %v1680 = vadd.f32 0.0, %v1679
      %1681 = vmatmul.bf16.gmra.mxu0 %v1639
      %v1682 = vpop.f32.mrf.mxu0
      %v1683 = vadd.f32 0.0, %v1682
      %v1684 = vpop.f32.mrf.mxu0
      %v1685 = vadd.f32 0.0, %v1684
      %1686 = vmatmul.bf16.gmra.mxu0 %v1642
      %v1687 = vpop.f32.mrf.mxu0
      %v1688 = vadd.f32 0.0, %v1687
      %v1689 = vpop.f32.mrf.mxu0
      %v1690 = vadd.f32 0.0, %v1689
      %1691 = vmatmul.bf16.gmra.mxu0 %v1645
      %v1692 = vpop.f32.mrf.mxu0
      %v1693 = vadd.f32 0.0, %v1692
      %v1694 = vpop.f32.mrf.mxu0
      %v1695 = vadd.f32 0.0, %v1694
      %1696 = vmatmul.bf16.gmra.mxu0 %v1648
      %v1697 = vpop.f32.mrf.mxu0
      %v1698 = vadd.f32 0.0, %v1697
      %v1699 = vpop.f32.mrf.mxu0
      %v1700 = vadd.f32 0.0, %v1699
      %1701 = vdwg.mxu0
      %v1702 = vadd.f32 %v1584, %v1663
      %v1703 = vadd.f32 %v1585, %v1665
      %v1704 = vadd.f32 %v1586, %v1668
      %v1705 = vadd.f32 %v1587, %v1670
      %v1706 = vadd.f32 %v1588, %v1673
      %v1707 = vadd.f32 %v1589, %v1675
      %v1708 = vadd.f32 %v1590, %v1678
      %v1709 = vadd.f32 %v1591, %v1680
      %v1710 = vadd.f32 %v1592, %v1683
      %v1711 = vadd.f32 %v1593, %v1685
      %v1712 = vadd.f32 %v1594, %v1688
      %v1713 = vadd.f32 %v1595, %v1690
      %v1714 = vadd.f32 %v1596, %v1693
      %v1715 = vadd.f32 %v1597, %v1695
      %v1716 = vadd.f32 %v1598, %v1698
      %v1717 = vadd.f32 %v1599, %v1700
      %s1718 = scalar_lea.vmem %s311, %s326
      %v1719 = vld [vmem:[%s1718] sm:$0xff]
      %v1720 = vld [vmem:[%s1718 + $0x8] sm:$0xff]
      %v1721 = vld [vmem:[%s1718 + $0x10] sm:$0x3]
      %v1722 = vld [vmem:[%s1718 + $0x18] sm:$0xff]
      %v1723 = vld [vmem:[%s1718 + $0x20] sm:$0xff]
      %v1724 = vld [vmem:[%s1718 + $0x28] sm:$0x3]
      %v1725 = vld [vmem:[%s1718 + $0x30] sm:$0xff]
      %v1726 = vld [vmem:[%s1718 + $0x38] sm:$0xff]
      %v1727 = vld [vmem:[%s1718 + $0x40] sm:$0x3]
      %v1728 = vld [vmem:[%s1718 + $0x48] sm:$0xff]
      %v1729 = vld [vmem:[%s1718 + $0x50] sm:$0xff]
      %v1730 = vld [vmem:[%s1718 + $0x58] sm:$0x3]
      %v1731 = vld [vmem:[%s1718 + $0x60] sm:$0xff]
      %v1732 = vld [vmem:[%s1718 + $0x68] sm:$0xff]
      %v1733 = vld [vmem:[%s1718 + $0x70] sm:$0x3]
      %v1734 = vld [vmem:[%s1718 + $0x78] sm:$0xff]
      %v1735 = vld [vmem:[%s1718 + $0x80] sm:$0xff]
      %v1736 = vld [vmem:[%s1718 + $0x88] sm:$0x3]
      %v1737 = vld [vmem:[%s1718 + $0x90] sm:$0xff]
      %v1738 = vld [vmem:[%s1718 + $0x98] sm:$0xff]
      %v1739 = vld [vmem:[%s1718 + $0xa0] sm:$0x3]
      %v1740 = vld [vmem:[%s1718 + $0xa8] sm:$0xff]
      %v1741 = vld [vmem:[%s1718 + $0xb0] sm:$0xff]
      %v1742 = vld [vmem:[%s1718 + $0xb8] sm:$0x3]
      %v1743 = vld [vmem:[%s1718 + $0xc0] sm:$0xff]
      %v1744 = vld [vmem:[%s1718 + $0xc8] sm:$0xff]
      %v1745 = vld [vmem:[%s1718 + $0xd0] sm:$0x3]
      %v1746 = vld [vmem:[%s1718 + $0xd8] sm:$0xff]
      %v1747 = vld [vmem:[%s1718 + $0xe0] sm:$0xff]
      %v1748 = vld [vmem:[%s1718 + $0xe8] sm:$0x3]
      %vm1749 = vcmask 31744
      %1750 = vst.msk [vmem:[#allocation3] sm:$0xff] %vm1749, %v1719
      %1751 = vst.msk [vmem:[#allocation3 + $0x8] sm:$0xff] %vm1749, %v1720
      %vm1752 = vcmask 25600
      %1753 = vst.msk [vmem:[#allocation3 + $0x10] sm:$0x3] %vm1752, %v1721
      %1754 = vst.msk [vmem:[#allocation3 + $0x18] sm:$0xff] %vm1749, %v1722
      %1755 = vst.msk [vmem:[#allocation3 + $0x20] sm:$0xff] %vm1749, %v1723
      %1756 = vst.msk [vmem:[#allocation3 + $0x28] sm:$0x3] %vm1752, %v1724
      %1757 = vst.msk [vmem:[#allocation3 + $0x30] sm:$0xff] %vm1749, %v1725
      %1758 = vst.msk [vmem:[#allocation3 + $0x38] sm:$0xff] %vm1749, %v1726
      %1759 = vst.msk [vmem:[#allocation3 + $0x40] sm:$0x3] %vm1752, %v1727
      %1760 = vst.msk [vmem:[#allocation3 + $0x48] sm:$0xff] %vm1749, %v1728
      %1761 = vst.msk [vmem:[#allocation3 + $0x50] sm:$0xff] %vm1749, %v1729
      %1762 = vst.msk [vmem:[#allocation3 + $0x58] sm:$0x3] %vm1752, %v1730
      %1763 = vst.msk [vmem:[#allocation3 + $0x60] sm:$0xff] %vm1749, %v1731
      %1764 = vst.msk [vmem:[#allocation3 + $0x68] sm:$0xff] %vm1749, %v1732
      %1765 = vst.msk [vmem:[#allocation3 + $0x70] sm:$0x3] %vm1752, %v1733
      %1766 = vst.msk [vmem:[#allocation3 + $0x78] sm:$0xff] %vm1749, %v1734
      %1767 = vst.msk [vmem:[#allocation3 + $0x80] sm:$0xff] %vm1749, %v1735
      %1768 = vst.msk [vmem:[#allocation3 + $0x88] sm:$0x3] %vm1752, %v1736
      %1769 = vst.msk [vmem:[#allocation3 + $0x90] sm:$0xff] %vm1749, %v1737
      %1770 = vst.msk [vmem:[#allocation3 + $0x98] sm:$0xff] %vm1749, %v1738
      %1771 = vst.msk [vmem:[#allocation3 + $0xa0] sm:$0x3] %vm1752, %v1739
      %1772 = vst.msk [vmem:[#allocation3 + $0xa8] sm:$0xff] %vm1749, %v1740
      %1773 = vst.msk [vmem:[#allocation3 + $0xb0] sm:$0xff] %vm1749, %v1741
      %1774 = vst.msk [vmem:[#allocation3 + $0xb8] sm:$0x3] %vm1752, %v1742
      %1775 = vst.msk [vmem:[#allocation3 + $0xc0] sm:$0xff] %vm1749, %v1743
      %1776 = vst.msk [vmem:[#allocation3 + $0xc8] sm:$0xff] %vm1749, %v1744
      %1777 = vst.msk [vmem:[#allocation3 + $0xd0] sm:$0x3] %vm1752, %v1745
      %1778 = vst.msk [vmem:[#allocation3 + $0xd8] sm:$0xff] %vm1749, %v1746
      %1779 = vst.msk [vmem:[#allocation3 + $0xe0] sm:$0xff] %vm1749, %v1747
      %1780 = vst.msk [vmem:[#allocation3 + $0xe8] sm:$0x3] %vm1752, %v1748
      %v1781 = vld [vmem:[#allocation3] sm:$0xff]
      %v1782 = vld [vmem:[#allocation3 + $0x8] sm:$0xff]
      %v1783 = vld [vmem:[#allocation3 + $0x18] sm:$0xff]
      %v1784 = vld [vmem:[#allocation3 + $0x20] sm:$0xff]
      %v1785 = vld [vmem:[#allocation3 + $0x30] sm:$0xff]
      %v1786 = vld [vmem:[#allocation3 + $0x38] sm:$0xff]
      %v1787 = vld [vmem:[#allocation3 + $0x48] sm:$0xff]
      %v1788 = vld [vmem:[#allocation3 + $0x50] sm:$0xff]
      %v1789 = vld [vmem:[#allocation3 + $0x60] sm:$0xff]
      %v1790 = vld [vmem:[#allocation3 + $0x68] sm:$0xff]
      %v1791 = vld [vmem:[#allocation3 + $0x78] sm:$0xff]
      %v1792 = vld [vmem:[#allocation3 + $0x80] sm:$0xff]
      %v1793 = vld [vmem:[#allocation3 + $0x90] sm:$0xff]
      %v1794 = vld [vmem:[#allocation3 + $0x98] sm:$0xff]
      %v1795 = vld [vmem:[#allocation3 + $0xa8] sm:$0xff]
      %v1796 = vld [vmem:[#allocation3 + $0xb0] sm:$0xff]
      %v1797 = vpack.c.bf16 %v1782, %v1781
      %v1798 = vpack.c.bf16 %v1784, %v1783
      %v1799 = vpack.c.bf16 %v1786, %v1785
      %v1800 = vpack.c.bf16 %v1788, %v1787
      %v1801 = vpack.c.bf16 %v1790, %v1789
      %v1802 = vpack.c.bf16 %v1792, %v1791
      %v1803 = vpack.c.bf16 %v1794, %v1793
      %v1804 = vpack.c.bf16 %v1796, %v1795
      %v1805 = vld [vmem:[%s5] sm:$0x3]
      %v1807 = vsel %vm1749, %v1797, 0
      %v1810 = vsel %vm1749, %v1798, 0
      %v1813 = vsel %vm1749, %v1799, 0
      %v1816 = vsel %vm1749, %v1800, 0
      %v1819 = vsel %vm1749, %v1801, 0
      %v1822 = vsel %vm1749, %v1802, 0
      %v1825 = vsel %vm1749, %v1803, 0
      %v1828 = vsel %vm1749, %v1804, 0
      %vm1830 = vcmask 1041408
      %v1832 = vsel %vm1830, %v1805, 0
      %1834 = vmatpush.bf16.msra.mxu0 0
      %1835 = vmatpush.bf16.msra.mxu0 0
      %1836 = vmatpush.bf16.msra.mxu0 0
      %1837 = vmatpush.bf16.msra.mxu0 0
      %1838 = vmatpush.bf16.msra.mxu0 0
      %1839 = vmatpush.bf16.msra.mxu0 0
      %1840 = vmatpush.bf16.msra.mxu0 0
      %1841 = vmatpush.bf16.msra.mxu0 %v1832
      %1842 = vmatmul.bf16.gmra.mxu0 %v1807
      %v1843 = vpop.f32.mrf.mxu0
      %v1844 = vadd.f32 0.0, %v1843
      %v1845 = vpop.f32.mrf.mxu0
      %v1846 = vadd.f32 0.0, %v1845
      %1847 = vmatmul.bf16.gmra.mxu0 %v1810
      %v1848 = vpop.f32.mrf.mxu0
      %v1849 = vadd.f32 0.0, %v1848
      %v1850 = vpop.f32.mrf.mxu0
      %v1851 = vadd.f32 0.0, %v1850
      %1852 = vmatmul.bf16.gmra.mxu0 %v1813
      %v1853 = vpop.f32.mrf.mxu0
      %v1854 = vadd.f32 0.0, %v1853
      %v1855 = vpop.f32.mrf.mxu0
      %v1856 = vadd.f32 0.0, %v1855
      %1857 = vmatmul.bf16.gmra.mxu0 %v1816
      %v1858 = vpop.f32.mrf.mxu0
      %v1859 = vadd.f32 0.0, %v1858
      %v1860 = vpop.f32.mrf.mxu0
      %v1861 = vadd.f32 0.0, %v1860
      %1862 = vmatmul.bf16.gmra.mxu0 %v1819
      %v1863 = vpop.f32.mrf.mxu0
      %v1864 = vadd.f32 0.0, %v1863
      %v1865 = vpop.f32.mrf.mxu0
      %v1866 = vadd.f32 0.0, %v1865
      %1867 = vmatmul.bf16.gmra.mxu0 %v1822
      %v1868 = vpop.f32.mrf.mxu0
      %v1869 = vadd.f32 0.0, %v1868
      %v1870 = vpop.f32.mrf.mxu0
      %v1871 = vadd.f32 0.0, %v1870
      %1872 = vmatmul.bf16.gmra.mxu0 %v1825
      %v1873 = vpop.f32.mrf.mxu0
      %v1874 = vadd.f32 0.0, %v1873
      %v1875 = vpop.f32.mrf.mxu0
      %v1876 = vadd.f32 0.0, %v1875
      %1877 = vmatmul.bf16.gmra.mxu0 %v1828
      %v1878 = vpop.f32.mrf.mxu0
      %v1879 = vadd.f32 0.0, %v1878
      %v1880 = vpop.f32.mrf.mxu0
      %v1881 = vadd.f32 0.0, %v1880
      %1882 = vdwg.mxu0
      %v1883 = vadd.f32 %v1702, %v1844
      %v1884 = vadd.f32 %v1703, %v1846
      %v1885 = vadd.f32 %v1704, %v1849
      %v1886 = vadd.f32 %v1705, %v1851
      %v1887 = vadd.f32 %v1706, %v1854
      %v1888 = vadd.f32 %v1707, %v1856
      %v1889 = vadd.f32 %v1708, %v1859
      %v1890 = vadd.f32 %v1709, %v1861
      %v1891 = vadd.f32 %v1710, %v1864
      %v1892 = vadd.f32 %v1711, %v1866
      %v1893 = vadd.f32 %v1712, %v1869
      %v1894 = vadd.f32 %v1713, %v1871
      %v1895 = vadd.f32 %v1714, %v1874
      %v1896 = vadd.f32 %v1715, %v1876
      %v1897 = vadd.f32 %v1716, %v1879
      %v1898 = vadd.f32 %v1717, %v1881
      %v1899 = vld [vmem:[#allocation3 + $0x1] sm:$0xff]
      %v1900 = vld [vmem:[#allocation3 + $0x9] sm:$0xff]
      %v1901 = vld [vmem:[#allocation3 + $0x19] sm:$0xff]
      %v1902 = vld [vmem:[#allocation3 + $0x21] sm:$0xff]
      %v1903 = vld [vmem:[#allocation3 + $0x31] sm:$0xff]
      %v1904 = vld [vmem:[#allocation3 + $0x39] sm:$0xff]
      %v1905 = vld [vmem:[#allocation3 + $0x49] sm:$0xff]
      %v1906 = vld [vmem:[#allocation3 + $0x51] sm:$0xff]
      %v1907 = vld [vmem:[#allocation3 + $0x61] sm:$0xff]
      %v1908 = vld [vmem:[#allocation3 + $0x69] sm:$0xff]
      %v1909 = vld [vmem:[#allocation3 + $0x79] sm:$0xff]
      %v1910 = vld [vmem:[#allocation3 + $0x81] sm:$0xff]
      %v1911 = vld [vmem:[#allocation3 + $0x91] sm:$0xff]
      %v1912 = vld [vmem:[#allocation3 + $0x99] sm:$0xff]
      %v1913 = vld [vmem:[#allocation3 + $0xa9] sm:$0xff]
      %v1914 = vld [vmem:[#allocation3 + $0xb1] sm:$0xff]
      %v1915 = vpack.c.bf16 %v1900, %v1899
      %v1916 = vpack.c.bf16 %v1902, %v1901
      %v1917 = vpack.c.bf16 %v1904, %v1903
      %v1918 = vpack.c.bf16 %v1906, %v1905
      %v1919 = vpack.c.bf16 %v1908, %v1907
      %v1920 = vpack.c.bf16 %v1910, %v1909
      %v1921 = vpack.c.bf16 %v1912, %v1911
      %v1922 = vpack.c.bf16 %v1914, %v1913
      %s1923 = scalar_lea.vmem %s5, 2
      %v1924 = vld [vmem:[%s1923] sm:$0x3]
      %v1926 = vsel %vm1749, %v1915, 0
      %v1929 = vsel %vm1749, %v1916, 0
      %v1932 = vsel %vm1749, %v1917, 0
      %v1935 = vsel %vm1749, %v1918, 0
      %v1938 = vsel %vm1749, %v1919, 0
      %v1941 = vsel %vm1749, %v1920, 0
      %v1944 = vsel %vm1749, %v1921, 0
      %v1947 = vsel %vm1749, %v1922, 0
      %v1950 = vsel %vm1830, %v1924, 0
      %1952 = vmatpush.bf16.msra.mxu0 0
      %1953 = vmatpush.bf16.msra.mxu0 0
      %1954 = vmatpush.bf16.msra.mxu0 0
      %1955 = vmatpush.bf16.msra.mxu0 0
      %1956 = vmatpush.bf16.msra.mxu0 0
      %1957 = vmatpush.bf16.msra.mxu0 0
      %1958 = vmatpush.bf16.msra.mxu0 0
      %1959 = vmatpush.bf16.msra.mxu0 %v1950
      %1960 = vmatmul.bf16.gmra.mxu0 %v1926
      %v1961 = vpop.f32.mrf.mxu0
      %v1962 = vadd.f32 0.0, %v1961
      %v1963 = vpop.f32.mrf.mxu0
      %v1964 = vadd.f32 0.0, %v1963
      %1965 = vmatmul.bf16.gmra.mxu0 %v1929
      %v1966 = vpop.f32.mrf.mxu0
      %v1967 = vadd.f32 0.0, %v1966
      %v1968 = vpop.f32.mrf.mxu0
      %v1969 = vadd.f32 0.0, %v1968
      %1970 = vmatmul.bf16.gmra.mxu0 %v1932
      %v1971 = vpop.f32.mrf.mxu0
      %v1972 = vadd.f32 0.0, %v1971
      %v1973 = vpop.f32.mrf.mxu0
      %v1974 = vadd.f32 0.0, %v1973
      %1975 = vmatmul.bf16.gmra.mxu0 %v1935
      %v1976 = vpop.f32.mrf.mxu0
      %v1977 = vadd.f32 0.0, %v1976
      %v1978 = vpop.f32.mrf.mxu0
      %v1979 = vadd.f32 0.0, %v1978
      %1980 = vmatmul.bf16.gmra.mxu0 %v1938
      %v1981 = vpop.f32.mrf.mxu0
      %v1982 = vadd.f32 0.0, %v1981
      %v1983 = vpop.f32.mrf.mxu0
      %v1984 = vadd.f32 0.0, %v1983
      %1985 = vmatmul.bf16.gmra.mxu0 %v1941
      %v1986 = vpop.f32.mrf.mxu0
      %v1987 = vadd.f32 0.0, %v1986
      %v1988 = vpop.f32.mrf.mxu0
      %v1989 = vadd.f32 0.0, %v1988
      %1990 = vmatmul.bf16.gmra.mxu0 %v1944
      %v1991 = vpop.f32.mrf.mxu0
      %v1992 = vadd.f32 0.0, %v1991
      %v1993 = vpop.f32.mrf.mxu0
      %v1994 = vadd.f32 0.0, %v1993
      %1995 = vmatmul.bf16.gmra.mxu0 %v1947
      %v1996 = vpop.f32.mrf.mxu0
      %v1997 = vadd.f32 0.0, %v1996
      %v1998 = vpop.f32.mrf.mxu0
      %v1999 = vadd.f32 0.0, %v1998
      %2000 = vdwg.mxu0
      %v2001 = vadd.f32 %v1883, %v1962
      %v2002 = vadd.f32 %v1884, %v1964
      %v2003 = vadd.f32 %v1885, %v1967
      %v2004 = vadd.f32 %v1886, %v1969
      %v2005 = vadd.f32 %v1887, %v1972
      %v2006 = vadd.f32 %v1888, %v1974
      %v2007 = vadd.f32 %v1889, %v1977
      %v2008 = vadd.f32 %v1890, %v1979
      %v2009 = vadd.f32 %v1891, %v1982
      %v2010 = vadd.f32 %v1892, %v1984
      %v2011 = vadd.f32 %v1893, %v1987
      %v2012 = vadd.f32 %v1894, %v1989
      %v2013 = vadd.f32 %v1895, %v1992
      %v2014 = vadd.f32 %v1896, %v1994
      %v2015 = vadd.f32 %v1897, %v1997
      %v2016 = vadd.f32 %v1898, %v1999
      %v2017 = vld [vmem:[#allocation3 + $0x2] sm:$0xff]
      %v2018 = vld [vmem:[#allocation3 + $0xa] sm:$0xff]
      %v2019 = vld [vmem:[#allocation3 + $0x1a] sm:$0xff]
      %v2020 = vld [vmem:[#allocation3 + $0x22] sm:$0xff]
      %v2021 = vld [vmem:[#allocation3 + $0x32] sm:$0xff]
      %v2022 = vld [vmem:[#allocation3 + $0x3a] sm:$0xff]
      %v2023 = vld [vmem:[#allocation3 + $0x4a] sm:$0xff]
      %v2024 = vld [vmem:[#allocation3 + $0x52] sm:$0xff]
      %v2025 = vld [vmem:[#allocation3 + $0x62] sm:$0xff]
      %v2026 = vld [vmem:[#allocation3 + $0x6a] sm:$0xff]
      %v2027 = vld [vmem:[#allocation3 + $0x7a] sm:$0xff]
      %v2028 = vld [vmem:[#allocation3 + $0x82] sm:$0xff]
      %v2029 = vld [vmem:[#allocation3 + $0x92] sm:$0xff]
      %v2030 = vld [vmem:[#allocation3 + $0x9a] sm:$0xff]
      %v2031 = vld [vmem:[#allocation3 + $0xaa] sm:$0xff]
      %v2032 = vld [vmem:[#allocation3 + $0xb2] sm:$0xff]
      %v2033 = vpack.c.bf16 %v2018, %v2017
      %v2034 = vpack.c.bf16 %v2020, %v2019
      %v2035 = vpack.c.bf16 %v2022, %v2021
      %v2036 = vpack.c.bf16 %v2024, %v2023
      %v2037 = vpack.c.bf16 %v2026, %v2025
      %v2038 = vpack.c.bf16 %v2028, %v2027
      %v2039 = vpack.c.bf16 %v2030, %v2029
      %v2040 = vpack.c.bf16 %v2032, %v2031
      %s2041 = scalar_lea.vmem %s5, 4
      %v2042 = vld [vmem:[%s2041] sm:$0x3]
      %v2044 = vsel %vm1749, %v2033, 0
      %v2047 = vsel %vm1749, %v2034, 0
      %v2050 = vsel %vm1749, %v2035, 0
      %v2053 = vsel %vm1749, %v2036, 0
      %v2056 = vsel %vm1749, %v2037, 0
      %v2059 = vsel %vm1749, %v2038, 0
      %v2062 = vsel %vm1749, %v2039, 0
      %v2065 = vsel %vm1749, %v2040, 0
      %v2068 = vsel %vm1830, %v2042, 0
      %2070 = vmatpush.bf16.msra.mxu0 0
      %2071 = vmatpush.bf16.msra.mxu0 0
      %2072 = vmatpush.bf16.msra.mxu0 0
      %2073 = vmatpush.bf16.msra.mxu0 0
      %2074 = vmatpush.bf16.msra.mxu0 0
      %2075 = vmatpush.bf16.msra.mxu0 0
      %2076 = vmatpush.bf16.msra.mxu0 0
      %2077 = vmatpush.bf16.msra.mxu0 %v2068
      %2078 = vmatmul.bf16.gmra.mxu0 %v2044
      %v2079 = vpop.f32.mrf.mxu0
      %v2080 = vadd.f32 0.0, %v2079
      %v2081 = vpop.f32.mrf.mxu0
      %v2082 = vadd.f32 0.0, %v2081
      %2083 = vmatmul.bf16.gmra.mxu0 %v2047
      %v2084 = vpop.f32.mrf.mxu0
      %v2085 = vadd.f32 0.0, %v2084
      %v2086 = vpop.f32.mrf.mxu0
      %v2087 = vadd.f32 0.0, %v2086
      %2088 = vmatmul.bf16.gmra.mxu0 %v2050
      %v2089 = vpop.f32.mrf.mxu0
      %v2090 = vadd.f32 0.0, %v2089
      %v2091 = vpop.f32.mrf.mxu0
      %v2092 = vadd.f32 0.0, %v2091
      %2093 = vmatmul.bf16.gmra.mxu0 %v2053
      %v2094 = vpop.f32.mrf.mxu0
      %v2095 = vadd.f32 0.0, %v2094
      %v2096 = vpop.f32.mrf.mxu0
      %v2097 = vadd.f32 0.0, %v2096
      %2098 = vmatmul.bf16.gmra.mxu0 %v2056
      %v2099 = vpop.f32.mrf.mxu0
      %v2100 = vadd.f32 0.0, %v2099
      %v2101 = vpop.f32.mrf.mxu0
      %v2102 = vadd.f32 0.0, %v2101
      %2103 = vmatmul.bf16.gmra.mxu0 %v2059
      %v2104 = vpop.f32.mrf.mxu0
      %v2105 = vadd.f32 0.0, %v2104
      %v2106 = vpop.f32.mrf.mxu0
      %v2107 = vadd.f32 0.0, %v2106
      %2108 = vmatmul.bf16.gmra.mxu0 %v2062
      %v2109 = vpop.f32.mrf.mxu0
      %v2110 = vadd.f32 0.0, %v2109
      %v2111 = vpop.f32.mrf.mxu0
      %v2112 = vadd.f32 0.0, %v2111
      %2113 = vmatmul.bf16.gmra.mxu0 %v2065
      %v2114 = vpop.f32.mrf.mxu0
      %v2115 = vadd.f32 0.0, %v2114
      %v2116 = vpop.f32.mrf.mxu0
      %v2117 = vadd.f32 0.0, %v2116
      %2118 = vdwg.mxu0
      %v2119 = vadd.f32 %v2001, %v2080
      %v2120 = vadd.f32 %v2002, %v2082
      %v2121 = vadd.f32 %v2003, %v2085
      %v2122 = vadd.f32 %v2004, %v2087
      %v2123 = vadd.f32 %v2005, %v2090
      %v2124 = vadd.f32 %v2006, %v2092
      %v2125 = vadd.f32 %v2007, %v2095
      %v2126 = vadd.f32 %v2008, %v2097
      %v2127 = vadd.f32 %v2009, %v2100
      %v2128 = vadd.f32 %v2010, %v2102
      %v2129 = vadd.f32 %v2011, %v2105
      %v2130 = vadd.f32 %v2012, %v2107
      %v2131 = vadd.f32 %v2013, %v2110
      %v2132 = vadd.f32 %v2014, %v2112
      %v2133 = vadd.f32 %v2015, %v2115
      %v2134 = vadd.f32 %v2016, %v2117
      %s2135 = scalar_lea.vmem [#allocation3], 24
      %v2136 = vld [vmem:[%s2135] sm:$0xff]
      %v2137 = vld [vmem:[%s2135 + $0x8] sm:$0xff]
      %v2138 = vld [vmem:[%s2135 + $0x18] sm:$0xff]
      %v2139 = vld [vmem:[%s2135 + $0x20] sm:$0xff]
      %v2140 = vld [vmem:[%s2135 + $0x30] sm:$0xff]
      %v2141 = vld [vmem:[%s2135 + $0x38] sm:$0xff]
      %v2142 = vld [vmem:[%s2135 + $0x48] sm:$0xff]
      %v2143 = vld [vmem:[%s2135 + $0x50] sm:$0xff]
      %v2144 = vld [vmem:[%s2135 + $0x60] sm:$0xff]
      %v2145 = vld [vmem:[%s2135 + $0x68] sm:$0xff]
      %v2146 = vld [vmem:[%s2135 + $0x78] sm:$0xff]
      %v2147 = vld [vmem:[%s2135 + $0x80] sm:$0xff]
      %v2148 = vld [vmem:[%s2135 + $0x90] sm:$0xff]
      %v2149 = vld [vmem:[%s2135 + $0x98] sm:$0xff]
      %v2150 = vld [vmem:[%s2135 + $0xa8] sm:$0xff]
      %v2151 = vld [vmem:[%s2135 + $0xb0] sm:$0xff]
      %v2152 = vpack.c.bf16 %v2137, %v2136
      %v2153 = vpack.c.bf16 %v2139, %v2138
      %v2154 = vpack.c.bf16 %v2141, %v2140
      %v2155 = vpack.c.bf16 %v2143, %v2142
      %v2156 = vpack.c.bf16 %v2145, %v2144
      %v2157 = vpack.c.bf16 %v2147, %v2146
      %v2158 = vpack.c.bf16 %v2149, %v2148
      %v2159 = vpack.c.bf16 %v2151, %v2150
      %s2160 = scalar_lea.vmem %s5, 6
      %v2161 = vld [vmem:[%s2160] sm:$0x3]
      %v2163 = vsel %vm1749, %v2152, 0
      %v2166 = vsel %vm1749, %v2153, 0
      %v2169 = vsel %vm1749, %v2154, 0
      %v2172 = vsel %vm1749, %v2155, 0
      %v2175 = vsel %vm1749, %v2156, 0
      %v2178 = vsel %vm1749, %v2157, 0
      %v2181 = vsel %vm1749, %v2158, 0
      %v2184 = vsel %vm1749, %v2159, 0
      %v2187 = vsel %vm1830, %v2161, 0
      %2189 = vmatpush.bf16.msra.mxu0 0
      %2190 = vmatpush.bf16.msra.mxu0 0
      %2191 = vmatpush.bf16.msra.mxu0 0
      %2192 = vmatpush.bf16.msra.mxu0 0
      %2193 = vmatpush.bf16.msra.mxu0 0
      %2194 = vmatpush.bf16.msra.mxu0 0
      %2195 = vmatpush.bf16.msra.mxu0 0
      %2196 = vmatpush.bf16.msra.mxu0 %v2187
      %2197 = vmatmul.bf16.gmra.mxu0 %v2163
      %v2198 = vpop.f32.mrf.mxu0
      %v2199 = vadd.f32 0.0, %v2198
      %v2200 = vpop.f32.mrf.mxu0
      %v2201 = vadd.f32 0.0, %v2200
      %2202 = vmatmul.bf16.gmra.mxu0 %v2166
      %v2203 = vpop.f32.mrf.mxu0
      %v2204 = vadd.f32 0.0, %v2203
      %v2205 = vpop.f32.mrf.mxu0
      %v2206 = vadd.f32 0.0, %v2205
      %2207 = vmatmul.bf16.gmra.mxu0 %v2169
      %v2208 = vpop.f32.mrf.mxu0
      %v2209 = vadd.f32 0.0, %v2208
      %v2210 = vpop.f32.mrf.mxu0
      %v2211 = vadd.f32 0.0, %v2210
      %2212 = vmatmul.bf16.gmra.mxu0 %v2172
      %v2213 = vpop.f32.mrf.mxu0
      %v2214 = vadd.f32 0.0, %v2213
      %v2215 = vpop.f32.mrf.mxu0
      %v2216 = vadd.f32 0.0, %v2215
      %2217 = vmatmul.bf16.gmra.mxu0 %v2175
      %v2218 = vpop.f32.mrf.mxu0
      %v2219 = vadd.f32 0.0, %v2218
      %v2220 = vpop.f32.mrf.mxu0
      %v2221 = vadd.f32 0.0, %v2220
      %2222 = vmatmul.bf16.gmra.mxu0 %v2178
      %v2223 = vpop.f32.mrf.mxu0
      %v2224 = vadd.f32 0.0, %v2223
      %v2225 = vpop.f32.mrf.mxu0
      %v2226 = vadd.f32 0.0, %v2225
      %2227 = vmatmul.bf16.gmra.mxu0 %v2181
      %v2228 = vpop.f32.mrf.mxu0
      %v2229 = vadd.f32 0.0, %v2228
      %v2230 = vpop.f32.mrf.mxu0
      %v2231 = vadd.f32 0.0, %v2230
      %2232 = vmatmul.bf16.gmra.mxu0 %v2184
      %v2233 = vpop.f32.mrf.mxu0
      %v2234 = vadd.f32 0.0, %v2233
      %v2235 = vpop.f32.mrf.mxu0
      %v2236 = vadd.f32 0.0, %v2235
      %2237 = vdwg.mxu0
      %v2238 = vadd.f32 %v2119, %v2199
      %v2239 = vadd.f32 %v2120, %v2201
      %v2240 = vadd.f32 %v2121, %v2204
      %v2241 = vadd.f32 %v2122, %v2206
      %v2242 = vadd.f32 %v2123, %v2209
      %v2243 = vadd.f32 %v2124, %v2211
      %v2244 = vadd.f32 %v2125, %v2214
      %v2245 = vadd.f32 %v2126, %v2216
      %v2246 = vadd.f32 %v2127, %v2219
      %v2247 = vadd.f32 %v2128, %v2221
      %v2248 = vadd.f32 %v2129, %v2224
      %v2249 = vadd.f32 %v2130, %v2226
      %v2250 = vadd.f32 %v2131, %v2229
      %v2251 = vadd.f32 %v2132, %v2231
      %v2252 = vadd.f32 %v2133, %v2234
      %v2253 = vadd.f32 %v2134, %v2236
      %v2254 = vld [vmem:[%s2135 + $0x1] sm:$0xff]
      %v2255 = vld [vmem:[%s2135 + $0x9] sm:$0xff]
      %v2256 = vld [vmem:[%s2135 + $0x19] sm:$0xff]
      %v2257 = vld [vmem:[%s2135 + $0x21] sm:$0xff]
      %v2258 = vld [vmem:[%s2135 + $0x31] sm:$0xff]
      %v2259 = vld [vmem:[%s2135 + $0x39] sm:$0xff]
      %v2260 = vld [vmem:[%s2135 + $0x49] sm:$0xff]
      %v2261 = vld [vmem:[%s2135 + $0x51] sm:$0xff]
      %v2262 = vld [vmem:[%s2135 + $0x61] sm:$0xff]
      %v2263 = vld [vmem:[%s2135 + $0x69] sm:$0xff]
      %v2264 = vld [vmem:[%s2135 + $0x79] sm:$0xff]
      %v2265 = vld [vmem:[%s2135 + $0x81] sm:$0xff]
      %v2266 = vld [vmem:[%s2135 + $0x91] sm:$0xff]
      %v2267 = vld [vmem:[%s2135 + $0x99] sm:$0xff]
      %v2268 = vld [vmem:[%s2135 + $0xa9] sm:$0xff]
      %v2269 = vld [vmem:[%s2135 + $0xb1] sm:$0xff]
      %v2270 = vpack.c.bf16 %v2255, %v2254
      %v2271 = vpack.c.bf16 %v2257, %v2256
      %v2272 = vpack.c.bf16 %v2259, %v2258
      %v2273 = vpack.c.bf16 %v2261, %v2260
      %v2274 = vpack.c.bf16 %v2263, %v2262
      %v2275 = vpack.c.bf16 %v2265, %v2264
      %v2276 = vpack.c.bf16 %v2267, %v2266
      %v2277 = vpack.c.bf16 %v2269, %v2268
      %s2278 = scalar_lea.vmem %s5, 8
      %v2279 = vld [vmem:[%s2278] sm:$0x3]
      %v2281 = vsel %vm1749, %v2270, 0
      %v2284 = vsel %vm1749, %v2271, 0
      %v2287 = vsel %vm1749, %v2272, 0
      %v2290 = vsel %vm1749, %v2273, 0
      %v2293 = vsel %vm1749, %v2274, 0
      %v2296 = vsel %vm1749, %v2275, 0
      %v2299 = vsel %vm1749, %v2276, 0
      %v2302 = vsel %vm1749, %v2277, 0
      %v2305 = vsel %vm1830, %v2279, 0
      %2307 = vmatpush.bf16.msra.mxu0 0
      %2308 = vmatpush.bf16.msra.mxu0 0
      %2309 = vmatpush.bf16.msra.mxu0 0
      %2310 = vmatpush.bf16.msra.mxu0 0
      %2311 = vmatpush.bf16.msra.mxu0 0
      %2312 = vmatpush.bf16.msra.mxu0 0
      %2313 = vmatpush.bf16.msra.mxu0 0
      %2314 = vmatpush.bf16.msra.mxu0 %v2305
      %2315 = vmatmul.bf16.gmra.mxu0 %v2281
      %v2316 = vpop.f32.mrf.mxu0
      %v2317 = vadd.f32 0.0, %v2316
      %v2318 = vpop.f32.mrf.mxu0
      %v2319 = vadd.f32 0.0, %v2318
      %2320 = vmatmul.bf16.gmra.mxu0 %v2284
      %v2321 = vpop.f32.mrf.mxu0
      %v2322 = vadd.f32 0.0, %v2321
      %v2323 = vpop.f32.mrf.mxu0
      %v2324 = vadd.f32 0.0, %v2323
      %2325 = vmatmul.bf16.gmra.mxu0 %v2287
      %v2326 = vpop.f32.mrf.mxu0
      %v2327 = vadd.f32 0.0, %v2326
      %v2328 = vpop.f32.mrf.mxu0
      %v2329 = vadd.f32 0.0, %v2328
      %2330 = vmatmul.bf16.gmra.mxu0 %v2290
      %v2331 = vpop.f32.mrf.mxu0
      %v2332 = vadd.f32 0.0, %v2331
      %v2333 = vpop.f32.mrf.mxu0
      %v2334 = vadd.f32 0.0, %v2333
      %2335 = vmatmul.bf16.gmra.mxu0 %v2293
      %v2336 = vpop.f32.mrf.mxu0
      %v2337 = vadd.f32 0.0, %v2336
      %v2338 = vpop.f32.mrf.mxu0
      %v2339 = vadd.f32 0.0, %v2338
      %2340 = vmatmul.bf16.gmra.mxu0 %v2296
      %v2341 = vpop.f32.mrf.mxu0
      %v2342 = vadd.f32 0.0, %v2341
      %v2343 = vpop.f32.mrf.mxu0
      %v2344 = vadd.f32 0.0, %v2343
      %2345 = vmatmul.bf16.gmra.mxu0 %v2299
      %v2346 = vpop.f32.mrf.mxu0
      %v2347 = vadd.f32 0.0, %v2346
      %v2348 = vpop.f32.mrf.mxu0
      %v2349 = vadd.f32 0.0, %v2348
      %2350 = vmatmul.bf16.gmra.mxu0 %v2302
      %v2351 = vpop.f32.mrf.mxu0
      %v2352 = vadd.f32 0.0, %v2351
      %v2353 = vpop.f32.mrf.mxu0
      %v2354 = vadd.f32 0.0, %v2353
      %2355 = vdwg.mxu0
      %v2356 = vadd.f32 %v2238, %v2317
      %v2357 = vadd.f32 %v2239, %v2319
      %v2358 = vadd.f32 %v2240, %v2322
      %v2359 = vadd.f32 %v2241, %v2324
      %v2360 = vadd.f32 %v2242, %v2327
      %v2361 = vadd.f32 %v2243, %v2329
      %v2362 = vadd.f32 %v2244, %v2332
      %v2363 = vadd.f32 %v2245, %v2334
      %v2364 = vadd.f32 %v2246, %v2337
      %v2365 = vadd.f32 %v2247, %v2339
      %v2366 = vadd.f32 %v2248, %v2342
      %v2367 = vadd.f32 %v2249, %v2344
      %v2368 = vadd.f32 %v2250, %v2347
      %v2369 = vadd.f32 %v2251, %v2349
      %v2370 = vadd.f32 %v2252, %v2352
      %v2371 = vadd.f32 %v2253, %v2354
      %v2372 = vld [vmem:[%s2135 + $0x2] sm:$0xff]
      %v2373 = vld [vmem:[%s2135 + $0xa] sm:$0xff]
      %v2374 = vld [vmem:[%s2135 + $0x1a] sm:$0xff]
      %v2375 = vld [vmem:[%s2135 + $0x22] sm:$0xff]
      %v2376 = vld [vmem:[%s2135 + $0x32] sm:$0xff]
      %v2377 = vld [vmem:[%s2135 + $0x3a] sm:$0xff]
      %v2378 = vld [vmem:[%s2135 + $0x4a] sm:$0xff]
      %v2379 = vld [vmem:[%s2135 + $0x52] sm:$0xff]
      %v2380 = vld [vmem:[%s2135 + $0x62] sm:$0xff]
      %v2381 = vld [vmem:[%s2135 + $0x6a] sm:$0xff]
      %v2382 = vld [vmem:[%s2135 + $0x7a] sm:$0xff]
      %v2383 = vld [vmem:[%s2135 + $0x82] sm:$0xff]
      %v2384 = vld [vmem:[%s2135 + $0x92] sm:$0xff]
      %v2385 = vld [vmem:[%s2135 + $0x9a] sm:$0xff]
      %v2386 = vld [vmem:[%s2135 + $0xaa] sm:$0xff]
      %v2387 = vld [vmem:[%s2135 + $0xb2] sm:$0xff]
      %v2388 = vpack.c.bf16 %v2373, %v2372
      %v2389 = vpack.c.bf16 %v2375, %v2374
      %v2390 = vpack.c.bf16 %v2377, %v2376
      %v2391 = vpack.c.bf16 %v2379, %v2378
      %v2392 = vpack.c.bf16 %v2381, %v2380
      %v2393 = vpack.c.bf16 %v2383, %v2382
      %v2394 = vpack.c.bf16 %v2385, %v2384
      %v2395 = vpack.c.bf16 %v2387, %v2386
      %s2396 = scalar_lea.vmem %s5, 10
      %v2397 = vld [vmem:[%s2396] sm:$0x3]
      %v2399 = vsel %vm1749, %v2388, 0
      %v2402 = vsel %vm1749, %v2389, 0
      %v2405 = vsel %vm1749, %v2390, 0
      %v2408 = vsel %vm1749, %v2391, 0
      %v2411 = vsel %vm1749, %v2392, 0
      %v2414 = vsel %vm1749, %v2393, 0
      %v2417 = vsel %vm1749, %v2394, 0
      %v2420 = vsel %vm1749, %v2395, 0
      %v2423 = vsel %vm1830, %v2397, 0
      %2425 = vmatpush.bf16.msra.mxu0 0
      %2426 = vmatpush.bf16.msra.mxu0 0
      %2427 = vmatpush.bf16.msra.mxu0 0
      %2428 = vmatpush.bf16.msra.mxu0 0
      %2429 = vmatpush.bf16.msra.mxu0 0
      %2430 = vmatpush.bf16.msra.mxu0 0
      %2431 = vmatpush.bf16.msra.mxu0 0
      %2432 = vmatpush.bf16.msra.mxu0 %v2423
      %2433 = vmatmul.bf16.gmra.mxu0 %v2399
      %v2434 = vpop.f32.mrf.mxu0
      %v2435 = vadd.f32 0.0, %v2434
      %v2436 = vpop.f32.mrf.mxu0
      %v2437 = vadd.f32 0.0, %v2436
      %2438 = vmatmul.bf16.gmra.mxu0 %v2402
      %v2439 = vpop.f32.mrf.mxu0
      %v2440 = vadd.f32 0.0, %v2439
      %v2441 = vpop.f32.mrf.mxu0
      %v2442 = vadd.f32 0.0, %v2441
      %2443 = vmatmul.bf16.gmra.mxu0 %v2405
      %v2444 = vpop.f32.mrf.mxu0
      %v2445 = vadd.f32 0.0, %v2444
      %v2446 = vpop.f32.mrf.mxu0
      %v2447 = vadd.f32 0.0, %v2446
      %2448 = vmatmul.bf16.gmra.mxu0 %v2408
      %v2449 = vpop.f32.mrf.mxu0
      %v2450 = vadd.f32 0.0, %v2449
      %v2451 = vpop.f32.mrf.mxu0
      %v2452 = vadd.f32 0.0, %v2451
      %2453 = vmatmul.bf16.gmra.mxu0 %v2411
      %v2454 = vpop.f32.mrf.mxu0
      %v2455 = vadd.f32 0.0, %v2454
      %v2456 = vpop.f32.mrf.mxu0
      %v2457 = vadd.f32 0.0, %v2456
      %2458 = vmatmul.bf16.gmra.mxu0 %v2414
      %v2459 = vpop.f32.mrf.mxu0
      %v2460 = vadd.f32 0.0, %v2459
      %v2461 = vpop.f32.mrf.mxu0
      %v2462 = vadd.f32 0.0, %v2461
      %2463 = vmatmul.bf16.gmra.mxu0 %v2417
      %v2464 = vpop.f32.mrf.mxu0
      %v2465 = vadd.f32 0.0, %v2464
      %v2466 = vpop.f32.mrf.mxu0
      %v2467 = vadd.f32 0.0, %v2466
      %2468 = vmatmul.bf16.gmra.mxu0 %v2420
      %v2469 = vpop.f32.mrf.mxu0
      %v2470 = vadd.f32 0.0, %v2469
      %v2471 = vpop.f32.mrf.mxu0
      %v2472 = vadd.f32 0.0, %v2471
      %2473 = vdwg.mxu0
      %v2474 = vadd.f32 %v2356, %v2435
      %v2475 = vadd.f32 %v2357, %v2437
      %v2476 = vadd.f32 %v2358, %v2440
      %v2477 = vadd.f32 %v2359, %v2442
      %v2478 = vadd.f32 %v2360, %v2445
      %v2479 = vadd.f32 %v2361, %v2447
      %v2480 = vadd.f32 %v2362, %v2450
      %v2481 = vadd.f32 %v2363, %v2452
      %v2482 = vadd.f32 %v2364, %v2455
      %v2483 = vadd.f32 %v2365, %v2457
      %v2484 = vadd.f32 %v2366, %v2460
      %v2485 = vadd.f32 %v2367, %v2462
      %v2486 = vadd.f32 %v2368, %v2465
      %v2487 = vadd.f32 %v2369, %v2467
      %v2488 = vadd.f32 %v2370, %v2470
      %v2489 = vadd.f32 %v2371, %v2472
      %s2490 = scalar_lea.vmem [#allocation3], 48
      %v2491 = vld [vmem:[%s2490] sm:$0xff]
      %v2492 = vld [vmem:[%s2490 + $0x8] sm:$0xff]
      %v2493 = vld [vmem:[%s2490 + $0x18] sm:$0xff]
      %v2494 = vld [vmem:[%s2490 + $0x20] sm:$0xff]
      %v2495 = vld [vmem:[%s2490 + $0x30] sm:$0xff]
      %v2496 = vld [vmem:[%s2490 + $0x38] sm:$0xff]
      %v2497 = vld [vmem:[%s2490 + $0x48] sm:$0xff]
      %v2498 = vld [vmem:[%s2490 + $0x50] sm:$0xff]
      %v2499 = vld [vmem:[%s2490 + $0x60] sm:$0xff]
      %v2500 = vld [vmem:[%s2490 + $0x68] sm:$0xff]
      %v2501 = vld [vmem:[%s2490 + $0x78] sm:$0xff]
      %v2502 = vld [vmem:[%s2490 + $0x80] sm:$0xff]
      %v2503 = vld [vmem:[%s2490 + $0x90] sm:$0xff]
      %v2504 = vld [vmem:[%s2490 + $0x98] sm:$0xff]
      %v2505 = vld [vmem:[%s2490 + $0xa8] sm:$0xff]
      %v2506 = vld [vmem:[%s2490 + $0xb0] sm:$0xff]
      %v2507 = vpack.c.bf16 %v2492, %v2491
      %v2508 = vpack.c.bf16 %v2494, %v2493
      %v2509 = vpack.c.bf16 %v2496, %v2495
      %v2510 = vpack.c.bf16 %v2498, %v2497
      %v2511 = vpack.c.bf16 %v2500, %v2499
      %v2512 = vpack.c.bf16 %v2502, %v2501
      %v2513 = vpack.c.bf16 %v2504, %v2503
      %v2514 = vpack.c.bf16 %v2506, %v2505
      %s2515 = scalar_lea.vmem %s5, 12
      %v2516 = vld [vmem:[%s2515] sm:$0x3]
      %v2518 = vsel %vm1749, %v2507, 0
      %v2521 = vsel %vm1749, %v2508, 0
      %v2524 = vsel %vm1749, %v2509, 0
      %v2527 = vsel %vm1749, %v2510, 0
      %v2530 = vsel %vm1749, %v2511, 0
      %v2533 = vsel %vm1749, %v2512, 0
      %v2536 = vsel %vm1749, %v2513, 0
      %v2539 = vsel %vm1749, %v2514, 0
      %v2542 = vsel %vm1830, %v2516, 0
      %2544 = vmatpush.bf16.msra.mxu0 0
      %2545 = vmatpush.bf16.msra.mxu0 0
      %2546 = vmatpush.bf16.msra.mxu0 0
      %2547 = vmatpush.bf16.msra.mxu0 0
      %2548 = vmatpush.bf16.msra.mxu0 0
      %2549 = vmatpush.bf16.msra.mxu0 0
      %2550 = vmatpush.bf16.msra.mxu0 0
      %2551 = vmatpush.bf16.msra.mxu0 %v2542
      %2552 = vmatmul.bf16.gmra.mxu0 %v2518
      %v2553 = vpop.f32.mrf.mxu0
      %v2554 = vadd.f32 0.0, %v2553
      %v2555 = vpop.f32.mrf.mxu0
      %v2556 = vadd.f32 0.0, %v2555
      %2557 = vmatmul.bf16.gmra.mxu0 %v2521
      %v2558 = vpop.f32.mrf.mxu0
      %v2559 = vadd.f32 0.0, %v2558
      %v2560 = vpop.f32.mrf.mxu0
      %v2561 = vadd.f32 0.0, %v2560
      %2562 = vmatmul.bf16.gmra.mxu0 %v2524
      %v2563 = vpop.f32.mrf.mxu0
      %v2564 = vadd.f32 0.0, %v2563
      %v2565 = vpop.f32.mrf.mxu0
      %v2566 = vadd.f32 0.0, %v2565
      %2567 = vmatmul.bf16.gmra.mxu0 %v2527
      %v2568 = vpop.f32.mrf.mxu0
      %v2569 = vadd.f32 0.0, %v2568
      %v2570 = vpop.f32.mrf.mxu0
      %v2571 = vadd.f32 0.0, %v2570
      %2572 = vmatmul.bf16.gmra.mxu0 %v2530
      %v2573 = vpop.f32.mrf.mxu0
      %v2574 = vadd.f32 0.0, %v2573
      %v2575 = vpop.f32.mrf.mxu0
      %v2576 = vadd.f32 0.0, %v2575
      %2577 = vmatmul.bf16.gmra.mxu0 %v2533
      %v2578 = vpop.f32.mrf.mxu0
      %v2579 = vadd.f32 0.0, %v2578
      %v2580 = vpop.f32.mrf.mxu0
      %v2581 = vadd.f32 0.0, %v2580
      %2582 = vmatmul.bf16.gmra.mxu0 %v2536
      %v2583 = vpop.f32.mrf.mxu0
      %v2584 = vadd.f32 0.0, %v2583
      %v2585 = vpop.f32.mrf.mxu0
      %v2586 = vadd.f32 0.0, %v2585
      %2587 = vmatmul.bf16.gmra.mxu0 %v2539
      %v2588 = vpop.f32.mrf.mxu0
      %v2589 = vadd.f32 0.0, %v2588
      %v2590 = vpop.f32.mrf.mxu0
      %v2591 = vadd.f32 0.0, %v2590
      %2592 = vdwg.mxu0
      %v2593 = vadd.f32 %v2474, %v2554
      %v2594 = vadd.f32 %v2475, %v2556
      %v2595 = vadd.f32 %v2476, %v2559
      %v2596 = vadd.f32 %v2477, %v2561
      %v2597 = vadd.f32 %v2478, %v2564
      %v2598 = vadd.f32 %v2479, %v2566
      %v2599 = vadd.f32 %v2480, %v2569
      %v2600 = vadd.f32 %v2481, %v2571
      %v2601 = vadd.f32 %v2482, %v2574
      %v2602 = vadd.f32 %v2483, %v2576
      %v2603 = vadd.f32 %v2484, %v2579
      %v2604 = vadd.f32 %v2485, %v2581
      %v2605 = vadd.f32 %v2486, %v2584
      %v2606 = vadd.f32 %v2487, %v2586
      %v2607 = vadd.f32 %v2488, %v2589
      %v2608 = vadd.f32 %v2489, %v2591
      %v2609 = vld [vmem:[%s2490 + $0x1] sm:$0xff]
      %v2610 = vld [vmem:[%s2490 + $0x9] sm:$0xff]
      %v2611 = vld [vmem:[%s2490 + $0x19] sm:$0xff]
      %v2612 = vld [vmem:[%s2490 + $0x21] sm:$0xff]
      %v2613 = vld [vmem:[%s2490 + $0x31] sm:$0xff]
      %v2614 = vld [vmem:[%s2490 + $0x39] sm:$0xff]
      %v2615 = vld [vmem:[%s2490 + $0x49] sm:$0xff]
      %v2616 = vld [vmem:[%s2490 + $0x51] sm:$0xff]
      %v2617 = vld [vmem:[%s2490 + $0x61] sm:$0xff]
      %v2618 = vld [vmem:[%s2490 + $0x69] sm:$0xff]
      %v2619 = vld [vmem:[%s2490 + $0x79] sm:$0xff]
      %v2620 = vld [vmem:[%s2490 + $0x81] sm:$0xff]
      %v2621 = vld [vmem:[%s2490 + $0x91] sm:$0xff]
      %v2622 = vld [vmem:[%s2490 + $0x99] sm:$0xff]
      %v2623 = vld [vmem:[%s2490 + $0xa9] sm:$0xff]
      %v2624 = vld [vmem:[%s2490 + $0xb1] sm:$0xff]
      %v2625 = vpack.c.bf16 %v2610, %v2609
      %v2626 = vpack.c.bf16 %v2612, %v2611
      %v2627 = vpack.c.bf16 %v2614, %v2613
      %v2628 = vpack.c.bf16 %v2616, %v2615
      %v2629 = vpack.c.bf16 %v2618, %v2617
      %v2630 = vpack.c.bf16 %v2620, %v2619
      %v2631 = vpack.c.bf16 %v2622, %v2621
      %v2632 = vpack.c.bf16 %v2624, %v2623
      %s2633 = scalar_lea.vmem %s5, 14
      %v2634 = vld [vmem:[%s2633] sm:$0x3]
      %v2636 = vsel %vm1749, %v2625, 0
      %v2639 = vsel %vm1749, %v2626, 0
      %v2642 = vsel %vm1749, %v2627, 0
      %v2645 = vsel %vm1749, %v2628, 0
      %v2648 = vsel %vm1749, %v2629, 0
      %v2651 = vsel %vm1749, %v2630, 0
      %v2654 = vsel %vm1749, %v2631, 0
      %v2657 = vsel %vm1749, %v2632, 0
      %v2660 = vsel %vm1830, %v2634, 0
      %2662 = vmatpush.bf16.msra.mxu0 0
      %2663 = vmatpush.bf16.msra.mxu0 0
      %2664 = vmatpush.bf16.msra.mxu0 0
      %2665 = vmatpush.bf16.msra.mxu0 0
      %2666 = vmatpush.bf16.msra.mxu0 0
      %2667 = vmatpush.bf16.msra.mxu0 0
      %2668 = vmatpush.bf16.msra.mxu0 0
      %2669 = vmatpush.bf16.msra.mxu0 %v2660
      %2670 = vmatmul.bf16.gmra.mxu0 %v2636
      %v2671 = vpop.f32.mrf.mxu0
      %v2672 = vadd.f32 0.0, %v2671
      %v2673 = vpop.f32.mrf.mxu0
      %v2674 = vadd.f32 0.0, %v2673
      %2675 = vmatmul.bf16.gmra.mxu0 %v2639
      %v2676 = vpop.f32.mrf.mxu0
      %v2677 = vadd.f32 0.0, %v2676
      %v2678 = vpop.f32.mrf.mxu0
      %v2679 = vadd.f32 0.0, %v2678
      %2680 = vmatmul.bf16.gmra.mxu0 %v2642
      %v2681 = vpop.f32.mrf.mxu0
      %v2682 = vadd.f32 0.0, %v2681
      %v2683 = vpop.f32.mrf.mxu0
      %v2684 = vadd.f32 0.0, %v2683
      %2685 = vmatmul.bf16.gmra.mxu0 %v2645
      %v2686 = vpop.f32.mrf.mxu0
      %v2687 = vadd.f32 0.0, %v2686
      %v2688 = vpop.f32.mrf.mxu0
      %v2689 = vadd.f32 0.0, %v2688
      %2690 = vmatmul.bf16.gmra.mxu0 %v2648
      %v2691 = vpop.f32.mrf.mxu0
      %v2692 = vadd.f32 0.0, %v2691
      %v2693 = vpop.f32.mrf.mxu0
      %v2694 = vadd.f32 0.0, %v2693
      %2695 = vmatmul.bf16.gmra.mxu0 %v2651
      %v2696 = vpop.f32.mrf.mxu0
      %v2697 = vadd.f32 0.0, %v2696
      %v2698 = vpop.f32.mrf.mxu0
      %v2699 = vadd.f32 0.0, %v2698
      %2700 = vmatmul.bf16.gmra.mxu0 %v2654
      %v2701 = vpop.f32.mrf.mxu0
      %v2702 = vadd.f32 0.0, %v2701
      %v2703 = vpop.f32.mrf.mxu0
      %v2704 = vadd.f32 0.0, %v2703
      %2705 = vmatmul.bf16.gmra.mxu0 %v2657
      %v2706 = vpop.f32.mrf.mxu0
      %v2707 = vadd.f32 0.0, %v2706
      %v2708 = vpop.f32.mrf.mxu0
      %v2709 = vadd.f32 0.0, %v2708
      %2710 = vdwg.mxu0
      %v2711 = vadd.f32 %v2593, %v2672
      %v2712 = vadd.f32 %v2594, %v2674
      %v2713 = vadd.f32 %v2595, %v2677
      %v2714 = vadd.f32 %v2596, %v2679
      %v2715 = vadd.f32 %v2597, %v2682
      %v2716 = vadd.f32 %v2598, %v2684
      %v2717 = vadd.f32 %v2599, %v2687
      %v2718 = vadd.f32 %v2600, %v2689
      %v2719 = vadd.f32 %v2601, %v2692
      %v2720 = vadd.f32 %v2602, %v2694
      %v2721 = vadd.f32 %v2603, %v2697
      %v2722 = vadd.f32 %v2604, %v2699
      %v2723 = vadd.f32 %v2605, %v2702
      %v2724 = vadd.f32 %v2606, %v2704
      %v2725 = vadd.f32 %v2607, %v2707
      %v2726 = vadd.f32 %v2608, %v2709
      %v2727 = vld [vmem:[%s2490 + $0x2] sm:$0xff]
      %v2728 = vld [vmem:[%s2490 + $0xa] sm:$0xff]
      %v2729 = vld [vmem:[%s2490 + $0x1a] sm:$0xff]
      %v2730 = vld [vmem:[%s2490 + $0x22] sm:$0xff]
      %v2731 = vld [vmem:[%s2490 + $0x32] sm:$0xff]
      %v2732 = vld [vmem:[%s2490 + $0x3a] sm:$0xff]
      %v2733 = vld [vmem:[%s2490 + $0x4a] sm:$0xff]
      %v2734 = vld [vmem:[%s2490 + $0x52] sm:$0xff]
      %v2735 = vld [vmem:[%s2490 + $0x62] sm:$0xff]
      %v2736 = vld [vmem:[%s2490 + $0x6a] sm:$0xff]
      %v2737 = vld [vmem:[%s2490 + $0x7a] sm:$0xff]
      %v2738 = vld [vmem:[%s2490 + $0x82] sm:$0xff]
      %v2739 = vld [vmem:[%s2490 + $0x92] sm:$0xff]
      %v2740 = vld [vmem:[%s2490 + $0x9a] sm:$0xff]
      %v2741 = vld [vmem:[%s2490 + $0xaa] sm:$0xff]
      %v2742 = vld [vmem:[%s2490 + $0xb2] sm:$0xff]
      %v2743 = vpack.c.bf16 %v2728, %v2727
      %v2744 = vpack.c.bf16 %v2730, %v2729
      %v2745 = vpack.c.bf16 %v2732, %v2731
      %v2746 = vpack.c.bf16 %v2734, %v2733
      %v2747 = vpack.c.bf16 %v2736, %v2735
      %v2748 = vpack.c.bf16 %v2738, %v2737
      %v2749 = vpack.c.bf16 %v2740, %v2739
      %v2750 = vpack.c.bf16 %v2742, %v2741
      %s2751 = scalar_lea.vmem %s5, 16
      %v2752 = vld [vmem:[%s2751] sm:$0x3]
      %v2754 = vsel %vm1749, %v2743, 0
      %v2757 = vsel %vm1749, %v2744, 0
      %v2760 = vsel %vm1749, %v2745, 0
      %v2763 = vsel %vm1749, %v2746, 0
      %v2766 = vsel %vm1749, %v2747, 0
      %v2769 = vsel %vm1749, %v2748, 0
      %v2772 = vsel %vm1749, %v2749, 0
      %v2775 = vsel %vm1749, %v2750, 0
      %v2778 = vsel %vm1830, %v2752, 0
      %2780 = vmatpush.bf16.msra.mxu0 0
      %2781 = vmatpush.bf16.msra.mxu0 0
      %2782 = vmatpush.bf16.msra.mxu0 0
      %2783 = vmatpush.bf16.msra.mxu0 0
      %2784 = vmatpush.bf16.msra.mxu0 0
      %2785 = vmatpush.bf16.msra.mxu0 0
      %2786 = vmatpush.bf16.msra.mxu0 0
      %2787 = vmatpush.bf16.msra.mxu0 %v2778
      %2788 = vmatmul.bf16.gmra.mxu0 %v2754
      %v2789 = vpop.f32.mrf.mxu0
      %v2790 = vadd.f32 0.0, %v2789
      %v2791 = vpop.f32.mrf.mxu0
      %v2792 = vadd.f32 0.0, %v2791
      %2793 = vmatmul.bf16.gmra.mxu0 %v2757
      %v2794 = vpop.f32.mrf.mxu0
      %v2795 = vadd.f32 0.0, %v2794
      %v2796 = vpop.f32.mrf.mxu0
      %v2797 = vadd.f32 0.0, %v2796
      %2798 = vmatmul.bf16.gmra.mxu0 %v2760
      %v2799 = vpop.f32.mrf.mxu0
      %v2800 = vadd.f32 0.0, %v2799
      %v2801 = vpop.f32.mrf.mxu0
      %v2802 = vadd.f32 0.0, %v2801
      %2803 = vmatmul.bf16.gmra.mxu0 %v2763
      %v2804 = vpop.f32.mrf.mxu0
      %v2805 = vadd.f32 0.0, %v2804
      %v2806 = vpop.f32.mrf.mxu0
      %v2807 = vadd.f32 0.0, %v2806
      %2808 = vmatmul.bf16.gmra.mxu0 %v2766
      %v2809 = vpop.f32.mrf.mxu0
      %v2810 = vadd.f32 0.0, %v2809
      %v2811 = vpop.f32.mrf.mxu0
      %v2812 = vadd.f32 0.0, %v2811
      %2813 = vmatmul.bf16.gmra.mxu0 %v2769
      %v2814 = vpop.f32.mrf.mxu0
      %v2815 = vadd.f32 0.0, %v2814
      %v2816 = vpop.f32.mrf.mxu0
      %v2817 = vadd.f32 0.0, %v2816
      %2818 = vmatmul.bf16.gmra.mxu0 %v2772
      %v2819 = vpop.f32.mrf.mxu0
      %v2820 = vadd.f32 0.0, %v2819
      %v2821 = vpop.f32.mrf.mxu0
      %v2822 = vadd.f32 0.0, %v2821
      %2823 = vmatmul.bf16.gmra.mxu0 %v2775
      %v2824 = vpop.f32.mrf.mxu0
      %v2825 = vadd.f32 0.0, %v2824
      %v2826 = vpop.f32.mrf.mxu0
      %v2827 = vadd.f32 0.0, %v2826
      %2828 = vdwg.mxu0
      %v2829 = vadd.f32 %v2711, %v2790
      %v2830 = vadd.f32 %v2712, %v2792
      %v2831 = vadd.f32 %v2713, %v2795
      %v2832 = vadd.f32 %v2714, %v2797
      %v2833 = vadd.f32 %v2715, %v2800
      %v2834 = vadd.f32 %v2716, %v2802
      %v2835 = vadd.f32 %v2717, %v2805
      %v2836 = vadd.f32 %v2718, %v2807
      %v2837 = vadd.f32 %v2719, %v2810
      %v2838 = vadd.f32 %v2720, %v2812
      %v2839 = vadd.f32 %v2721, %v2815
      %v2840 = vadd.f32 %v2722, %v2817
      %v2841 = vadd.f32 %v2723, %v2820
      %v2842 = vadd.f32 %v2724, %v2822
      %v2843 = vadd.f32 %v2725, %v2825
      %v2844 = vadd.f32 %v2726, %v2827
      %v2845 = vld [vmem:[%s6] sm:$0x1]
      %v2847 = vperm.slane %v2845, 0
      %v2849 = vadd.f32 %v2829, %v2847
      %v2850 = vadd.f32 %v2830, %v2847
      %v2851 = vadd.f32 %v2831, %v2847
      %v2852 = vadd.f32 %v2832, %v2847
      %v2853 = vadd.f32 %v2833, %v2847
      %v2854 = vadd.f32 %v2834, %v2847
      %v2855 = vadd.f32 %v2835, %v2847
      %v2856 = vadd.f32 %v2836, %v2847
      %v2857 = vadd.f32 %v2837, %v2847
      %v2858 = vadd.f32 %v2838, %v2847
      %v2859 = vadd.f32 %v2839, %v2847
      %v2860 = vadd.f32 %v2840, %v2847
      %v2861 = vadd.f32 %v2841, %v2847
      %v2862 = vadd.f32 %v2842, %v2847
      %v2863 = vadd.f32 %v2843, %v2847
      %v2864 = vadd.f32 %v2844, %v2847
      %2865 = vst.msk [vmem:[%s320] sm:$0xff] %vm654, %v2849
      %2866 = vst.msk [vmem:[%s320 + $0x8] sm:$0xff] %vm654, %v2850
      %2867 = vst.msk [vmem:[%s320 + $0x10] sm:$0xff] %vm654, %v2851
      %2868 = vst.msk [vmem:[%s320 + $0x18] sm:$0xff] %vm654, %v2852
      %2869 = vst.msk [vmem:[%s320 + $0x20] sm:$0xff] %vm654, %v2853
      %2870 = vst.msk [vmem:[%s320 + $0x28] sm:$0xff] %vm654, %v2854
      %2871 = vst.msk [vmem:[%s320 + $0x30] sm:$0xff] %vm654, %v2855
      %2872 = vst.msk [vmem:[%s320 + $0x38] sm:$0xff] %vm654, %v2856
      %2873 = vst.msk [vmem:[%s320 + $0x40] sm:$0xff] %vm654, %v2857
      %2874 = vst.msk [vmem:[%s320 + $0x48] sm:$0xff] %vm654, %v2858
      %2875 = vst.msk [vmem:[%s320 + $0x50] sm:$0xff] %vm654, %v2859
      %2876 = vst.msk [vmem:[%s320 + $0x58] sm:$0xff] %vm654, %v2860
      %2877 = vst.msk [vmem:[%s320 + $0x60] sm:$0xff] %vm654, %v2861
      %2878 = vst.msk [vmem:[%s320 + $0x68] sm:$0xff] %vm654, %v2862
      %2879 = vst.msk [vmem:[%s320 + $0x70] sm:$0xff] %vm654, %v2863
      %2880 = vst.msk [vmem:[%s320 + $0x78] sm:$0xff] %vm654, %v2864
      %s2881 = smul.u32 16, %s23
      %p2882 = scmp.lt.s32.totalorder %s22, 1
      %s2883 = scalar_select %p2882, %s22, 1
      %p2884 = scmp.lt.s32.totalorder %s2881, 31
      %s2885 = scalar_select %p2884, %s2881, 31
      %s2886 = smul.addr %s2883, 32
      %s2887 = sadd.s32 %s2885, %s2886
      %s2888 = smul.addr %s2887, 8
      %s2889 = scalar_lea.vmem %s7, %s2888
      // Predicated region
      $region49: #{residual_block_forward.3} parent=47 // pred_check
        %p2890 = pneg %p207
      $region50: #{residual_block_forward.3} parent=47 // pred_check_branch
        %2892 = sbr.rel (%p2890) target = $region52
      $region51: #{residual_block_forward.3} parent=47 // pred_region
        %s2893 = smul.u32 16, %s23
      $region52: #{residual_block_forward.3} parent=47 // pred_fallthru
        _
    $region48: #{residual_block_forward.3} parent=5 // pred_fallthru
      _
    %p2894 = scmp.le.s32.totalorder 2, %s13
    // Predicated region
    $region53: #{residual_block_forward.3} parent=5 // pred_check
      %p2895 = pneg %p2894
    $region54: #{residual_block_forward.3} parent=5 // pred_check_branch
      %2897 = sbr.rel (%p2895) target = $region56
    $region55: #{residual_block_forward.3} parent=5 // pred_region
      %s2898 = ssub.s32 %s13, 2
      // Predicated region
      $region57: #{residual_block_forward.3} parent=55 // pred_check
        %p2899 = pneg %p213
      $region58: #{residual_block_forward.3} parent=55 // pred_check_branch
        %2901 = sbr.rel (%p2899) target = $region60
      $region59: #{residual_block_forward.3} parent=55 // pred_region
        %s2902 = smul.u32 16, %s25
        %p2903 = scmp.lt.s32.totalorder %s24, 1
        %s2904 = scalar_select %p2903, %s24, 1
        %p2905 = scmp.lt.s32.totalorder %s2902, 31
        %s2906 = scalar_select %p2905, %s2902, 31
        %s2907 = smul.addr %s2904, 32
        %s2908 = sadd.s32 %s2906, %s2907
        %s2909 = smul.addr %s2908, 8
        %s2910 = scalar_lea.vmem %s7, %s2909
      $region60: #{residual_block_forward.3} parent=55 // pred_fallthru
        _
    $region56: #{residual_block_forward.3} parent=5 // pred_fallthru
      _
  $region6: #{residual_block_forward.3} parent=0 // loop_footer
    %s17 = sadd.s32 1, %s13
  $region7: #{residual_block_forward.3} parent=0 // loop_footer_branch
    %12 = sbr.rel target = $region3
  $region8: #{residual_block_forward.3} parent=0 // loop_exit
    _

</llo_original>
